<compile_context>
chip_gen: v6e
topology: v6e:2x2x1
jax: 0.10.0
libtpu: 0.0.40
codegen_flags: <defaults>
</compile_context>

<pallas_src>
import math
from functools import partial

import jax
import jax.numpy as jnp
from jax.experimental import pallas as pl
from jax.experimental.pallas import tpu as pltpu


def _mha_kernel(q_ref, k_ref, v_ref, wlt_ref, bl_ref, wot_ref, bo_ref, o_ref,
                kp_ref, vp_ref, concat_ref, *, heads, d_k, matmul_dtype,
                approx_recip):
    # One (batch, query-tile) step per grid point.
    wlt = wlt_ref[...]            # (D, D) pre-transposed linear weight, matmul_dtype
    bl = bl_ref[...]              # (1, D) f32

    # Shared K/V projection: computed ONCE per batch element (first query tile)
    # and cached in VMEM scratch for the remaining query tiles of that batch.
    @pl.when(pl.program_id(1) == 0)
    def _():
        kp = jnp.dot(k_ref[0], wlt, preferred_element_type=jnp.float32) + bl  # (S, D)
        vp = jnp.dot(v_ref[0], wlt, preferred_element_type=jnp.float32) + bl  # (S, D)
        kp_ref[...] = kp.astype(matmul_dtype)
        vp_ref[...] = vp.astype(matmul_dtype)

    # Query projection for this (TQ, D) tile only.
    qp = jnp.dot(q_ref[0], wlt, preferred_element_type=jnp.float32) + bl      # (TQ, D) f32

    inv_scale = 1.0 / math.sqrt(d_k)
    for h in range(heads):
        lo = h * d_k
        # Fold 1/sqrt(d_k) into q (S*d_k VPU work instead of S*S).
        qh = (qp[:, lo:lo + d_k] * inv_scale).astype(matmul_dtype)   # (TQ, d_k)
        kh = kp_ref[:, lo:lo + d_k]                                   # (S, d_k)
        vh = vp_ref[:, lo:lo + d_k]                                   # (S, d_k)

        # scores = qh @ kh^T, contraction on last dims (no transpose materialized).
        scores = jax.lax.dot_general(
            qh, kh, (((1,), (1,)), ((), ())),
            preferred_element_type=jnp.float32)                       # (TQ, S) f32

        # Numerically stable softmax; normalization deferred past P@V.
        m = jnp.max(scores, axis=-1, keepdims=True)                   # (TQ, 1)
        e = jnp.exp(scores - m)                                       # (TQ, S)
        denom = jnp.sum(e, axis=-1, keepdims=True)                    # (TQ, 1)

        pv = jnp.dot(e.astype(matmul_dtype), vh,
                     preferred_element_type=jnp.float32)              # (TQ, d_k)
        head_out = pv * pl.reciprocal(denom, approx=approx_recip)     # (TQ, d_k)

        # Write into the concat slab at this head's column offset.
        concat_ref[:, lo:lo + d_k] = head_out.astype(matmul_dtype)

    # Single full-depth output projection from the concat slab.
    out = jnp.dot(concat_ref[...], wot_ref[...],
                  preferred_element_type=jnp.float32) + bo_ref[...]   # (TQ, D) f32
    o_ref[0] = out.astype(o_ref.dtype)


def _pick_tq(S):
    # Largest query tile that divides S and is a multiple of 8 (sublane).
    # Capped at 128 so the (TQ, S) score tile and concat slab stay modest on
    # every TPU generation (incl. v7x's smaller VMEM).
    for t in (128, 64, 32, 16, 8):
        if t <= S and S % t == 0:
            return t
    return S  # small / irregular S: full-extent block is always legal


def multi_head_attention(q, k, v, w_lin, b_lin, w_out, b_out, *, heads,
                         matmul_dtype=jnp.bfloat16):
    # q, k, v: (B, S, D); w_*: (D, D) PyTorch Linear weight (out, in); b_*: (D,)
    B, S, D = q.shape
    out_dtype = q.dtype
    d_k = D // heads
    TQ = _pick_tq(S)
    n_q = S // TQ

    # Host-side prep: pre-transpose (y = x @ W.T + b -> x @ Wt + b) and
    # pre-cast to the MXU dtype so no casts are re-executed per grid step.
    w_lin_t = jnp.transpose(w_lin).astype(matmul_dtype)
    w_out_t = jnp.transpose(w_out).astype(matmul_dtype)
    b_lin2 = b_lin.reshape(1, D).astype(jnp.float32)
    b_out2 = b_out.reshape(1, D).astype(jnp.float32)
    qc = q.astype(matmul_dtype)
    kc = k.astype(matmul_dtype)
    vc = v.astype(matmul_dtype)

    approx_recip = (jnp.dtype(matmul_dtype) == jnp.dtype(jnp.bfloat16))
    kernel = partial(_mha_kernel, heads=heads, d_k=d_k,
                     matmul_dtype=matmul_dtype, approx_recip=approx_recip)

    # VMEM budget from the actual footprint (grid-invariant k/v/weight blocks
    # are still double-buffered by default -> count them twice).
    mitem = jnp.dtype(matmul_dtype).itemsize
    oitem = jnp.dtype(out_dtype).itemsize
    in_bytes = 2 * (TQ * D + 2 * S * D) * mitem          # q + k + v blocks (x2 buf)
    w_bytes = 2 * (2 * D * D * mitem + 2 * D * 4)        # weights + biases (x2 buf)
    out_bytes = 2 * TQ * D * oitem                       # output block (x2 buf)
    scratch_bytes = (2 * S * D + TQ * D) * mitem         # kp, vp, concat scratch
    interm_bytes = 3 * TQ * S * 4 + 2 * TQ * D * 4       # scores/exp/qp headroom
    vmem_budget = int(1.5 * (in_bytes + w_bytes + out_bytes
                             + scratch_bytes + interm_bytes)) + (8 << 20)
    vmem_budget = min(max(vmem_budget, 32 << 20), 64 << 20)

    # Cost estimate for the work actually executed (K/V projection once per
    # batch element, not per query tile).
    flops = 2 * B * (4 * S * D * D + 2 * S * S * D)
    transcendentals = B * heads * S * S
    bytes_accessed = (3 * B * S * D + 2 * D * D) * mitem + B * S * D * oitem + 2 * D * 4

    return pl.pallas_call(
        kernel,
        out_shape=jax.ShapeDtypeStruct((B, S, D), out_dtype),
        grid_spec=pltpu.PrefetchScalarGridSpec(
            num_scalar_prefetch=0,
            grid=(B, n_q),
            in_specs=[
                pl.BlockSpec((1, TQ, D), lambda b, i: (b, i, 0)),   # q (query tile)
                pl.BlockSpec((1, S, D), lambda b, i: (b, 0, 0)),    # k (full seq)
                pl.BlockSpec((1, S, D), lambda b, i: (b, 0, 0)),    # v (full seq)
                pl.BlockSpec((D, D), lambda b, i: (0, 0)),          # w_lin^T
                pl.BlockSpec((1, D), lambda b, i: (0, 0)),          # b_lin
                pl.BlockSpec((D, D), lambda b, i: (0, 0)),          # w_out^T
                pl.BlockSpec((1, D), lambda b, i: (0, 0)),          # b_out
            ],
            out_specs=pl.BlockSpec((1, TQ, D), lambda b, i: (b, i, 0)),
            scratch_shapes=[
                pltpu.VMEM((S, D), matmul_dtype),    # cached projected K
                pltpu.VMEM((S, D), matmul_dtype),    # cached projected V
                pltpu.VMEM((TQ, D), matmul_dtype),   # concat slab
            ],
        ),
        compiler_params=pltpu.CompilerParams(
            # Batch axis parallel (megacore); query axis arbitrary because the
            # cached K/V projection scratch carries across query tiles.
            dimension_semantics=("parallel", "arbitrary"),
            vmem_limit_bytes=vmem_budget),
        cost_estimate=pl.CostEstimate(
            flops=flops,
            transcendentals=transcendentals,
            bytes_accessed=bytes_accessed),
    )(qc, kc, vc, w_lin_t, b_lin2, w_out_t, b_out2)


def _reference(q, k, v, w_lin, b_lin, w_out, b_out, heads):
    # Pure-JAX reference mirroring the PyTorch forward (mask=None, no dropout),
    # full-f32 matmul precision so the comparison is meaningful.
    B, S, D = q.shape
    d_k = D // heads
    hp = jax.lax.Precision.HIGHEST

    def lin(x, w, b):
        return jnp.matmul(x, w.T, precision=hp) + b

    qp = lin(q, w_lin, b_lin).reshape(B, S, heads, d_k).transpose(0, 2, 1, 3)
    kp = lin(k, w_lin, b_lin).reshape(B, S, heads, d_k).transpose(0, 2, 1, 3)
    vp = lin(v, w_lin, b_lin).reshape(B, S, heads, d_k).transpose(0, 2, 1, 3)
    scores = jnp.einsum("bhqd,bhkd->bhqk", qp, kp, precision=hp) / math.sqrt(d_k)
    probs = jax.nn.softmax(scores, axis=-1)
    out = jnp.einsum("bhqk,bhkd->bhqd", probs, vp, precision=hp)
    concat = out.transpose(0, 2, 1, 3).reshape(B, S, D)
    return jnp.matmul(concat, w_out.T, precision=hp) + b_out


if __name__ == "__main__":
    # Small but lane-dense config: d_model multiple of 128 so output stores are
    # unmasked vst and per-head contractions are >= 32 wide.
    B, S, D, H = 2, 128, 128, 4    # batch, seq, d_model, heads (d_k = 32)

    key = jax.random.PRNGKey(0)
    kq, kk, kv, kw1, kb1, kw2, kb2 = jax.random.split(key, 7)

    q = jax.random.normal(kq, (B, S, D), dtype=jnp.float32)
    k = jax.random.normal(kk, (B, S, D), dtype=jnp.float32)
    v = jax.random.normal(kv, (B, S, D), dtype=jnp.float32)

    # Deterministic parameter init (PyTorch Linear shapes: weight (D, D), bias (D,)).
    bound = 1.0 / math.sqrt(D)
    w_lin = jax.random.uniform(kw1, (D, D), jnp.float32, -bound, bound)
    b_lin = jax.random.uniform(kb1, (D,), jnp.float32, -bound, bound)
    w_out = jax.random.uniform(kw2, (D, D), jnp.float32, -bound, bound)
    b_out = jax.random.uniform(kb2, (D,), jnp.float32, -bound, bound)

    ref = _reference(q, k, v, w_lin, b_lin, w_out, b_out, H)

    # Exact-validation path (f32 MXU).
    out_f32 = multi_head_attention(q, k, v, w_lin, b_lin, w_out, b_out,
                                   heads=H, matmul_dtype=jnp.float32)
    out_f32 = jax.block_until_ready(out_f32)
    assert out_f32.shape == (B, S, D)
    assert jnp.allclose(out_f32, ref, atol=5e-4, rtol=5e-4), "f32 mismatch vs reference"

    # Default fast path (bf16 MXU operands, f32 accumulation).
    out_bf16 = multi_head_attention(q, k, v, w_lin, b_lin, w_out, b_out, heads=H)
    out_bf16 = jax.block_until_ready(out_bf16)
    assert out_bf16.shape == (B, S, D)
    assert jnp.allclose(out_bf16, ref, atol=5e-2, rtol=5e-2), "bf16 mismatch vs reference"

    print("KERNEL_OK")
</pallas_src>

<mosaic_0001>
module attributes {stable_mosaic.version = 11 : i64} {
  func.func @_mha_kernel(%arg0: i32, %arg1: i32, %arg2: memref<1x128x128xf32, #tpu.memory_space<vmem>>, %arg3: memref<1x128x128xf32, #tpu.memory_space<vmem>>, %arg4: memref<1x128x128xf32, #tpu.memory_space<vmem>>, %arg5: memref<128x128xf32, #tpu.memory_space<vmem>>, %arg6: memref<1x128xf32, #tpu.memory_space<vmem>>, %arg7: memref<128x128xf32, #tpu.memory_space<vmem>>, %arg8: memref<1x128xf32, #tpu.memory_space<vmem>>, %arg9: memref<1x128x128xf32, #tpu.memory_space<vmem>>, %arg10: memref<128x128xf32, #tpu.memory_space<vmem>>, %arg11: memref<128x128xf32, #tpu.memory_space<vmem>>, %arg12: memref<128x128xf32, #tpu.memory_space<vmem>>) attributes {dimension_semantics = [#tpu.dimension_semantics<parallel>, #tpu.dimension_semantics<arbitrary>], iteration_bounds = array<i64: 2, 1>, scalar_prefetch = 0 : i64, scratch_operands = 3 : i64, tpu.core_type = #tpu.core_type<tc>, window_params = [{transform_indices = @transform_0, window_bounds = array<i64: 1, 128, 128>}, {transform_indices = @transform_1, window_bounds = array<i64: 1, 128, 128>}, {transform_indices = @transform_2, window_bounds = array<i64: 1, 128, 128>}, {pipeline_mode = #tpu.pipeline_mode<synchronous>, transform_indices = @transform_3, window_bounds = array<i64: 128, 128>}, {pipeline_mode = #tpu.pipeline_mode<synchronous>, transform_indices = @transform_4, window_bounds = array<i64: 1, 128>}, {pipeline_mode = #tpu.pipeline_mode<synchronous>, transform_indices = @transform_5, window_bounds = array<i64: 128, 128>}, {pipeline_mode = #tpu.pipeline_mode<synchronous>, transform_indices = @transform_6, window_bounds = array<i64: 1, 128>}, {transform_indices = @transform_7, window_bounds = array<i64: 1, 128, 128>}]} {
    %c0 = arith.constant 0 : index
    %c0_0 = arith.constant 0 : index
    %0 = vector.load %arg5[%c0, %c0_0] : memref<128x128xf32, #tpu.memory_space<vmem>>, vector<128x128xf32>
    %c0_1 = arith.constant 0 : index
    %c0_2 = arith.constant 0 : index
    %1 = vector.load %arg6[%c0_1, %c0_2] : memref<1x128xf32, #tpu.memory_space<vmem>>, vector<1x128xf32>
    %c0_i32 = arith.constant 0 : i32
    %2 = arith.cmpi eq, %arg1, %c0_i32 : i32
    %3 = arith.extui %2 : i1 to i32
    %c0_i32_3 = arith.constant 0 : i32
    %4 = arith.cmpi ne, %3, %c0_i32_3 : i32
    scf.if %4 {
      %c0_58 = arith.constant 0 : index
      %c0_59 = arith.constant 0 : index
      %c0_60 = arith.constant 0 : index
      %91 = vector.load %arg3[%c0_58, %c0_59, %c0_60] : memref<1x128x128xf32, #tpu.memory_space<vmem>>, vector<1x128x128xf32>
      %92 = vector.shape_cast %91 : vector<1x128x128xf32> to vector<128x128xf32>
      %cst_61 = arith.constant dense<0.000000e+00> : vector<128x128xf32>
      %93 = tpu.matmul %92, %0, %cst_61 {dimension_numbers = #tpu.dot_dimension_numbers<[1], [0], [0], [1], [0, 0, 1, 1], [], []>} : vector<128x128xf32>, vector<128x128xf32>, vector<128x128xf32> -> vector<128x128xf32>
      %94 = vector.broadcast %1 : vector<1x128xf32> to vector<128x128xf32>
      %95 = arith.addf %93, %94 : vector<128x128xf32>
      %c0_62 = arith.constant 0 : index
      %c0_63 = arith.constant 0 : index
      %c0_64 = arith.constant 0 : index
      %96 = vector.load %arg4[%c0_62, %c0_63, %c0_64] : memref<1x128x128xf32, #tpu.memory_space<vmem>>, vector<1x128x128xf32>
      %97 = vector.shape_cast %96 : vector<1x128x128xf32> to vector<128x128xf32>
      %cst_65 = arith.constant dense<0.000000e+00> : vector<128x128xf32>
      %98 = tpu.matmul %97, %0, %cst_65 {dimension_numbers = #tpu.dot_dimension_numbers<[1], [0], [0], [1], [0, 0, 1, 1], [], []>} : vector<128x128xf32>, vector<128x128xf32>, vector<128x128xf32> -> vector<128x128xf32>
      %99 = vector.broadcast %1 : vector<1x128xf32> to vector<128x128xf32>
      %100 = arith.addf %98, %99 : vector<128x128xf32>
      %c0_66 = arith.constant 0 : index
      %c0_67 = arith.constant 0 : index
      %101 = vector.load %arg10[%c0_66, %c0_67] : memref<128x128xf32, #tpu.memory_space<vmem>>, vector<128x128xf32>
      tpu.vector_store %arg10[%c0_66, %c0_67], %95 {strides = array<i32>} : memref<128x128xf32, #tpu.memory_space<vmem>>, vector<128x128xf32>,
      %c0_68 = arith.constant 0 : index
      %c0_69 = arith.constant 0 : index
      %102 = vector.load %arg11[%c0_68, %c0_69] : memref<128x128xf32, #tpu.memory_space<vmem>>, vector<128x128xf32>
      tpu.vector_store %arg11[%c0_68, %c0_69], %100 {strides = array<i32>} : memref<128x128xf32, #tpu.memory_space<vmem>>, vector<128x128xf32>,
    } else {
    }
    %c0_4 = arith.constant 0 : index
    %c0_5 = arith.constant 0 : index
    %c0_6 = arith.constant 0 : index
    %5 = vector.load %arg2[%c0_4, %c0_5, %c0_6] : memref<1x128x128xf32, #tpu.memory_space<vmem>>, vector<1x128x128xf32>
    %6 = vector.shape_cast %5 : vector<1x128x128xf32> to vector<128x128xf32>
    %cst = arith.constant dense<0.000000e+00> : vector<128x128xf32>
    %7 = tpu.matmul %6, %0, %cst {dimension_numbers = #tpu.dot_dimension_numbers<[1], [0], [0], [1], [0, 0, 1, 1], [], []>} : vector<128x128xf32>, vector<128x128xf32>, vector<128x128xf32> -> vector<128x128xf32>
    %8 = vector.broadcast %1 : vector<1x128xf32> to vector<128x128xf32>
    %9 = arith.addf %7, %8 : vector<128x128xf32>
    %10 = vector.extract_strided_slice %9 {offsets = [0, 0], sizes = [128, 32], strides = [1, 1]} : vector<128x128xf32> to vector<128x32xf32>
    %cst_7 = arith.constant 0.176776692 : f32
    %11 = vector.broadcast %cst_7 : f32 to vector<128x32xf32>
    %12 = arith.mulf %10, %11 : vector<128x32xf32>
    %c0_8 = arith.constant 0 : index
    %c0_9 = arith.constant 0 : index
    %13 = vector.load %arg10[%c0_8, %c0_9] : memref<128x128xf32, #tpu.memory_space<vmem>>, vector<128x32xf32>
    %c0_10 = arith.constant 0 : index
    %c0_11 = arith.constant 0 : index
    %14 = vector.load %arg11[%c0_10, %c0_11] : memref<128x128xf32, #tpu.memory_space<vmem>>, vector<128x32xf32>
    %cst_12 = arith.constant dense<0.000000e+00> : vector<128x128xf32>
    %15 = tpu.matmul %12, %13, %cst_12 {dimension_numbers = #tpu.dot_dimension_numbers<[1], [1], [0], [0], [0, 0, 1, 0], [], []>} : vector<128x32xf32>, vector<128x32xf32>, vector<128x128xf32> -> vector<128x128xf32>
    %cst_13 = arith.constant dense<0xFF800000> : vector<128xf32>
    %16 = vector.multi_reduction <maximumf>, %15, %cst_13 [1] : vector<128x128xf32> to vector<128xf32>
    %17 = vector.shape_cast %16 : vector<128xf32> to vector<128x1xf32>
    %18 = vector.broadcast %17 : vector<128x1xf32> to vector<128x128xf32>
    %19 = arith.subf %15, %18 : vector<128x128xf32>
    %20 = math.exp %19 : vector<128x128xf32>
    %cst_14 = arith.constant dense<0.000000e+00> : vector<128xf32>
    %21 = vector.multi_reduction <add>, %20, %cst_14 [1] : vector<128x128xf32> to vector<128xf32>
    %22 = vector.shape_cast %21 : vector<128xf32> to vector<128x1xf32>
    %cst_15 = arith.constant dense<0.000000e+00> : vector<128x32xf32>
    %23 = tpu.matmul %20, %14, %cst_15 {dimension_numbers = #tpu.dot_dimension_numbers<[1], [0], [0], [1], [0, 0, 1, 1], [], []>} : vector<128x128xf32>, vector<128x32xf32>, vector<128x32xf32> -> vector<128x32xf32>
    %24 = tpu.reciprocal %22 : vector<128x1xf32> -> vector<128x1xf32>
    %25 = vector.broadcast %24 : vector<128x1xf32> to vector<128x32xf32>
    %26 = arith.mulf %23, %25 : vector<128x32xf32>
    %c0_16 = arith.constant 0 : index
    %c0_17 = arith.constant 0 : index
    %27 = vector.load %arg12[%c0_16, %c0_17] : memref<128x128xf32, #tpu.memory_space<vmem>>, vector<128x32xf32>
    tpu.vector_store %arg12[%c0_16, %c0_17], %26 {strides = array<i32>} : memref<128x128xf32, #tpu.memory_space<vmem>>, vector<128x32xf32>,
    %28 = vector.extract_strided_slice %9 {offsets = [0, 32], sizes = [128, 32], strides = [1, 1]} : vector<128x128xf32> to vector<128x32xf32>
    %cst_18 = arith.constant 0.176776692 : f32
    %29 = vector.broadcast %cst_18 : f32 to vector<128x32xf32>
    %30 = arith.mulf %28, %29 : vector<128x32xf32>
    %c0_19 = arith.constant 0 : index
    %c32 = arith.constant 32 : index
    %31 = vector.load %arg10[%c0_19, %c32] : memref<128x128xf32, #tpu.memory_space<vmem>>, vector<128x32xf32>
    %c0_20 = arith.constant 0 : index
    %c32_21 = arith.constant 32 : index
    %32 = vector.load %arg11[%c0_20, %c32_21] : memref<128x128xf32, #tpu.memory_space<vmem>>, vector<128x32xf32>
    %cst_22 = arith.constant dense<0.000000e+00> : vector<128x128xf32>
    %33 = tpu.matmul %30, %31, %cst_22 {dimension_numbers = #tpu.dot_dimension_numbers<[1], [1], [0], [0], [0, 0, 1, 0], [], []>} : vector<128x32xf32>, vector<128x32xf32>, vector<128x128xf32> -> vector<128x128xf32>
    %cst_23 = arith.constant dense<0xFF800000> : vector<128xf32>
    %34 = vector.multi_reduction <maximumf>, %33, %cst_23 [1] : vector<128x128xf32> to vector<128xf32>
    %35 = vector.shape_cast %34 : vector<128xf32> to vector<128x1xf32>
    %36 = vector.broadcast %35 : vector<128x1xf32> to vector<128x128xf32>
    %37 = arith.subf %33, %36 : vector<128x128xf32>
    %38 = math.exp %37 : vector<128x128xf32>
    %cst_24 = arith.constant dense<0.000000e+00> : vector<128xf32>
    %39 = vector.multi_reduction <add>, %38, %cst_24 [1] : vector<128x128xf32> to vector<128xf32>
    %40 = vector.shape_cast %39 : vector<128xf32> to vector<128x1xf32>
    %cst_25 = arith.constant dense<0.000000e+00> : vector<128x32xf32>
    %41 = tpu.matmul %38, %32, %cst_25 {dimension_numbers = #tpu.dot_dimension_numbers<[1], [0], [0], [1], [0, 0, 1, 1], [], []>} : vector<128x128xf32>, vector<128x32xf32>, vector<128x32xf32> -> vector<128x32xf32>
    %42 = tpu.reciprocal %40 : vector<128x1xf32> -> vector<128x1xf32>
    %43 = vector.broadcast %42 : vector<128x1xf32> to vector<128x32xf32>
    %44 = arith.mulf %41, %43 : vector<128x32xf32>
    %c0_26 = arith.constant 0 : index
    %c32_27 = arith.constant 32 : index
    %45 = vector.load %arg12[%c0_26, %c32_27] : memref<128x128xf32, #tpu.memory_space<vmem>>, vector<128x32xf32>
    tpu.vector_store %arg12[%c0_26, %c32_27], %44 {strides = array<i32>} : memref<128x128xf32, #tpu.memory_space<vmem>>, vector<128x32xf32>,
    %46 = vector.extract_strided_slice %9 {offsets = [0, 64], sizes = [128, 32], strides = [1, 1]} : vector<128x128xf32> to vector<128x32xf32>
    %cst_28 = arith.constant 0.176776692 : f32
    %47 = vector.broadcast %cst_28 : f32 to vector<128x32xf32>
    %48 = arith.mulf %46, %47 : vector<128x32xf32>
    %c0_29 = arith.constant 0 : index
    %c64 = arith.constant 64 : index
    %49 = vector.load %arg10[%c0_29, %c64] : memref<128x128xf32, #tpu.memory_space<vmem>>, vector<128x32xf32>
    %c0_30 = arith.constant 0 : index
    %c64_31 = arith.constant 64 : index
    %50 = vector.load %arg11[%c0_30, %c64_31] : memref<128x128xf32, #tpu.memory_space<vmem>>, vector<128x32xf32>
    %cst_32 = arith.constant dense<0.000000e+00> : vector<128x128xf32>
    %51 = tpu.matmul %48, %49, %cst_32 {dimension_numbers = #tpu.dot_dimension_numbers<[1], [1], [0], [0], [0, 0, 1, 0], [], []>} : vector<128x32xf32>, vector<128x32xf32>, vector<128x128xf32> -> vector<128x128xf32>
    %cst_33 = arith.constant dense<0xFF800000> : vector<128xf32>
    %52 = vector.multi_reduction <maximumf>, %51, %cst_33 [1] : vector<128x128xf32> to vector<128xf32>
    %53 = vector.shape_cast %52 : vector<128xf32> to vector<128x1xf32>
    %54 = vector.broadcast %53 : vector<128x1xf32> to vector<128x128xf32>
    %55 = arith.subf %51, %54 : vector<128x128xf32>
    %56 = math.exp %55 : vector<128x128xf32>
    %cst_34 = arith.constant dense<0.000000e+00> : vector<128xf32>
    %57 = vector.multi_reduction <add>, %56, %cst_34 [1] : vector<128x128xf32> to vector<128xf32>
    %58 = vector.shape_cast %57 : vector<128xf32> to vector<128x1xf32>
    %cst_35 = arith.constant dense<0.000000e+00> : vector<128x32xf32>
    %59 = tpu.matmul %56, %50, %cst_35 {dimension_numbers = #tpu.dot_dimension_numbers<[1], [0], [0], [1], [0, 0, 1, 1], [], []>} : vector<128x128xf32>, vector<128x32xf32>, vector<128x32xf32> -> vector<128x32xf32>
    %60 = tpu.reciprocal %58 : vector<128x1xf32> -> vector<128x1xf32>
    %61 = vector.broadcast %60 : vector<128x1xf32> to vector<128x32xf32>
    %62 = arith.mulf %59, %61 : vector<128x32xf32>
    %c0_36 = arith.constant 0 : index
    %c64_37 = arith.constant 64 : index
    %63 = vector.load %arg12[%c0_36, %c64_37] : memref<128x128xf32, #tpu.memory_space<vmem>>, vector<128x32xf32>
    tpu.vector_store %arg12[%c0_36, %c64_37], %62 {strides = array<i32>} : memref<128x128xf32, #tpu.memory_space<vmem>>, vector<128x32xf32>,
    %64 = vector.extract_strided_slice %9 {offsets = [0, 96], sizes = [128, 32], strides = [1, 1]} : vector<128x128xf32> to vector<128x32xf32>
    %cst_38 = arith.constant 0.176776692 : f32
    %65 = vector.broadcast %cst_38 : f32 to vector<128x32xf32>
    %66 = arith.mulf %64, %65 : vector<128x32xf32>
    %c0_39 = arith.constant 0 : index
    %c96 = arith.constant 96 : index
    %67 = vector.load %arg10[%c0_39, %c96] : memref<128x128xf32, #tpu.memory_space<vmem>>, vector<128x32xf32>
    %c0_40 = arith.constant 0 : index
    %c96_41 = arith.constant 96 : index
    %68 = vector.load %arg11[%c0_40, %c96_41] : memref<128x128xf32, #tpu.memory_space<vmem>>, vector<128x32xf32>
    %cst_42 = arith.constant dense<0.000000e+00> : vector<128x128xf32>
    %69 = tpu.matmul %66, %67, %cst_42 {dimension_numbers = #tpu.dot_dimension_numbers<[1], [1], [0], [0], [0, 0, 1, 0], [], []>} : vector<128x32xf32>, vector<128x32xf32>, vector<128x128xf32> -> vector<128x128xf32>
    %cst_43 = arith.constant dense<0xFF800000> : vector<128xf32>
    %70 = vector.multi_reduction <maximumf>, %69, %cst_43 [1] : vector<128x128xf32> to vector<128xf32>
    %71 = vector.shape_cast %70 : vector<128xf32> to vector<128x1xf32>
    %72 = vector.broadcast %71 : vector<128x1xf32> to vector<128x128xf32>
    %73 = arith.subf %69, %72 : vector<128x128xf32>
    %74 = math.exp %73 : vector<128x128xf32>
    %cst_44 = arith.constant dense<0.000000e+00> : vector<128xf32>
    %75 = vector.multi_reduction <add>, %74, %cst_44 [1] : vector<128x128xf32> to vector<128xf32>
    %76 = vector.shape_cast %75 : vector<128xf32> to vector<128x1xf32>
    %cst_45 = arith.constant dense<0.000000e+00> : vector<128x32xf32>
    %77 = tpu.matmul %74, %68, %cst_45 {dimension_numbers = #tpu.dot_dimension_numbers<[1], [0], [0], [1], [0, 0, 1, 1], [], []>} : vector<128x128xf32>, vector<128x32xf32>, vector<128x32xf32> -> vector<128x32xf32>
    %78 = tpu.reciprocal %76 : vector<128x1xf32> -> vector<128x1xf32>
    %79 = vector.broadcast %78 : vector<128x1xf32> to vector<128x32xf32>
    %80 = arith.mulf %77, %79 : vector<128x32xf32>
    %c0_46 = arith.constant 0 : index
    %c96_47 = arith.constant 96 : index
    %81 = vector.load %arg12[%c0_46, %c96_47] : memref<128x128xf32, #tpu.memory_space<vmem>>, vector<128x32xf32>
    tpu.vector_store %arg12[%c0_46, %c96_47], %80 {strides = array<i32>} : memref<128x128xf32, #tpu.memory_space<vmem>>, vector<128x32xf32>,
    %c0_48 = arith.constant 0 : index
    %c0_49 = arith.constant 0 : index
    %82 = vector.load %arg12[%c0_48, %c0_49] : memref<128x128xf32, #tpu.memory_space<vmem>>, vector<128x128xf32>
    %c0_50 = arith.constant 0 : index
    %c0_51 = arith.constant 0 : index
    %83 = vector.load %arg7[%c0_50, %c0_51] : memref<128x128xf32, #tpu.memory_space<vmem>>, vector<128x128xf32>
    %cst_52 = arith.constant dense<0.000000e+00> : vector<128x128xf32>
    %84 = tpu.matmul %82, %83, %cst_52 {dimension_numbers = #tpu.dot_dimension_numbers<[1], [0], [0], [1], [0, 0, 1, 1], [], []>} : vector<128x128xf32>, vector<128x128xf32>, vector<128x128xf32> -> vector<128x128xf32>
    %c0_53 = arith.constant 0 : index
    %c0_54 = arith.constant 0 : index
    %85 = vector.load %arg8[%c0_53, %c0_54] : memref<1x128xf32, #tpu.memory_space<vmem>>, vector<1x128xf32>
    %86 = vector.broadcast %85 : vector<1x128xf32> to vector<128x128xf32>
    %87 = arith.addf %84, %86 : vector<128x128xf32>
    %c0_55 = arith.constant 0 : index
    %c0_56 = arith.constant 0 : index
    %c0_57 = arith.constant 0 : index
    %88 = vector.load %arg9[%c0_55, %c0_56, %c0_57] : memref<1x128x128xf32, #tpu.memory_space<vmem>>, vector<1x128x128xf32>
    %89 = vector.shape_cast %88 : vector<1x128x128xf32> to vector<128x128xf32>
    %90 = vector.shape_cast %87 : vector<128x128xf32> to vector<1x128x128xf32>
    tpu.vector_store %arg9[%c0_55, %c0_56, %c0_57], %90 {strides = array<i32>} : memref<1x128x128xf32, #tpu.memory_space<vmem>>, vector<1x128x128xf32>,
    return
  }
  func.func @transform_0(%arg0: i32, %arg1: i32) -> (i32, i32, i32) {
    %c0_i32 = arith.constant 0 : i32
    %c0_i32_0 = arith.constant 0 : i32
    return %arg0, %arg1, %c0_i32 : i32, i32, i32
  }
  func.func @transform_1(%arg0: i32, %arg1: i32) -> (i32, i32, i32) {
    %c0_i32 = arith.constant 0 : i32
    %c0_i32_0 = arith.constant 0 : i32
    %c0_i32_1 = arith.constant 0 : i32
    return %arg0, %c0_i32, %c0_i32_0 : i32, i32, i32
  }
  func.func @transform_2(%arg0: i32, %arg1: i32) -> (i32, i32, i32) {
    %c0_i32 = arith.constant 0 : i32
    %c0_i32_0 = arith.constant 0 : i32
    %c0_i32_1 = arith.constant 0 : i32
    return %arg0, %c0_i32, %c0_i32_0 : i32, i32, i32
  }
  func.func @transform_3(%arg0: i32, %arg1: i32) -> (i32, i32) {
    %c0_i32 = arith.constant 0 : i32
    %c0_i32_0 = arith.constant 0 : i32
    %c0_i32_1 = arith.constant 0 : i32
    return %c0_i32, %c0_i32_0 : i32, i32
  }
  func.func @transform_4(%arg0: i32, %arg1: i32) -> (i32, i32) {
    %c0_i32 = arith.constant 0 : i32
    %c0_i32_0 = arith.constant 0 : i32
    %c0_i32_1 = arith.constant 0 : i32
    return %c0_i32, %c0_i32_0 : i32, i32
  }
  func.func @transform_5(%arg0: i32, %arg1: i32) -> (i32, i32) {
    %c0_i32 = arith.constant 0 : i32
    %c0_i32_0 = arith.constant 0 : i32
    %c0_i32_1 = arith.constant 0 : i32
    return %c0_i32, %c0_i32_0 : i32, i32
  }
  func.func @transform_6(%arg0: i32, %arg1: i32) -> (i32, i32) {
    %c0_i32 = arith.constant 0 : i32
    %c0_i32_0 = arith.constant 0 : i32
    %c0_i32_1 = arith.constant 0 : i32
    return %c0_i32, %c0_i32_0 : i32, i32
  }
  func.func @transform_7(%arg0: i32, %arg1: i32) -> (i32, i32, i32) {
    %c0_i32 = arith.constant 0 : i32
    %c0_i32_0 = arith.constant 0 : i32
    return %arg0, %arg1, %c0_i32 : i32, i32, i32
  }
}

</mosaic_0001>

<llo_original>
// kernel: tpu_custom_call.1
$region0: #{tpu_custom_call.1}
  #allocation0 [shape = 'u32[]', space=smem, size = 0x4, offset = 0x4, fixed_abs, tag = 'smem constant byte address 0x4 - core index']
  #allocation1 [shape = 'u32[144,128]{1,0:T(1,128)}', space=vmem, size = 0x12000, scoped, tag = 'internal scratch']
  #allocation2 [shape = 'f32[128,128]{1,0:T(8,128)}', space=vmem, size = 0x10000, scoped, tag = 'scratch operand']
  #allocation3 [shape = 'f32[128,128]{1,0:T(8,128)}', space=vmem, size = 0x10000, scoped, tag = 'scratch operand']
  #allocation4 [shape = 'f32[128,128]{1,0:T(8,128)}', space=vmem, size = 0x10000, scoped, tag = 'scratch operand']
  %s0 = inlined_call_operand.hbm [shape: f32[2,128,128], index: 0, kind: input, shape index: {}]
  %s1 = inlined_call_operand.hbm [shape: f32[2,128,128], index: 1, kind: input, shape index: {}]
  %s2 = inlined_call_operand.hbm [shape: f32[2,128,128], index: 2, kind: input, shape index: {}]
  %s3 = inlined_call_operand.hbm [shape: f32[128,128], index: 3, kind: input, shape index: {}]
  %s4 = inlined_call_operand.vmem [shape: f32[1,128], index: 4, kind: input, shape index: {}]
  %s5 = inlined_call_operand.hbm [shape: f32[128,128], index: 5, kind: input, shape index: {}]
  %s6 = inlined_call_operand.vmem [shape: f32[1,128], index: 6, kind: input, shape index: {}]
  %s7 = inlined_call_operand.hbm [shape: f32[2,128,128], index: 7, kind: output, shape index: {}]
  %s8 = sld [smem:[#allocation0]]
  $region85: #{tpu_custom_call.1} parent=0
    _
  %s10 = ssub.s32 1, %s8
  %s11 = scalar_select 0, %s10, %s8
  $region1: #{tpu_custom_call.1} parent=0
    #allocation5 [shape = 'u8[131072]{0}', space=vmem, size = 0x20000, scoped, tag = 'input window, operand 0']
    #allocation6 [shape = 's32[2]{0}', space=sflag, size = 0x8, scoped, tag = 'scoped memory for tpu_custom_call.1']
    #allocation7 [shape = 's32[2]{0}', space=sflag, size = 0x8, scoped, tag = 'scoped memory for tpu_custom_call.1']
    #allocation8 [shape = 'u8[131072]{0}', space=vmem, size = 0x20000, scoped, tag = 'input window, operand 1']
    #allocation9 [shape = 's32[2]{0}', space=sflag, size = 0x8, scoped, tag = 'scoped memory for tpu_custom_call.1']
    #allocation10 [shape = 'u8[131072]{0}', space=vmem, size = 0x20000, scoped, tag = 'input window, operand 2']
    #allocation11 [shape = 'u8[65536]{0}', space=vmem, size = 0x10000, scoped, tag = 'input window, operand 3, single buffered']
    #allocation12 [shape = 's32[1]{0}', space=sflag, size = 0x4, scoped, tag = 'scoped memory for tpu_custom_call.1']
    #allocation13 [shape = 'u8[65536]{0}', space=vmem, size = 0x10000, scoped, tag = 'input window, operand 5, single buffered']
    #allocation14 [shape = 'u8[131072]{0}', space=vmem, size = 0x20000, scoped, tag = 'output window, operand 0']
    %12 = vsyncpa [#allocation6], 0
    %s13 = scalar_lea.sflag [#allocation6], 1
    %14 = vsyncpa %s13, 0
    %15 = vsyncpa [#allocation9], 0
    %s16 = scalar_lea.sflag [#allocation9], 1
    %17 = vsyncpa %s16, 0
    %18 = vsyncpa [#allocation12], 0
    %19 = vsyncpa [#allocation7], 0
    %s20 = scalar_lea.sflag [#allocation7], 1
    %21 = vsyncpa %s20, 0
    loop: start=0, step=1, limit=4
    $region2: #{tpu_custom_call.1} parent=1 // loop_pre_header
      _
    $region3: #{tpu_custom_call.1} parent=1 // loop_header
      %s23 = sphi 0, %s27
      %p24 = scmp.ge.s32.totalorder %s23, 4
      %s30 = sphi 0, %s42
      %s31 = sphi 0, %s38
      %s32 = sphi 0, %s30
      %s33 = sphi 0, %s31
      %s34 = sphi 0, %s32
      %s35 = sphi 0, %s33
      %s47 = sphi 0, %s49
      %s50 = sphi 0, %s47
      %s51 = sphi 0, %s50
      %s67 = sphi 0, %s51
      %s73 = sphi 0, %s75
      %s76 = sphi 0, %s73
      %s77 = sphi 0, %s76
      %s93 = sphi 0, %s77
      %s99 = sphi 0, %s101
      %s102 = sphi 0, %s99
      %s103 = sphi 0, %s102
      %s119 = sphi 0, %s103
      %s123 = sphi 0, %s123
      %s125 = sphi 0, %s123
      %s126 = sphi 0, %s125
      %s140 = sphi 0, %s126
      %s144 = sphi 0, %s144
      %s146 = sphi 0, %s144
      %s147 = sphi 0, %s146
      %s161 = sphi 0, %s147
      %s165 = sphi 0, %s165
      %s167 = sphi 0, %s165
      %s168 = sphi 0, %s167
      %s182 = sphi 0, %s168
      %s186 = sphi 0, %s186
      %s188 = sphi 0, %s186
      %s189 = sphi 0, %s188
      %s203 = sphi 0, %s189
      %s211 = sphi 0, %s213
      %s214 = sphi 0, %s211
      %s215 = sphi 0, %s214
      %s231 = sphi 0, %s215
    $region4: #{tpu_custom_call.1} parent=1 // loop_header_branch
      %26 = sbr.rel (%p24) target = $region8
    $region5: #{tpu_custom_call.1} parent=1 // loop_body
      %s28 = ssub.s32 %s23, 1
      %s29 = ssub.s32 %s23, 2
      %s36 = sadd.s32 1, %s31
      %p37 = scmp.ge.s32.totalorder %s36, 1
      %s38 = scalar_select %p37, 0, %s36
      %s39 = sadd.s32 1, %s30
      %s40 = scalar_select %p37, %s39, %s30
      %p41 = scmp.ge.s32.totalorder %s40, 2
      %s42 = scalar_select %p41, 0, %s40
      %s43 = ssub.s32 %s30, %s42
      %s44 = ssub.s32 %s31, %s38
      %s45 = sor.u32 %s43, %s44
      %p46 = scmp.eq.s32.totalorder %s45, 0
      %s48 = sadd.s32 %s47, 1
      %s49 = scalar_select %p46, %s47, %s48
      %p52 = pneg %p46
      %p53 = scmp.eq.s32.totalorder %s23, 1
      %p54 = por %p52, %p53
      %p55 = scmp.ne.s32.totalorder %s47, %s50
      %p56 = scmp.eq.s32.totalorder %s23, 0
      %p57 = por %p55, %p56
      %p58 = scmp.ne.s32.totalorder %s47, %s50
      %p59 = scmp.eq.s32.totalorder %s28, 1
      %p60 = por %p58, %p59
      %p61 = scmp.ne.s32.totalorder %s50, %s51
      %p62 = scmp.eq.s32.totalorder %s28, 0
      %p63 = por %p61, %p62
      %p64 = scmp.ne.s32.totalorder %s50, %s51
      %p65 = scmp.eq.s32.totalorder %s29, 1
      %p66 = por %p64, %p65
      %p68 = scmp.ne.s32.totalorder %s51, %s67
      %p69 = scmp.eq.s32.totalorder %s29, 0
      %p70 = por %p68, %p69
      %s71 = ssub.s32 %s30, %s42
      %p72 = scmp.eq.s32.totalorder %s71, 0
      %s74 = sadd.s32 %s73, 1
      %s75 = scalar_select %p72, %s73, %s74
      %p78 = pneg %p72
      %p79 = scmp.eq.s32.totalorder %s23, 1
      %p80 = por %p78, %p79
      %p81 = scmp.ne.s32.totalorder %s73, %s76
      %p82 = scmp.eq.s32.totalorder %s23, 0
      %p83 = por %p81, %p82
      %p84 = scmp.ne.s32.totalorder %s73, %s76
      %p85 = scmp.eq.s32.totalorder %s28, 1
      %p86 = por %p84, %p85
      %p87 = scmp.ne.s32.totalorder %s76, %s77
      %p88 = scmp.eq.s32.totalorder %s28, 0
      %p89 = por %p87, %p88
      %p90 = scmp.ne.s32.totalorder %s76, %s77
      %p91 = scmp.eq.s32.totalorder %s29, 1
      %p92 = por %p90, %p91
      %p94 = scmp.ne.s32.totalorder %s77, %s93
      %p95 = scmp.eq.s32.totalorder %s29, 0
      %p96 = por %p94, %p95
      %s97 = ssub.s32 %s30, %s42
      %p98 = scmp.eq.s32.totalorder %s97, 0
      %s100 = sadd.s32 %s99, 1
      %s101 = scalar_select %p98, %s99, %s100
      %p104 = pneg %p98
      %p105 = scmp.eq.s32.totalorder %s23, 1
      %p106 = por %p104, %p105
      %p107 = scmp.ne.s32.totalorder %s99, %s102
      %p108 = scmp.eq.s32.totalorder %s23, 0
      %p109 = por %p107, %p108
      %p110 = scmp.ne.s32.totalorder %s99, %s102
      %p111 = scmp.eq.s32.totalorder %s28, 1
      %p112 = por %p110, %p111
      %p113 = scmp.ne.s32.totalorder %s102, %s103
      %p114 = scmp.eq.s32.totalorder %s28, 0
      %p115 = por %p113, %p114
      %p116 = scmp.ne.s32.totalorder %s102, %s103
      %p117 = scmp.eq.s32.totalorder %s29, 1
      %p118 = por %p116, %p117
      %p120 = scmp.ne.s32.totalorder %s103, %s119
      %p121 = scmp.eq.s32.totalorder %s29, 0
      %p122 = por %p120, %p121
      %s124 = sadd.s32 %s123, 1
      %p127 = scmp.eq.s32.totalorder %s23, 1
      %p128 = scmp.ne.s32.totalorder %s123, %s125
      %p129 = scmp.eq.s32.totalorder %s23, 0
      %p130 = por %p128, %p129
      %p131 = scmp.ne.s32.totalorder %s123, %s125
      %p132 = scmp.eq.s32.totalorder %s28, 1
      %p133 = por %p131, %p132
      %p134 = scmp.ne.s32.totalorder %s125, %s126
      %p135 = scmp.eq.s32.totalorder %s28, 0
      %p136 = por %p134, %p135
      %p137 = scmp.ne.s32.totalorder %s125, %s126
      %p138 = scmp.eq.s32.totalorder %s29, 1
      %p139 = por %p137, %p138
      %p141 = scmp.ne.s32.totalorder %s126, %s140
      %p142 = scmp.eq.s32.totalorder %s29, 0
      %p143 = por %p141, %p142
      %s145 = sadd.s32 %s144, 1
      %p148 = scmp.eq.s32.totalorder %s23, 1
      %p149 = scmp.ne.s32.totalorder %s144, %s146
      %p150 = scmp.eq.s32.totalorder %s23, 0
      %p151 = por %p149, %p150
      %p152 = scmp.ne.s32.totalorder %s144, %s146
      %p153 = scmp.eq.s32.totalorder %s28, 1
      %p154 = por %p152, %p153
      %p155 = scmp.ne.s32.totalorder %s146, %s147
      %p156 = scmp.eq.s32.totalorder %s28, 0
      %p157 = por %p155, %p156
      %p158 = scmp.ne.s32.totalorder %s146, %s147
      %p159 = scmp.eq.s32.totalorder %s29, 1
      %p160 = por %p158, %p159
      %p162 = scmp.ne.s32.totalorder %s147, %s161
      %p163 = scmp.eq.s32.totalorder %s29, 0
      %p164 = por %p162, %p163
      %s166 = sadd.s32 %s165, 1
      %p169 = scmp.eq.s32.totalorder %s23, 1
      %p170 = scmp.ne.s32.totalorder %s165, %s167
      %p171 = scmp.eq.s32.totalorder %s23, 0
      %p172 = por %p170, %p171
      %p173 = scmp.ne.s32.totalorder %s165, %s167
      %p174 = scmp.eq.s32.totalorder %s28, 1
      %p175 = por %p173, %p174
      %p176 = scmp.ne.s32.totalorder %s167, %s168
      %p177 = scmp.eq.s32.totalorder %s28, 0
      %p178 = por %p176, %p177
      %p179 = scmp.ne.s32.totalorder %s167, %s168
      %p180 = scmp.eq.s32.totalorder %s29, 1
      %p181 = por %p179, %p180
      %p183 = scmp.ne.s32.totalorder %s168, %s182
      %p184 = scmp.eq.s32.totalorder %s29, 0
      %p185 = por %p183, %p184
      %s187 = sadd.s32 %s186, 1
      %p190 = scmp.eq.s32.totalorder %s23, 1
      %p191 = scmp.ne.s32.totalorder %s186, %s188
      %p192 = scmp.eq.s32.totalorder %s23, 0
      %p193 = por %p191, %p192
      %p194 = scmp.ne.s32.totalorder %s186, %s188
      %p195 = scmp.eq.s32.totalorder %s28, 1
      %p196 = por %p194, %p195
      %p197 = scmp.ne.s32.totalorder %s188, %s189
      %p198 = scmp.eq.s32.totalorder %s28, 0
      %p199 = por %p197, %p198
      %p200 = scmp.ne.s32.totalorder %s188, %s189
      %p201 = scmp.eq.s32.totalorder %s29, 1
      %p202 = por %p200, %p201
      %p204 = scmp.ne.s32.totalorder %s189, %s203
      %p205 = scmp.eq.s32.totalorder %s29, 0
      %p206 = por %p204, %p205
      %s207 = ssub.s32 %s30, %s42
      %s208 = ssub.s32 %s31, %s38
      %s209 = sor.u32 %s207, %s208
      %p210 = scmp.eq.s32.totalorder %s209, 0
      %s212 = sadd.s32 %s211, 1
      %s213 = scalar_select %p210, %s211, %s212
      %p216 = pneg %p210
      %p217 = scmp.eq.s32.totalorder %s23, 1
      %p218 = por %p216, %p217
      %p219 = scmp.ne.s32.totalorder %s211, %s214
      %p220 = scmp.eq.s32.totalorder %s23, 0
      %p221 = por %p219, %p220
      %p222 = scmp.ne.s32.totalorder %s211, %s214
      %p223 = scmp.eq.s32.totalorder %s28, 1
      %p224 = por %p222, %p223
      %p225 = scmp.ne.s32.totalorder %s214, %s215
      %p226 = scmp.eq.s32.totalorder %s28, 0
      %p227 = por %p225, %p226
      %p228 = scmp.ne.s32.totalorder %s214, %s215
      %p229 = scmp.eq.s32.totalorder %s29, 1
      %p230 = por %p228, %p229
      %p232 = scmp.ne.s32.totalorder %s215, %s231
      %p233 = scmp.eq.s32.totalorder %s29, 0
      %p234 = por %p232, %p233
      %p235 = scmp.le.s32.totalorder 1, %s23
      %p236 = scmp.lt.s32.totalorder %s23, 3
      %p237 = pnand %p235, %p236
      %p238 = pneg %p237
      // Predicated region
      $region9: #{tpu_custom_call.1} parent=5 // pred_check
        _
      $region10: #{tpu_custom_call.1} parent=5 // pred_check_branch
        %240 = sbr.rel (%p237) target = $region12
      $region11: #{tpu_custom_call.1} parent=5 // pred_region
        %s241 = ssub.s32 %s23, 1
        // Predicated region
        $region13: #{tpu_custom_call.1} parent=11 // pred_check
          %p242 = pneg %p136
        $region14: #{tpu_custom_call.1} parent=11 // pred_check_branch
          %244 = sbr.rel (%p242) target = $region16
        $region15: #{tpu_custom_call.1} parent=11 // pred_region
          %s246 = ssub.s32 2048, 2048
          %247 = vsyncadd [#allocation12], %s246
          %s248 = sshll.u32 [#allocation11], 4
          %s249 = int_to_ptr.vmem [resolvable:$true] %s248
          %254 = dma.hbm_to_vmem [thread:$0]  %s3, 2048, %s249, [#allocation12], 128, 128, 8
        $region16: #{tpu_custom_call.1} parent=11 // pred_fallthru
          _
        // Predicated region
        $region17: #{tpu_custom_call.1} parent=11 // pred_check
          %p255 = pneg %p157
        $region18: #{tpu_custom_call.1} parent=11 // pred_check_branch
          %257 = sbr.rel (%p255) target = $region20
        $region19: #{tpu_custom_call.1} parent=11 // pred_region
          _
        $region20: #{tpu_custom_call.1} parent=11 // pred_fallthru
          _
        // Predicated region
        $region21: #{tpu_custom_call.1} parent=11 // pred_check
          %p258 = pneg %p178
        $region22: #{tpu_custom_call.1} parent=11 // pred_check_branch
          %260 = sbr.rel (%p258) target = $region24
        $region23: #{tpu_custom_call.1} parent=11 // pred_region
          %s262 = ssub.s32 2048, 2048
          %263 = vsyncadd [#allocation12], %s262
          %s264 = sshll.u32 [#allocation13], 4
          %s265 = int_to_ptr.vmem [resolvable:$true] %s264
          %270 = dma.hbm_to_vmem [thread:$0]  %s5, 2048, %s265, [#allocation12], 128, 128, 8
        $region24: #{tpu_custom_call.1} parent=11 // pred_fallthru
          _
        // Predicated region
        $region25: #{tpu_custom_call.1} parent=11 // pred_check
          %p271 = pneg %p199
        $region26: #{tpu_custom_call.1} parent=11 // pred_check_branch
          %273 = sbr.rel (%p271) target = $region28
        $region27: #{tpu_custom_call.1} parent=11 // pred_region
          _
        $region28: #{tpu_custom_call.1} parent=11 // pred_fallthru
          _
      $region12: #{tpu_custom_call.1} parent=5 // pred_fallthru
        _
      %p274 = scmp.lt.s32.totalorder %s23, 2
      // Predicated region
      $region29: #{tpu_custom_call.1} parent=5 // pred_check
        %p275 = pneg %p274
      $region30: #{tpu_custom_call.1} parent=5 // pred_check_branch
        %277 = sbr.rel (%p275) target = $region32
      $region31: #{tpu_custom_call.1} parent=5 // pred_region
        // Predicated region
        $region33: #{tpu_custom_call.1} parent=31 // pred_check
          %p278 = pneg %p57
        $region34: #{tpu_custom_call.1} parent=31 // pred_check_branch
          %280 = sbr.rel (%p278) target = $region36
        $region35: #{tpu_custom_call.1} parent=31 // pred_region
          %s281 = sand.u32 %s47, 1
          %s282 = scalar_lea.sflag [#allocation6], %s281
          %s283 = sand.u32 %s47, 1
          %s284 = smul.addr %s283, 128
          %s285 = scalar_lea.vmem [#allocation5], %s284
          %s286 = smul.u32 16, %s31
          %s288 = ssub.s32 2048, 2048
          %289 = vsyncadd %s282, %s288
          %s290 = smul.addr %s30, 16
          %s291 = sadd.s32 %s286, %s290
          %s292 = smul.addr %s291, 128
          %s293 = scalar_lea.hbm %s0, %s292
          %s294 = sshll.u32 %s285, 4
          %s295 = int_to_ptr.vmem [resolvable:$true] %s294
          %300 = dma.hbm_to_vmem [thread:$0]  %s293, 2048, %s295, %s282, 128, 128, 8
        $region36: #{tpu_custom_call.1} parent=31 // pred_fallthru
          _
        // Predicated region
        $region37: #{tpu_custom_call.1} parent=31 // pred_check
          %p301 = pneg %p83
        $region38: #{tpu_custom_call.1} parent=31 // pred_check_branch
          %303 = sbr.rel (%p301) target = $region40
        $region39: #{tpu_custom_call.1} parent=31 // pred_region
          %s304 = sand.u32 %s23, 1
          %s305 = scalar_lea.sflag [#allocation9], %s304
          %s306 = sand.u32 %s73, 1
          %s307 = smul.addr %s306, 128
          %s308 = scalar_lea.vmem [#allocation8], %s307
          %s310 = ssub.s32 2048, 2048
          %311 = vsyncadd %s305, %s310
          %s312 = smul.addr %s30, 16
          %s313 = smul.addr %s312, 128
          %s314 = scalar_lea.hbm %s1, %s313
          %s315 = sshll.u32 %s308, 4
          %s316 = int_to_ptr.vmem [resolvable:$true] %s315
          %321 = dma.hbm_to_vmem [thread:$0]  %s314, 2048, %s316, %s305, 128, 128, 8
        $region40: #{tpu_custom_call.1} parent=31 // pred_fallthru
          _
        // Predicated region
        $region41: #{tpu_custom_call.1} parent=31 // pred_check
          %p322 = pneg %p109
        $region42: #{tpu_custom_call.1} parent=31 // pred_check_branch
          %324 = sbr.rel (%p322) target = $region44
        $region43: #{tpu_custom_call.1} parent=31 // pred_region
          %s325 = sand.u32 %s23, 1
          %s326 = scalar_lea.sflag [#allocation9], %s325
          %s327 = sand.u32 %s99, 1
          %s328 = smul.addr %s327, 128
          %s329 = scalar_lea.vmem [#allocation10], %s328
          %s331 = ssub.s32 2048, 2048
          %332 = vsyncadd %s326, %s331
          %s333 = smul.addr %s30, 16
          %s334 = smul.addr %s333, 128
          %s335 = scalar_lea.hbm %s2, %s334
          %s336 = sshll.u32 %s329, 4
          %s337 = int_to_ptr.vmem [resolvable:$true] %s336
          %342 = dma.hbm_to_vmem [thread:$0]  %s335, 2048, %s337, %s326, 128, 128, 8
        $region44: #{tpu_custom_call.1} parent=31 // pred_fallthru
          _
      $region32: #{tpu_custom_call.1} parent=5 // pred_fallthru
        _
      %p343 = scmp.le.s32.totalorder 1, %s23
      %p344 = scmp.lt.s32.totalorder %s23, 3
      %p345 = pnand %p343, %p344
      %p346 = pneg %p345
      // Predicated region
      $region45: #{tpu_custom_call.1} parent=5 // pred_check
        _
      $region46: #{tpu_custom_call.1} parent=5 // pred_check_branch
        %348 = sbr.rel (%p345) target = $region48
      $region47: #{tpu_custom_call.1} parent=5 // pred_region
        %s349 = ssub.s32 %s23, 1
        %s350 = sand.u32 %s50, 1
        %s351 = scalar_lea.sflag [#allocation6], %s350
        %s352 = sand.u32 %s50, 1
        %s353 = smul.addr %s352, 128
        %s354 = scalar_lea.vmem [#allocation5], %s353
        // Predicated region
        $region49: #{tpu_custom_call.1} parent=47 // pred_check
          %p355 = pneg %p63
        $region50: #{tpu_custom_call.1} parent=47 // pred_check_branch
          %357 = sbr.rel (%p355) target = $region52
        $region51: #{tpu_custom_call.1} parent=47 // pred_region
          %358 = dma.done %s351, 2048
        $region52: #{tpu_custom_call.1} parent=47 // pred_fallthru
          _
        %s359 = sand.u32 %s28, 1
        %s360 = scalar_lea.sflag [#allocation9], %s359
        %s361 = sand.u32 %s76, 1
        %s362 = smul.addr %s361, 128
        %s363 = scalar_lea.vmem [#allocation8], %s362
        // Predicated region
        $region53: #{tpu_custom_call.1} parent=47 // pred_check
          %p364 = pneg %p89
        $region54: #{tpu_custom_call.1} parent=47 // pred_check_branch
          %366 = sbr.rel (%p364) target = $region56
        $region55: #{tpu_custom_call.1} parent=47 // pred_region
          %367 = dma.done %s360, 2048
        $region56: #{tpu_custom_call.1} parent=47 // pred_fallthru
          _
        %s368 = sand.u32 %s28, 1
        %s369 = scalar_lea.sflag [#allocation9], %s368
        %s370 = sand.u32 %s102, 1
        %s371 = smul.addr %s370, 128
        %s372 = scalar_lea.vmem [#allocation10], %s371
        // Predicated region
        $region57: #{tpu_custom_call.1} parent=47 // pred_check
          %p373 = pneg %p115
        $region58: #{tpu_custom_call.1} parent=47 // pred_check_branch
          %375 = sbr.rel (%p373) target = $region60
        $region59: #{tpu_custom_call.1} parent=47 // pred_region
          %376 = dma.done %s369, 2048
        $region60: #{tpu_custom_call.1} parent=47 // pred_fallthru
          _
        // Predicated region
        $region61: #{tpu_custom_call.1} parent=47 // pred_check
          %p377 = pneg %p136
        $region62: #{tpu_custom_call.1} parent=47 // pred_check_branch
          %379 = sbr.rel (%p377) target = $region64
        $region63: #{tpu_custom_call.1} parent=47 // pred_region
          %380 = dma.done [#allocation12], 2048
        $region64: #{tpu_custom_call.1} parent=47 // pred_fallthru
          _
        // Predicated region
        $region65: #{tpu_custom_call.1} parent=47 // pred_check
          %p381 = pneg %p178
        $region66: #{tpu_custom_call.1} parent=47 // pred_check_branch
          %383 = sbr.rel (%p381) target = $region68
        $region67: #{tpu_custom_call.1} parent=47 // pred_region
          %384 = dma.done [#allocation12], 2048
        $region68: #{tpu_custom_call.1} parent=47 // pred_fallthru
          _
        %s385 = sand.u32 %s50, 1
        %s386 = scalar_lea.sflag [#allocation6], %s385
        %s387 = sand.u32 %s50, 1
        %s388 = smul.addr %s387, 128
        %s389 = scalar_lea.vmem [#allocation5], %s388
        %p390 = pneg %p63
        %p391 = pneg %p60
        %s392 = sand.u32 %s28, 1
        %s393 = scalar_lea.sflag [#allocation9], %s392
        %s394 = sand.u32 %s76, 1
        %s395 = smul.addr %s394, 128
        %s396 = scalar_lea.vmem [#allocation8], %s395
        %p397 = pneg %p89
        %p398 = pneg %p86
        %s399 = sand.u32 %s28, 1
        %s400 = scalar_lea.sflag [#allocation9], %s399
        %s401 = sand.u32 %s102, 1
        %s402 = smul.addr %s401, 128
        %s403 = scalar_lea.vmem [#allocation10], %s402
        %p404 = pneg %p115
        %p405 = pneg %p112
        %p406 = pneg %p136
        %p407 = pneg %p133
        %p408 = pneg %p157
        %p409 = pneg %p154
        %p410 = pneg %p178
        %p411 = pneg %p175
        %p412 = pneg %p199
        %p413 = pneg %p196
        %p414 = pneg %p227
        %p415 = pneg %p224
        %s416 = sand.u32 %s214, 1
        %s417 = scalar_lea.sflag [#allocation7], %s416
        %s418 = sand.u32 %s214, 1
        %s419 = smul.addr %s418, 128
        %s420 = scalar_lea.vmem [#allocation14], %s419
        %s421 = smul.u32 16, %s33
        %s422 = smul.u32 16, %s33
        %v423 = vld [vmem:[#allocation11] sm:$0xff]
        %v424 = vld [vmem:[#allocation11 + $0x8] sm:$0xff]
        %v425 = vld [vmem:[#allocation11 + $0x10] sm:$0xff]
        %v426 = vld [vmem:[#allocation11 + $0x18] sm:$0xff]
        %v427 = vld [vmem:[#allocation11 + $0x20] sm:$0xff]
        %v428 = vld [vmem:[#allocation11 + $0x28] sm:$0xff]
        %v429 = vld [vmem:[#allocation11 + $0x30] sm:$0xff]
        %v430 = vld [vmem:[#allocation11 + $0x38] sm:$0xff]
        %v431 = vld [vmem:[#allocation11 + $0x40] sm:$0xff]
        %v432 = vld [vmem:[#allocation11 + $0x48] sm:$0xff]
        %v433 = vld [vmem:[#allocation11 + $0x50] sm:$0xff]
        %v434 = vld [vmem:[#allocation11 + $0x58] sm:$0xff]
        %v435 = vld [vmem:[#allocation11 + $0x60] sm:$0xff]
        %v436 = vld [vmem:[#allocation11 + $0x68] sm:$0xff]
        %v437 = vld [vmem:[#allocation11 + $0x70] sm:$0xff]
        %v438 = vld [vmem:[#allocation11 + $0x78] sm:$0xff]
        %v439 = vld [vmem:[%s4] sm:$0x1]
        %p440 = scmp.eq.s32.totalorder %s33, 0
        // Predicated region
        $region69: #{tpu_custom_call.1} parent=47 // pred_check
          %p441 = pneg %p440
        $region70: #{tpu_custom_call.1} parent=47 // pred_check_branch
          %443 = sbr.rel (%p441) target = $region72
        $region71: #{tpu_custom_call.1} parent=47 // pred_region
          %v444 = vld [vmem:[%s363] sm:$0xff]
          %v445 = vld [vmem:[%s363 + $0x8] sm:$0xff]
          %v446 = vld [vmem:[%s363 + $0x10] sm:$0xff]
          %v447 = vld [vmem:[%s363 + $0x18] sm:$0xff]
          %v448 = vld [vmem:[%s363 + $0x20] sm:$0xff]
          %v449 = vld [vmem:[%s363 + $0x28] sm:$0xff]
          %v450 = vld [vmem:[%s363 + $0x30] sm:$0xff]
          %v451 = vld [vmem:[%s363 + $0x38] sm:$0xff]
          %v452 = vld [vmem:[%s363 + $0x40] sm:$0xff]
          %v453 = vld [vmem:[%s363 + $0x48] sm:$0xff]
          %v454 = vld [vmem:[%s363 + $0x50] sm:$0xff]
          %v455 = vld [vmem:[%s363 + $0x58] sm:$0xff]
          %v456 = vld [vmem:[%s363 + $0x60] sm:$0xff]
          %v457 = vld [vmem:[%s363 + $0x68] sm:$0xff]
          %v458 = vld [vmem:[%s363 + $0x70] sm:$0xff]
          %v459 = vld [vmem:[%s363 + $0x78] sm:$0xff]
          %v461 = vlaneseq
          %v462 = vshrl.u32 %v461, 7
          %v463 = vsub.s32 0, %v462
          %v464 = vrot.slane %v439, %v463
          %466 = vmatprep.subr.mxu0 0.0
          %467 = vmatpush1.msra.mxu0 %v438
          %468 = vmatprep.subr.mxu0 0.0
          %469 = vmatpush1.msra.mxu0 %v437
          %470 = vmatprep.subr.mxu0 0.0
          %471 = vmatpush1.msra.mxu0 %v436
          %472 = vmatprep.subr.mxu0 0.0
          %473 = vmatpush1.msra.mxu0 %v435
          %474 = vmatprep.subr.mxu0 0.0
          %475 = vmatpush1.msra.mxu0 %v434
          %476 = vmatprep.subr.mxu0 0.0
          %477 = vmatpush1.msra.mxu0 %v433
          %478 = vmatprep.subr.mxu0 0.0
          %479 = vmatpush1.msra.mxu0 %v432
          %480 = vmatprep.subr.mxu0 0.0
          %481 = vmatpush1.msra.mxu0 %v431
          %482 = vmatprep.subr.mxu0 0.0
          %483 = vmatpush1.msra.mxu0 %v430
          %484 = vmatprep.subr.mxu0 0.0
          %485 = vmatpush1.msra.mxu0 %v429
          %486 = vmatprep.subr.mxu0 0.0
          %487 = vmatpush1.msra.mxu0 %v428
          %488 = vmatprep.subr.mxu0 0.0
          %489 = vmatpush1.msra.mxu0 %v427
          %490 = vmatprep.subr.mxu0 0.0
          %491 = vmatpush1.msra.mxu0 %v426
          %492 = vmatprep.subr.mxu0 0.0
          %493 = vmatpush1.msra.mxu0 %v425
          %494 = vmatprep.subr.mxu0 0.0
          %495 = vmatpush1.msra.mxu0 %v424
          %496 = vmatprep.subr.mxu0 0.0
          %497 = vmatpush1.msra.mxu0 %v423
          %498 = vmatprep.subr.mxu0 0.0
          %499 = vmatpush2.msra.mxu0 0.0
          %500 = vmatprep.subr.mxu0 0.0
          %501 = vmatpush2.msra.mxu0 0.0
          %502 = vmatprep.subr.mxu0 0.0
          %503 = vmatpush2.msra.mxu0 0.0
          %504 = vmatprep.subr.mxu0 0.0
          %505 = vmatpush2.msra.mxu0 0.0
          %506 = vmatprep.subr.mxu0 0.0
          %507 = vmatpush2.msra.mxu0 0.0
          %508 = vmatprep.subr.mxu0 0.0
          %509 = vmatpush2.msra.mxu0 0.0
          %510 = vmatprep.subr.mxu0 0.0
          %511 = vmatpush2.msra.mxu0 0.0
          %512 = vmatprep.subr.mxu0 0.0
          %513 = vmatpush2.msra.mxu0 0.0
          %514 = vmatprep.subr.mxu0 0.0
          %515 = vmatpush2.msra.mxu0 0.0
          %516 = vmatprep.subr.mxu0 0.0
          %517 = vmatpush2.msra.mxu0 0.0
          %518 = vmatprep.subr.mxu0 0.0
          %519 = vmatpush2.msra.mxu0 0.0
          %520 = vmatprep.subr.mxu0 0.0
          %521 = vmatpush2.msra.mxu0 0.0
          %522 = vmatprep.subr.mxu0 0.0
          %523 = vmatpush2.msra.mxu0 0.0
          %524 = vmatprep.subr.mxu0 0.0
          %525 = vmatpush2.msra.mxu0 0.0
          %526 = vmatprep.subr.mxu0 0.0
          %527 = vmatpush2.msra.mxu0 0.0
          %528 = vmatprep.subr.mxu0 0.0
          %529 = vmatpush2.msra.mxu0 0.0
          %530 = vmatprep.mubr.f32.mxu0 0.0
          %531 = vmatmul.mubr.f32.gmra.mxu0 %v444
          %v532 = vpop.f32.mrf.mxu0
          %v533 = vadd.f32 %v464, %v532
          %v534 = vpop.f32.mrf.mxu0
          %535 = vmatprep.mubr.f32.mxu0 0.0
          %536 = vmatmul.mubr.f32.gmra.mxu0 %v445
          %v537 = vpop.f32.mrf.mxu0
          %v538 = vadd.f32 %v464, %v537
          %v539 = vpop.f32.mrf.mxu0
          %540 = vmatprep.mubr.f32.mxu0 0.0
          %541 = vmatmul.mubr.f32.gmra.mxu0 %v446
          %v542 = vpop.f32.mrf.mxu0
          %v543 = vadd.f32 %v464, %v542
          %v544 = vpop.f32.mrf.mxu0
          %545 = vmatprep.mubr.f32.mxu0 0.0
          %546 = vmatmul.mubr.f32.gmra.mxu0 %v447
          %v547 = vpop.f32.mrf.mxu0
          %v548 = vadd.f32 %v464, %v547
          %v549 = vpop.f32.mrf.mxu0
          %550 = vmatprep.mubr.f32.mxu0 0.0
          %551 = vmatmul.mubr.f32.gmra.mxu0 %v448
          %v552 = vpop.f32.mrf.mxu0
          %v553 = vadd.f32 %v464, %v552
          %v554 = vpop.f32.mrf.mxu0
          %555 = vmatprep.mubr.f32.mxu0 0.0
          %556 = vmatmul.mubr.f32.gmra.mxu0 %v449
          %v557 = vpop.f32.mrf.mxu0
          %v558 = vadd.f32 %v464, %v557
          %v559 = vpop.f32.mrf.mxu0
          %560 = vmatprep.mubr.f32.mxu0 0.0
          %561 = vmatmul.mubr.f32.gmra.mxu0 %v450
          %v562 = vpop.f32.mrf.mxu0
          %v563 = vadd.f32 %v464, %v562
          %v564 = vpop.f32.mrf.mxu0
          %565 = vmatprep.mubr.f32.mxu0 0.0
          %566 = vmatmul.mubr.f32.gmra.mxu0 %v451
          %v567 = vpop.f32.mrf.mxu0
          %v568 = vadd.f32 %v464, %v567
          %v569 = vpop.f32.mrf.mxu0
          %570 = vmatprep.mubr.f32.mxu0 0.0
          %571 = vmatmul.mubr.f32.gmra.mxu0 %v452
          %v572 = vpop.f32.mrf.mxu0
          %v573 = vadd.f32 %v464, %v572
          %v574 = vpop.f32.mrf.mxu0
          %575 = vmatprep.mubr.f32.mxu0 0.0
          %576 = vmatmul.mubr.f32.gmra.mxu0 %v453
          %v577 = vpop.f32.mrf.mxu0
          %v578 = vadd.f32 %v464, %v577
          %v579 = vpop.f32.mrf.mxu0
          %580 = vmatprep.mubr.f32.mxu0 0.0
          %581 = vmatmul.mubr.f32.gmra.mxu0 %v454
          %v582 = vpop.f32.mrf.mxu0
          %v583 = vadd.f32 %v464, %v582
          %v584 = vpop.f32.mrf.mxu0
          %585 = vmatprep.mubr.f32.mxu0 0.0
          %586 = vmatmul.mubr.f32.gmra.mxu0 %v455
          %v587 = vpop.f32.mrf.mxu0
          %v588 = vadd.f32 %v464, %v587
          %v589 = vpop.f32.mrf.mxu0
          %590 = vmatprep.mubr.f32.mxu0 0.0
          %591 = vmatmul.mubr.f32.gmra.mxu0 %v456
          %v592 = vpop.f32.mrf.mxu0
          %v593 = vadd.f32 %v464, %v592
          %v594 = vpop.f32.mrf.mxu0
          %595 = vmatprep.mubr.f32.mxu0 0.0
          %596 = vmatmul.mubr.f32.gmra.mxu0 %v457
          %v597 = vpop.f32.mrf.mxu0
          %v598 = vadd.f32 %v464, %v597
          %v599 = vpop.f32.mrf.mxu0
          %600 = vmatprep.mubr.f32.mxu0 0.0
          %601 = vmatmul.mubr.f32.gmra.mxu0 %v458
          %v602 = vpop.f32.mrf.mxu0
          %v603 = vadd.f32 %v464, %v602
          %v604 = vpop.f32.mrf.mxu0
          %605 = vmatprep.mubr.f32.mxu0 0.0
          %606 = vmatmul.mubr.f32.gmra.mxu0 %v459
          %v607 = vpop.f32.mrf.mxu0
          %v608 = vadd.f32 %v464, %v607
          %v609 = vpop.f32.mrf.mxu0
          %610 = vdwg.mxu0
          %v611 = vld [vmem:[%s372] sm:$0xff]
          %v612 = vld [vmem:[%s372 + $0x8] sm:$0xff]
          %v613 = vld [vmem:[%s372 + $0x10] sm:$0xff]
          %v614 = vld [vmem:[%s372 + $0x18] sm:$0xff]
          %v615 = vld [vmem:[%s372 + $0x20] sm:$0xff]
          %v616 = vld [vmem:[%s372 + $0x28] sm:$0xff]
          %v617 = vld [vmem:[%s372 + $0x30] sm:$0xff]
          %v618 = vld [vmem:[%s372 + $0x38] sm:$0xff]
          %v619 = vld [vmem:[%s372 + $0x40] sm:$0xff]
          %v620 = vld [vmem:[%s372 + $0x48] sm:$0xff]
          %v621 = vld [vmem:[%s372 + $0x50] sm:$0xff]
          %v622 = vld [vmem:[%s372 + $0x58] sm:$0xff]
          %v623 = vld [vmem:[%s372 + $0x60] sm:$0xff]
          %v624 = vld [vmem:[%s372 + $0x68] sm:$0xff]
          %v625 = vld [vmem:[%s372 + $0x70] sm:$0xff]
          %v626 = vld [vmem:[%s372 + $0x78] sm:$0xff]
          %627 = vmatprep.subr.mxu0 0.0
          %628 = vmatpush1.msra.mxu0 %v438
          %629 = vmatprep.subr.mxu0 0.0
          %630 = vmatpush1.msra.mxu0 %v437
          %631 = vmatprep.subr.mxu0 0.0
          %632 = vmatpush1.msra.mxu0 %v436
          %633 = vmatprep.subr.mxu0 0.0
          %634 = vmatpush1.msra.mxu0 %v435
          %635 = vmatprep.subr.mxu0 0.0
          %636 = vmatpush1.msra.mxu0 %v434
          %637 = vmatprep.subr.mxu0 0.0
          %638 = vmatpush1.msra.mxu0 %v433
          %639 = vmatprep.subr.mxu0 0.0
          %640 = vmatpush1.msra.mxu0 %v432
          %641 = vmatprep.subr.mxu0 0.0
          %642 = vmatpush1.msra.mxu0 %v431
          %643 = vmatprep.subr.mxu0 0.0
          %644 = vmatpush1.msra.mxu0 %v430
          %645 = vmatprep.subr.mxu0 0.0
          %646 = vmatpush1.msra.mxu0 %v429
          %647 = vmatprep.subr.mxu0 0.0
          %648 = vmatpush1.msra.mxu0 %v428
          %649 = vmatprep.subr.mxu0 0.0
          %650 = vmatpush1.msra.mxu0 %v427
          %651 = vmatprep.subr.mxu0 0.0
          %652 = vmatpush1.msra.mxu0 %v426
          %653 = vmatprep.subr.mxu0 0.0
          %654 = vmatpush1.msra.mxu0 %v425
          %655 = vmatprep.subr.mxu0 0.0
          %656 = vmatpush1.msra.mxu0 %v424
          %657 = vmatprep.subr.mxu0 0.0
          %658 = vmatpush1.msra.mxu0 %v423
          %659 = vmatprep.subr.mxu0 0.0
          %660 = vmatpush2.msra.mxu0 0.0
          %661 = vmatprep.subr.mxu0 0.0
          %662 = vmatpush2.msra.mxu0 0.0
          %663 = vmatprep.subr.mxu0 0.0
          %664 = vmatpush2.msra.mxu0 0.0
          %665 = vmatprep.subr.mxu0 0.0
          %666 = vmatpush2.msra.mxu0 0.0
          %667 = vmatprep.subr.mxu0 0.0
          %668 = vmatpush2.msra.mxu0 0.0
          %669 = vmatprep.subr.mxu0 0.0
          %670 = vmatpush2.msra.mxu0 0.0
          %671 = vmatprep.subr.mxu0 0.0
          %672 = vmatpush2.msra.mxu0 0.0
          %673 = vmatprep.subr.mxu0 0.0
          %674 = vmatpush2.msra.mxu0 0.0
          %675 = vmatprep.subr.mxu0 0.0
          %676 = vmatpush2.msra.mxu0 0.0
          %677 = vmatprep.subr.mxu0 0.0
          %678 = vmatpush2.msra.mxu0 0.0
          %679 = vmatprep.subr.mxu0 0.0
          %680 = vmatpush2.msra.mxu0 0.0
          %681 = vmatprep.subr.mxu0 0.0
          %682 = vmatpush2.msra.mxu0 0.0
          %683 = vmatprep.subr.mxu0 0.0
          %684 = vmatpush2.msra.mxu0 0.0
          %685 = vmatprep.subr.mxu0 0.0
          %686 = vmatpush2.msra.mxu0 0.0
          %687 = vmatprep.subr.mxu0 0.0
          %688 = vmatpush2.msra.mxu0 0.0
          %689 = vmatprep.subr.mxu0 0.0
          %690 = vmatpush2.msra.mxu0 0.0
          %691 = vmatprep.mubr.f32.mxu0 0.0
          %692 = vmatmul.mubr.f32.gmra.mxu0 %v611
          %v693 = vpop.f32.mrf.mxu0
          %v694 = vadd.f32 %v464, %v693
          %v695 = vpop.f32.mrf.mxu0
          %696 = vmatprep.mubr.f32.mxu0 0.0
          %697 = vmatmul.mubr.f32.gmra.mxu0 %v612
          %v698 = vpop.f32.mrf.mxu0
          %v699 = vadd.f32 %v464, %v698
          %v700 = vpop.f32.mrf.mxu0
          %701 = vmatprep.mubr.f32.mxu0 0.0
          %702 = vmatmul.mubr.f32.gmra.mxu0 %v613
          %v703 = vpop.f32.mrf.mxu0
          %v704 = vadd.f32 %v464, %v703
          %v705 = vpop.f32.mrf.mxu0
          %706 = vmatprep.mubr.f32.mxu0 0.0
          %707 = vmatmul.mubr.f32.gmra.mxu0 %v614
          %v708 = vpop.f32.mrf.mxu0
          %v709 = vadd.f32 %v464, %v708
          %v710 = vpop.f32.mrf.mxu0
          %711 = vmatprep.mubr.f32.mxu0 0.0
          %712 = vmatmul.mubr.f32.gmra.mxu0 %v615
          %v713 = vpop.f32.mrf.mxu0
          %v714 = vadd.f32 %v464, %v713
          %v715 = vpop.f32.mrf.mxu0
          %716 = vmatprep.mubr.f32.mxu0 0.0
          %717 = vmatmul.mubr.f32.gmra.mxu0 %v616
          %v718 = vpop.f32.mrf.mxu0
          %v719 = vadd.f32 %v464, %v718
          %v720 = vpop.f32.mrf.mxu0
          %721 = vmatprep.mubr.f32.mxu0 0.0
          %722 = vmatmul.mubr.f32.gmra.mxu0 %v617
          %v723 = vpop.f32.mrf.mxu0
          %v724 = vadd.f32 %v464, %v723
          %v725 = vpop.f32.mrf.mxu0
          %726 = vmatprep.mubr.f32.mxu0 0.0
          %727 = vmatmul.mubr.f32.gmra.mxu0 %v618
          %v728 = vpop.f32.mrf.mxu0
          %v729 = vadd.f32 %v464, %v728
          %v730 = vpop.f32.mrf.mxu0
          %731 = vmatprep.mubr.f32.mxu0 0.0
          %732 = vmatmul.mubr.f32.gmra.mxu0 %v619
          %v733 = vpop.f32.mrf.mxu0
          %v734 = vadd.f32 %v464, %v733
          %v735 = vpop.f32.mrf.mxu0
          %736 = vmatprep.mubr.f32.mxu0 0.0
          %737 = vmatmul.mubr.f32.gmra.mxu0 %v620
          %v738 = vpop.f32.mrf.mxu0
          %v739 = vadd.f32 %v464, %v738
          %v740 = vpop.f32.mrf.mxu0
          %741 = vmatprep.mubr.f32.mxu0 0.0
          %742 = vmatmul.mubr.f32.gmra.mxu0 %v621
          %v743 = vpop.f32.mrf.mxu0
          %v744 = vadd.f32 %v464, %v743
          %v745 = vpop.f32.mrf.mxu0
          %746 = vmatprep.mubr.f32.mxu0 0.0
          %747 = vmatmul.mubr.f32.gmra.mxu0 %v622
          %v748 = vpop.f32.mrf.mxu0
          %v749 = vadd.f32 %v464, %v748
          %v750 = vpop.f32.mrf.mxu0
          %751 = vmatprep.mubr.f32.mxu0 0.0
          %752 = vmatmul.mubr.f32.gmra.mxu0 %v623
          %v753 = vpop.f32.mrf.mxu0
          %v754 = vadd.f32 %v464, %v753
          %v755 = vpop.f32.mrf.mxu0
          %756 = vmatprep.mubr.f32.mxu0 0.0
          %757 = vmatmul.mubr.f32.gmra.mxu0 %v624
          %v758 = vpop.f32.mrf.mxu0
          %v759 = vadd.f32 %v464, %v758
          %v760 = vpop.f32.mrf.mxu0
          %761 = vmatprep.mubr.f32.mxu0 0.0
          %762 = vmatmul.mubr.f32.gmra.mxu0 %v625
          %v763 = vpop.f32.mrf.mxu0
          %v764 = vadd.f32 %v464, %v763
          %v765 = vpop.f32.mrf.mxu0
          %766 = vmatprep.mubr.f32.mxu0 0.0
          %767 = vmatmul.mubr.f32.gmra.mxu0 %v626
          %v768 = vpop.f32.mrf.mxu0
          %v769 = vadd.f32 %v464, %v768
          %v770 = vpop.f32.mrf.mxu0
          %771 = vdwg.mxu0
          %772 = vst [vmem:[#allocation2] sm:$0xff] %v533
          %773 = vst [vmem:[#allocation2 + $0x8] sm:$0xff] %v538
          %774 = vst [vmem:[#allocation2 + $0x10] sm:$0xff] %v543
          %775 = vst [vmem:[#allocation2 + $0x18] sm:$0xff] %v548
          %776 = vst [vmem:[#allocation2 + $0x20] sm:$0xff] %v553
          %777 = vst [vmem:[#allocation2 + $0x28] sm:$0xff] %v558
          %778 = vst [vmem:[#allocation2 + $0x30] sm:$0xff] %v563
          %779 = vst [vmem:[#allocation2 + $0x38] sm:$0xff] %v568
          %780 = vst [vmem:[#allocation2 + $0x40] sm:$0xff] %v573
          %781 = vst [vmem:[#allocation2 + $0x48] sm:$0xff] %v578
          %782 = vst [vmem:[#allocation2 + $0x50] sm:$0xff] %v583
          %783 = vst [vmem:[#allocation2 + $0x58] sm:$0xff] %v588
          %784 = vst [vmem:[#allocation2 + $0x60] sm:$0xff] %v593
          %785 = vst [vmem:[#allocation2 + $0x68] sm:$0xff] %v598
          %786 = vst [vmem:[#allocation2 + $0x70] sm:$0xff] %v603
          %787 = vst [vmem:[#allocation2 + $0x78] sm:$0xff] %v608
          %788 = vst [vmem:[#allocation3] sm:$0xff] %v694
          %789 = vst [vmem:[#allocation3 + $0x8] sm:$0xff] %v699
          %790 = vst [vmem:[#allocation3 + $0x10] sm:$0xff] %v704
          %791 = vst [vmem:[#allocation3 + $0x18] sm:$0xff] %v709
          %792 = vst [vmem:[#allocation3 + $0x20] sm:$0xff] %v714
          %793 = vst [vmem:[#allocation3 + $0x28] sm:$0xff] %v719
          %794 = vst [vmem:[#allocation3 + $0x30] sm:$0xff] %v724
          %795 = vst [vmem:[#allocation3 + $0x38] sm:$0xff] %v729
          %796 = vst [vmem:[#allocation3 + $0x40] sm:$0xff] %v734
          %797 = vst [vmem:[#allocation3 + $0x48] sm:$0xff] %v739
          %798 = vst [vmem:[#allocation3 + $0x50] sm:$0xff] %v744
          %799 = vst [vmem:[#allocation3 + $0x58] sm:$0xff] %v749
          %800 = vst [vmem:[#allocation3 + $0x60] sm:$0xff] %v754
          %801 = vst [vmem:[#allocation3 + $0x68] sm:$0xff] %v759
          %802 = vst [vmem:[#allocation3 + $0x70] sm:$0xff] %v764
          %803 = vst [vmem:[#allocation3 + $0x78] sm:$0xff] %v769
        $region72: #{tpu_custom_call.1} parent=47 // pred_fallthru
          _
        %v804 = vld [vmem:[%s354] sm:$0xff]
        %v805 = vld [vmem:[%s354 + $0x8] sm:$0xff]
        %v806 = vld [vmem:[%s354 + $0x10] sm:$0xff]
        %v807 = vld [vmem:[%s354 + $0x18] sm:$0xff]
        %v808 = vld [vmem:[%s354 + $0x20] sm:$0xff]
        %v809 = vld [vmem:[%s354 + $0x28] sm:$0xff]
        %v810 = vld [vmem:[%s354 + $0x30] sm:$0xff]
        %v811 = vld [vmem:[%s354 + $0x38] sm:$0xff]
        %v812 = vld [vmem:[%s354 + $0x40] sm:$0xff]
        %v813 = vld [vmem:[%s354 + $0x48] sm:$0xff]
        %v814 = vld [vmem:[%s354 + $0x50] sm:$0xff]
        %v815 = vld [vmem:[%s354 + $0x58] sm:$0xff]
        %v816 = vld [vmem:[%s354 + $0x60] sm:$0xff]
        %v817 = vld [vmem:[%s354 + $0x68] sm:$0xff]
        %v818 = vld [vmem:[%s354 + $0x70] sm:$0xff]
        %v819 = vld [vmem:[%s354 + $0x78] sm:$0xff]
        %v821 = vlaneseq
        %v822 = vshrl.u32 %v821, 7
        %v823 = vsub.s32 0, %v822
        %v824 = vrot.slane %v439, %v823
        %826 = vmatprep.subr.mxu0 0.0
        %827 = vmatpush1.msra.mxu0 %v438
        %828 = vmatprep.subr.mxu0 0.0
        %829 = vmatpush1.msra.mxu0 %v437
        %830 = vmatprep.subr.mxu0 0.0
        %831 = vmatpush1.msra.mxu0 %v436
        %832 = vmatprep.subr.mxu0 0.0
        %833 = vmatpush1.msra.mxu0 %v435
        %834 = vmatprep.subr.mxu0 0.0
        %835 = vmatpush1.msra.mxu0 %v434
        %836 = vmatprep.subr.mxu0 0.0
        %837 = vmatpush1.msra.mxu0 %v433
        %838 = vmatprep.subr.mxu0 0.0
        %839 = vmatpush1.msra.mxu0 %v432
        %840 = vmatprep.subr.mxu0 0.0
        %841 = vmatpush1.msra.mxu0 %v431
        %842 = vmatprep.subr.mxu0 0.0
        %843 = vmatpush1.msra.mxu0 %v430
        %844 = vmatprep.subr.mxu0 0.0
        %845 = vmatpush1.msra.mxu0 %v429
        %846 = vmatprep.subr.mxu0 0.0
        %847 = vmatpush1.msra.mxu0 %v428
        %848 = vmatprep.subr.mxu0 0.0
        %849 = vmatpush1.msra.mxu0 %v427
        %850 = vmatprep.subr.mxu0 0.0
        %851 = vmatpush1.msra.mxu0 %v426
        %852 = vmatprep.subr.mxu0 0.0
        %853 = vmatpush1.msra.mxu0 %v425
        %854 = vmatprep.subr.mxu0 0.0
        %855 = vmatpush1.msra.mxu0 %v424
        %856 = vmatprep.subr.mxu0 0.0
        %857 = vmatpush1.msra.mxu0 %v423
        %858 = vmatprep.subr.mxu0 0.0
        %859 = vmatpush2.msra.mxu0 0.0
        %860 = vmatprep.subr.mxu0 0.0
        %861 = vmatpush2.msra.mxu0 0.0
        %862 = vmatprep.subr.mxu0 0.0
        %863 = vmatpush2.msra.mxu0 0.0
        %864 = vmatprep.subr.mxu0 0.0
        %865 = vmatpush2.msra.mxu0 0.0
        %866 = vmatprep.subr.mxu0 0.0
        %867 = vmatpush2.msra.mxu0 0.0
        %868 = vmatprep.subr.mxu0 0.0
        %869 = vmatpush2.msra.mxu0 0.0
        %870 = vmatprep.subr.mxu0 0.0
        %871 = vmatpush2.msra.mxu0 0.0
        %872 = vmatprep.subr.mxu0 0.0
        %873 = vmatpush2.msra.mxu0 0.0
        %874 = vmatprep.subr.mxu0 0.0
        %875 = vmatpush2.msra.mxu0 0.0
        %876 = vmatprep.subr.mxu0 0.0
        %877 = vmatpush2.msra.mxu0 0.0
        %878 = vmatprep.subr.mxu0 0.0
        %879 = vmatpush2.msra.mxu0 0.0
        %880 = vmatprep.subr.mxu0 0.0
        %881 = vmatpush2.msra.mxu0 0.0
        %882 = vmatprep.subr.mxu0 0.0
        %883 = vmatpush2.msra.mxu0 0.0
        %884 = vmatprep.subr.mxu0 0.0
        %885 = vmatpush2.msra.mxu0 0.0
        %886 = vmatprep.subr.mxu0 0.0
        %887 = vmatpush2.msra.mxu0 0.0
        %888 = vmatprep.subr.mxu0 0.0
        %889 = vmatpush2.msra.mxu0 0.0
        %890 = vmatprep.mubr.f32.mxu0 0.0
        %891 = vmatmul.mubr.f32.gmra.mxu0 %v804
        %v892 = vpop.f32.mrf.mxu0
        %v893 = vadd.f32 %v824, %v892
        %v894 = vpop.f32.mrf.mxu0
        %895 = vmatprep.mubr.f32.mxu0 0.0
        %896 = vmatmul.mubr.f32.gmra.mxu0 %v805
        %v897 = vpop.f32.mrf.mxu0
        %v898 = vadd.f32 %v824, %v897
        %v899 = vpop.f32.mrf.mxu0
        %900 = vmatprep.mubr.f32.mxu0 0.0
        %901 = vmatmul.mubr.f32.gmra.mxu0 %v806
        %v902 = vpop.f32.mrf.mxu0
        %v903 = vadd.f32 %v824, %v902
        %v904 = vpop.f32.mrf.mxu0
        %905 = vmatprep.mubr.f32.mxu0 0.0
        %906 = vmatmul.mubr.f32.gmra.mxu0 %v807
        %v907 = vpop.f32.mrf.mxu0
        %v908 = vadd.f32 %v824, %v907
        %v909 = vpop.f32.mrf.mxu0
        %910 = vmatprep.mubr.f32.mxu0 0.0
        %911 = vmatmul.mubr.f32.gmra.mxu0 %v808
        %v912 = vpop.f32.mrf.mxu0
        %v913 = vadd.f32 %v824, %v912
        %v914 = vpop.f32.mrf.mxu0
        %915 = vmatprep.mubr.f32.mxu0 0.0
        %916 = vmatmul.mubr.f32.gmra.mxu0 %v809
        %v917 = vpop.f32.mrf.mxu0
        %v918 = vadd.f32 %v824, %v917
        %v919 = vpop.f32.mrf.mxu0
        %920 = vmatprep.mubr.f32.mxu0 0.0
        %921 = vmatmul.mubr.f32.gmra.mxu0 %v810
        %v922 = vpop.f32.mrf.mxu0
        %v923 = vadd.f32 %v824, %v922
        %v924 = vpop.f32.mrf.mxu0
        %925 = vmatprep.mubr.f32.mxu0 0.0
        %926 = vmatmul.mubr.f32.gmra.mxu0 %v811
        %v927 = vpop.f32.mrf.mxu0
        %v928 = vadd.f32 %v824, %v927
        %v929 = vpop.f32.mrf.mxu0
        %930 = vmatprep.mubr.f32.mxu0 0.0
        %931 = vmatmul.mubr.f32.gmra.mxu0 %v812
        %v932 = vpop.f32.mrf.mxu0
        %v933 = vadd.f32 %v824, %v932
        %v934 = vpop.f32.mrf.mxu0
        %935 = vmatprep.mubr.f32.mxu0 0.0
        %936 = vmatmul.mubr.f32.gmra.mxu0 %v813
        %v937 = vpop.f32.mrf.mxu0
        %v938 = vadd.f32 %v824, %v937
        %v939 = vpop.f32.mrf.mxu0
        %940 = vmatprep.mubr.f32.mxu0 0.0
        %941 = vmatmul.mubr.f32.gmra.mxu0 %v814
        %v942 = vpop.f32.mrf.mxu0
        %v943 = vadd.f32 %v824, %v942
        %v944 = vpop.f32.mrf.mxu0
        %945 = vmatprep.mubr.f32.mxu0 0.0
        %946 = vmatmul.mubr.f32.gmra.mxu0 %v815
        %v947 = vpop.f32.mrf.mxu0
        %v948 = vadd.f32 %v824, %v947
        %v949 = vpop.f32.mrf.mxu0
        %950 = vmatprep.mubr.f32.mxu0 0.0
        %951 = vmatmul.mubr.f32.gmra.mxu0 %v816
        %v952 = vpop.f32.mrf.mxu0
        %v953 = vadd.f32 %v824, %v952
        %v954 = vpop.f32.mrf.mxu0
        %955 = vmatprep.mubr.f32.mxu0 0.0
        %956 = vmatmul.mubr.f32.gmra.mxu0 %v817
        %v957 = vpop.f32.mrf.mxu0
        %v958 = vadd.f32 %v824, %v957
        %v959 = vpop.f32.mrf.mxu0
        %960 = vmatprep.mubr.f32.mxu0 0.0
        %961 = vmatmul.mubr.f32.gmra.mxu0 %v818
        %v962 = vpop.f32.mrf.mxu0
        %v963 = vadd.f32 %v824, %v962
        %v964 = vpop.f32.mrf.mxu0
        %965 = vmatprep.mubr.f32.mxu0 0.0
        %966 = vmatmul.mubr.f32.gmra.mxu0 %v819
        %v967 = vpop.f32.mrf.mxu0
        %v968 = vadd.f32 %v824, %v967
        %v969 = vpop.f32.mrf.mxu0
        %970 = vdwg.mxu0
        %v971 = vmul.f32 %v893, 0.17677669
        %v972 = vmul.f32 %v898, 0.17677669
        %v973 = vmul.f32 %v903, 0.17677669
        %v974 = vmul.f32 %v908, 0.17677669
        %v975 = vmul.f32 %v913, 0.17677669
        %v976 = vmul.f32 %v918, 0.17677669
        %v977 = vmul.f32 %v923, 0.17677669
        %v978 = vmul.f32 %v928, 0.17677669
        %v979 = vmul.f32 %v933, 0.17677669
        %v980 = vmul.f32 %v938, 0.17677669
        %v981 = vmul.f32 %v943, 0.17677669
        %v982 = vmul.f32 %v948, 0.17677669
        %v983 = vmul.f32 %v953, 0.17677669
        %v984 = vmul.f32 %v958, 0.17677669
        %v985 = vmul.f32 %v963, 0.17677669
        %v986 = vmul.f32 %v968, 0.17677669
        %v987 = vld [vmem:[#allocation2] sm:$0xff]
        %v988 = vld [vmem:[#allocation2 + $0x8] sm:$0xff]
        %v989 = vld [vmem:[#allocation2 + $0x10] sm:$0xff]
        %v990 = vld [vmem:[#allocation2 + $0x18] sm:$0xff]
        %v991 = vld [vmem:[#allocation2 + $0x20] sm:$0xff]
        %v992 = vld [vmem:[#allocation2 + $0x28] sm:$0xff]
        %v993 = vld [vmem:[#allocation2 + $0x30] sm:$0xff]
        %v994 = vld [vmem:[#allocation2 + $0x38] sm:$0xff]
        %v995 = vld [vmem:[#allocation2 + $0x40] sm:$0xff]
        %v996 = vld [vmem:[#allocation2 + $0x48] sm:$0xff]
        %v997 = vld [vmem:[#allocation2 + $0x50] sm:$0xff]
        %v998 = vld [vmem:[#allocation2 + $0x58] sm:$0xff]
        %v999 = vld [vmem:[#allocation2 + $0x60] sm:$0xff]
        %v1000 = vld [vmem:[#allocation2 + $0x68] sm:$0xff]
        %v1001 = vld [vmem:[#allocation2 + $0x70] sm:$0xff]
        %v1002 = vld [vmem:[#allocation2 + $0x78] sm:$0xff]
        %v1003 = vld [vmem:[#allocation3] sm:$0xff]
        %v1004 = vld [vmem:[#allocation3 + $0x8] sm:$0xff]
        %v1005 = vld [vmem:[#allocation3 + $0x10] sm:$0xff]
        %v1006 = vld [vmem:[#allocation3 + $0x18] sm:$0xff]
        %v1007 = vld [vmem:[#allocation3 + $0x20] sm:$0xff]
        %v1008 = vld [vmem:[#allocation3 + $0x28] sm:$0xff]
        %v1009 = vld [vmem:[#allocation3 + $0x30] sm:$0xff]
        %v1010 = vld [vmem:[#allocation3 + $0x38] sm:$0xff]
        %v1011 = vld [vmem:[#allocation3 + $0x40] sm:$0xff]
        %v1012 = vld [vmem:[#allocation3 + $0x48] sm:$0xff]
        %v1013 = vld [vmem:[#allocation3 + $0x50] sm:$0xff]
        %v1014 = vld [vmem:[#allocation3 + $0x58] sm:$0xff]
        %v1015 = vld [vmem:[#allocation3 + $0x60] sm:$0xff]
        %v1016 = vld [vmem:[#allocation3 + $0x68] sm:$0xff]
        %v1017 = vld [vmem:[#allocation3 + $0x70] sm:$0xff]
        %v1018 = vld [vmem:[#allocation3 + $0x78] sm:$0xff]
        %vm1019 = vcmask 261120
        %v1021 = vsel %vm1019, %v971, 0
        %v1024 = vsel %vm1019, %v972, 0
        %v1027 = vsel %vm1019, %v973, 0
        %v1030 = vsel %vm1019, %v974, 0
        %v1033 = vsel %vm1019, %v975, 0
        %v1036 = vsel %vm1019, %v976, 0
        %v1039 = vsel %vm1019, %v977, 0
        %v1042 = vsel %vm1019, %v978, 0
        %v1045 = vsel %vm1019, %v979, 0
        %v1048 = vsel %vm1019, %v980, 0
        %v1051 = vsel %vm1019, %v981, 0
        %v1054 = vsel %vm1019, %v982, 0
        %v1057 = vsel %vm1019, %v983, 0
        %v1060 = vsel %vm1019, %v984, 0
        %v1063 = vsel %vm1019, %v985, 0
        %v1066 = vsel %vm1019, %v986, 0
        %v1069 = vsel %vm1019, %v987, 0
        %v1072 = vsel %vm1019, %v988, 0
        %v1075 = vsel %vm1019, %v989, 0
        %v1078 = vsel %vm1019, %v990, 0
        %v1081 = vsel %vm1019, %v991, 0
        %v1084 = vsel %vm1019, %v992, 0
        %v1087 = vsel %vm1019, %v993, 0
        %v1090 = vsel %vm1019, %v994, 0
        %v1093 = vsel %vm1019, %v995, 0
        %v1096 = vsel %vm1019, %v996, 0
        %v1099 = vsel %vm1019, %v997, 0
        %v1102 = vsel %vm1019, %v998, 0
        %v1105 = vsel %vm1019, %v999, 0
        %v1108 = vsel %vm1019, %v1000, 0
        %v1111 = vsel %vm1019, %v1001, 0
        %v1114 = vsel %vm1019, %v1002, 0
        %1116 = vmatprep.subr.mxu0 0.0
        %1117 = vmatpush1.xpose.msra.mxu0 %v1114
        %1118 = vmatprep.subr.mxu0 0.0
        %1119 = vmatpush1.xpose.msra.mxu0 %v1111
        %1120 = vmatprep.subr.mxu0 0.0
        %1121 = vmatpush1.xpose.msra.mxu0 %v1108
        %1122 = vmatprep.subr.mxu0 0.0
        %1123 = vmatpush1.xpose.msra.mxu0 %v1105
        %1124 = vmatprep.subr.mxu0 0.0
        %1125 = vmatpush1.xpose.msra.mxu0 %v1102
        %1126 = vmatprep.subr.mxu0 0.0
        %1127 = vmatpush1.xpose.msra.mxu0 %v1099
        %1128 = vmatprep.subr.mxu0 0.0
        %1129 = vmatpush1.xpose.msra.mxu0 %v1096
        %1130 = vmatprep.subr.mxu0 0.0
        %1131 = vmatpush1.xpose.msra.mxu0 %v1093
        %1132 = vmatprep.subr.mxu0 0.0
        %1133 = vmatpush1.xpose.msra.mxu0 %v1090
        %1134 = vmatprep.subr.mxu0 0.0
        %1135 = vmatpush1.xpose.msra.mxu0 %v1087
        %1136 = vmatprep.subr.mxu0 0.0
        %1137 = vmatpush1.xpose.msra.mxu0 %v1084
        %1138 = vmatprep.subr.mxu0 0.0
        %1139 = vmatpush1.xpose.msra.mxu0 %v1081
        %1140 = vmatprep.subr.mxu0 0.0
        %1141 = vmatpush1.xpose.msra.mxu0 %v1078
        %1142 = vmatprep.subr.mxu0 0.0
        %1143 = vmatpush1.xpose.msra.mxu0 %v1075
        %1144 = vmatprep.subr.mxu0 0.0
        %1145 = vmatpush1.xpose.msra.mxu0 %v1072
        %1146 = vmatprep.subr.mxu0 0.0
        %1147 = vmatpush1.xpose.msra.mxu0 %v1069
        %1148 = vmatprep.subr.mxu0 0.0
        %1149 = vmatpush2.xpose.msra.mxu0 0.0
        %1150 = vmatprep.subr.mxu0 0.0
        %1151 = vmatpush2.xpose.msra.mxu0 0.0
        %1152 = vmatprep.subr.mxu0 0.0
        %1153 = vmatpush2.xpose.msra.mxu0 0.0
        %1154 = vmatprep.subr.mxu0 0.0
        %1155 = vmatpush2.xpose.msra.mxu0 0.0
        %1156 = vmatprep.subr.mxu0 0.0
        %1157 = vmatpush2.xpose.msra.mxu0 0.0
        %1158 = vmatprep.subr.mxu0 0.0
        %1159 = vmatpush2.xpose.msra.mxu0 0.0
        %1160 = vmatprep.subr.mxu0 0.0
        %1161 = vmatpush2.xpose.msra.mxu0 0.0
        %1162 = vmatprep.subr.mxu0 0.0
        %1163 = vmatpush2.xpose.msra.mxu0 0.0
        %1164 = vmatprep.subr.mxu0 0.0
        %1165 = vmatpush2.xpose.msra.mxu0 0.0
        %1166 = vmatprep.subr.mxu0 0.0
        %1167 = vmatpush2.xpose.msra.mxu0 0.0
        %1168 = vmatprep.subr.mxu0 0.0
        %1169 = vmatpush2.xpose.msra.mxu0 0.0
        %1170 = vmatprep.subr.mxu0 0.0
        %1171 = vmatpush2.xpose.msra.mxu0 0.0
        %1172 = vmatprep.subr.mxu0 0.0
        %1173 = vmatpush2.xpose.msra.mxu0 0.0
        %1174 = vmatprep.subr.mxu0 0.0
        %1175 = vmatpush2.xpose.msra.mxu0 0.0
        %1176 = vmatprep.subr.mxu0 0.0
        %1177 = vmatpush2.xpose.msra.mxu0 0.0
        %1178 = vmatprep.subr.mxu0 0.0
        %1179 = vmatpush2.xpose.msra.mxu0 0.0
        %1180 = vmatprep.mubr.f32.mxu0 0.0
        %1181 = vmatmul.mubr.f32.gmra.mxu0 %v1021
        %v1182 = vpop.f32.mrf.mxu0
        %v1183 = vadd.f32 0.0, %v1182
        %v1184 = vpop.f32.mrf.mxu0
        %1185 = vmatprep.mubr.f32.mxu0 0.0
        %1186 = vmatmul.mubr.f32.gmra.mxu0 %v1024
        %v1187 = vpop.f32.mrf.mxu0
        %v1188 = vadd.f32 0.0, %v1187
        %v1189 = vpop.f32.mrf.mxu0
        %1190 = vmatprep.mubr.f32.mxu0 0.0
        %1191 = vmatmul.mubr.f32.gmra.mxu0 %v1027
        %v1192 = vpop.f32.mrf.mxu0
        %v1193 = vadd.f32 0.0, %v1192
        %v1194 = vpop.f32.mrf.mxu0
        %1195 = vmatprep.mubr.f32.mxu0 0.0
        %1196 = vmatmul.mubr.f32.gmra.mxu0 %v1030
        %v1197 = vpop.f32.mrf.mxu0
        %v1198 = vadd.f32 0.0, %v1197
        %v1199 = vpop.f32.mrf.mxu0
        %1200 = vmatprep.mubr.f32.mxu0 0.0
        %1201 = vmatmul.mubr.f32.gmra.mxu0 %v1033
        %v1202 = vpop.f32.mrf.mxu0
        %v1203 = vadd.f32 0.0, %v1202
        %v1204 = vpop.f32.mrf.mxu0
        %1205 = vmatprep.mubr.f32.mxu0 0.0
        %1206 = vmatmul.mubr.f32.gmra.mxu0 %v1036
        %v1207 = vpop.f32.mrf.mxu0
        %v1208 = vadd.f32 0.0, %v1207
        %v1209 = vpop.f32.mrf.mxu0
        %1210 = vmatprep.mubr.f32.mxu0 0.0
        %1211 = vmatmul.mubr.f32.gmra.mxu0 %v1039
        %v1212 = vpop.f32.mrf.mxu0
        %v1213 = vadd.f32 0.0, %v1212
        %v1214 = vpop.f32.mrf.mxu0
        %1215 = vmatprep.mubr.f32.mxu0 0.0
        %1216 = vmatmul.mubr.f32.gmra.mxu0 %v1042
        %v1217 = vpop.f32.mrf.mxu0
        %v1218 = vadd.f32 0.0, %v1217
        %v1219 = vpop.f32.mrf.mxu0
        %1220 = vmatprep.mubr.f32.mxu0 0.0
        %1221 = vmatmul.mubr.f32.gmra.mxu0 %v1045
        %v1222 = vpop.f32.mrf.mxu0
        %v1223 = vadd.f32 0.0, %v1222
        %v1224 = vpop.f32.mrf.mxu0
        %1225 = vmatprep.mubr.f32.mxu0 0.0
        %1226 = vmatmul.mubr.f32.gmra.mxu0 %v1048
        %v1227 = vpop.f32.mrf.mxu0
        %v1228 = vadd.f32 0.0, %v1227
        %v1229 = vpop.f32.mrf.mxu0
        %1230 = vmatprep.mubr.f32.mxu0 0.0
        %1231 = vmatmul.mubr.f32.gmra.mxu0 %v1051
        %v1232 = vpop.f32.mrf.mxu0
        %v1233 = vadd.f32 0.0, %v1232
        %v1234 = vpop.f32.mrf.mxu0
        %1235 = vmatprep.mubr.f32.mxu0 0.0
        %1236 = vmatmul.mubr.f32.gmra.mxu0 %v1054
        %v1237 = vpop.f32.mrf.mxu0
        %v1238 = vadd.f32 0.0, %v1237
        %v1239 = vpop.f32.mrf.mxu0
        %1240 = vmatprep.mubr.f32.mxu0 0.0
        %1241 = vmatmul.mubr.f32.gmra.mxu0 %v1057
        %v1242 = vpop.f32.mrf.mxu0
        %v1243 = vadd.f32 0.0, %v1242
        %v1244 = vpop.f32.mrf.mxu0
        %1245 = vmatprep.mubr.f32.mxu0 0.0
        %1246 = vmatmul.mubr.f32.gmra.mxu0 %v1060
        %v1247 = vpop.f32.mrf.mxu0
        %v1248 = vadd.f32 0.0, %v1247
        %v1249 = vpop.f32.mrf.mxu0
        %1250 = vmatprep.mubr.f32.mxu0 0.0
        %1251 = vmatmul.mubr.f32.gmra.mxu0 %v1063
        %v1252 = vpop.f32.mrf.mxu0
        %v1253 = vadd.f32 0.0, %v1252
        %v1254 = vpop.f32.mrf.mxu0
        %1255 = vmatprep.mubr.f32.mxu0 0.0
        %1256 = vmatmul.mubr.f32.gmra.mxu0 %v1066
        %v1257 = vpop.f32.mrf.mxu0
        %v1258 = vadd.f32 0.0, %v1257
        %v1259 = vpop.f32.mrf.mxu0
        %1260 = vdwg.mxu0
        %1261 = vmax.xlane.f32.xlu0 %v1183
        %v1262 = vpop.xlane.xlu0 %1261
        %1263 = vmax.xlane.f32.xlu0 %v1188
        %v1264 = vpop.xlane.xlu0 %1263
        %1265 = vmax.xlane.f32.xlu0 %v1193
        %v1266 = vpop.xlane.xlu0 %1265
        %1267 = vmax.xlane.f32.xlu0 %v1198
        %v1268 = vpop.xlane.xlu0 %1267
        %1269 = vmax.xlane.f32.xlu0 %v1203
        %v1270 = vpop.xlane.xlu0 %1269
        %1271 = vmax.xlane.f32.xlu0 %v1208
        %v1272 = vpop.xlane.xlu0 %1271
        %1273 = vmax.xlane.f32.xlu0 %v1213
        %v1274 = vpop.xlane.xlu0 %1273
        %1275 = vmax.xlane.f32.xlu0 %v1218
        %v1276 = vpop.xlane.xlu0 %1275
        %1277 = vmax.xlane.f32.xlu0 %v1223
        %v1278 = vpop.xlane.xlu0 %1277
        %1279 = vmax.xlane.f32.xlu0 %v1228
        %v1280 = vpop.xlane.xlu0 %1279
        %1281 = vmax.xlane.f32.xlu0 %v1233
        %v1282 = vpop.xlane.xlu0 %1281
        %1283 = vmax.xlane.f32.xlu0 %v1238
        %v1284 = vpop.xlane.xlu0 %1283
        %1285 = vmax.xlane.f32.xlu0 %v1243
        %v1286 = vpop.xlane.xlu0 %1285
        %1287 = vmax.xlane.f32.xlu0 %v1248
        %v1288 = vpop.xlane.xlu0 %1287
        %1289 = vmax.xlane.f32.xlu0 %v1253
        %v1290 = vpop.xlane.xlu0 %1289
        %1291 = vmax.xlane.f32.xlu0 %v1258
        %v1292 = vpop.xlane.xlu0 %1291
        %v1293 = vsub.f32 %v1183, %v1262
        %v1294 = vsub.f32 %v1188, %v1264
        %v1295 = vsub.f32 %v1193, %v1266
        %v1296 = vsub.f32 %v1198, %v1268
        %v1297 = vsub.f32 %v1203, %v1270
        %v1298 = vsub.f32 %v1208, %v1272
        %v1299 = vsub.f32 %v1213, %v1274
        %v1300 = vsub.f32 %v1218, %v1276
        %v1301 = vsub.f32 %v1223, %v1278
        %v1302 = vsub.f32 %v1228, %v1280
        %v1303 = vsub.f32 %v1233, %v1282
        %v1304 = vsub.f32 %v1238, %v1284
        %v1305 = vsub.f32 %v1243, %v1286
        %v1306 = vsub.f32 %v1248, %v1288
        %v1307 = vsub.f32 %v1253, %v1290
        %v1308 = vsub.f32 %v1258, %v1292
        %v1309 = vmul.f32 %v1293, 1.442695
        %v1310 = vpow.pop %v1309
        %v1311 = vmul.f32 %v1294, 1.442695
        %v1312 = vpow.pop %v1311
        %v1313 = vmul.f32 %v1295, 1.442695
        %v1314 = vpow.pop %v1313
        %v1315 = vmul.f32 %v1296, 1.442695
        %v1316 = vpow.pop %v1315
        %v1317 = vmul.f32 %v1297, 1.442695
        %v1318 = vpow.pop %v1317
        %v1319 = vmul.f32 %v1298, 1.442695
        %v1320 = vpow.pop %v1319
        %v1321 = vmul.f32 %v1299, 1.442695
        %v1322 = vpow.pop %v1321
        %v1323 = vmul.f32 %v1300, 1.442695
        %v1324 = vpow.pop %v1323
        %v1325 = vmul.f32 %v1301, 1.442695
        %v1326 = vpow.pop %v1325
        %v1327 = vmul.f32 %v1302, 1.442695
        %v1328 = vpow.pop %v1327
        %v1329 = vmul.f32 %v1303, 1.442695
        %v1330 = vpow.pop %v1329
        %v1331 = vmul.f32 %v1304, 1.442695
        %v1332 = vpow.pop %v1331
        %v1333 = vmul.f32 %v1305, 1.442695
        %v1334 = vpow.pop %v1333
        %v1335 = vmul.f32 %v1306, 1.442695
        %v1336 = vpow.pop %v1335
        %v1337 = vmul.f32 %v1307, 1.442695
        %v1338 = vpow.pop %v1337
        %v1339 = vmul.f32 %v1308, 1.442695
        %v1340 = vpow.pop %v1339
        %1341 = vadd.xlane.f32.xlu0 %v1310
        %v1342 = vpop.xlane.xlu0 %1341
        %1343 = vadd.xlane.f32.xlu0 %v1312
        %v1344 = vpop.xlane.xlu0 %1343
        %1345 = vadd.xlane.f32.xlu0 %v1314
        %v1346 = vpop.xlane.xlu0 %1345
        %1347 = vadd.xlane.f32.xlu0 %v1316
        %v1348 = vpop.xlane.xlu0 %1347
        %1349 = vadd.xlane.f32.xlu0 %v1318
        %v1350 = vpop.xlane.xlu0 %1349
        %1351 = vadd.xlane.f32.xlu0 %v1320
        %v1352 = vpop.xlane.xlu0 %1351
        %1353 = vadd.xlane.f32.xlu0 %v1322
        %v1354 = vpop.xlane.xlu0 %1353
        %1355 = vadd.xlane.f32.xlu0 %v1324
        %v1356 = vpop.xlane.xlu0 %1355
        %1357 = vadd.xlane.f32.xlu0 %v1326
        %v1358 = vpop.xlane.xlu0 %1357
        %1359 = vadd.xlane.f32.xlu0 %v1328
        %v1360 = vpop.xlane.xlu0 %1359
        %1361 = vadd.xlane.f32.xlu0 %v1330
        %v1362 = vpop.xlane.xlu0 %1361
        %1363 = vadd.xlane.f32.xlu0 %v1332
        %v1364 = vpop.xlane.xlu0 %1363
        %1365 = vadd.xlane.f32.xlu0 %v1334
        %v1366 = vpop.xlane.xlu0 %1365
        %1367 = vadd.xlane.f32.xlu0 %v1336
        %v1368 = vpop.xlane.xlu0 %1367
        %1369 = vadd.xlane.f32.xlu0 %v1338
        %v1370 = vpop.xlane.xlu0 %1369
        %1371 = vadd.xlane.f32.xlu0 %v1340
        %v1372 = vpop.xlane.xlu0 %1371
        %1373 = vmatprep.subr.mxu0 0.0
        %1374 = vmatpush1.msra.mxu0 %v1018
        %1375 = vmatprep.subr.mxu0 0.0
        %1376 = vmatpush1.msra.mxu0 %v1017
        %1377 = vmatprep.subr.mxu0 0.0
        %1378 = vmatpush1.msra.mxu0 %v1016
        %1379 = vmatprep.subr.mxu0 0.0
        %1380 = vmatpush1.msra.mxu0 %v1015
        %1381 = vmatprep.subr.mxu0 0.0
        %1382 = vmatpush1.msra.mxu0 %v1014
        %1383 = vmatprep.subr.mxu0 0.0
        %1384 = vmatpush1.msra.mxu0 %v1013
        %1385 = vmatprep.subr.mxu0 0.0
        %1386 = vmatpush1.msra.mxu0 %v1012
        %1387 = vmatprep.subr.mxu0 0.0
        %1388 = vmatpush1.msra.mxu0 %v1011
        %1389 = vmatprep.subr.mxu0 0.0
        %1390 = vmatpush1.msra.mxu0 %v1010
        %1391 = vmatprep.subr.mxu0 0.0
        %1392 = vmatpush1.msra.mxu0 %v1009
        %1393 = vmatprep.subr.mxu0 0.0
        %1394 = vmatpush1.msra.mxu0 %v1008
        %1395 = vmatprep.subr.mxu0 0.0
        %1396 = vmatpush1.msra.mxu0 %v1007
        %1397 = vmatprep.subr.mxu0 0.0
        %1398 = vmatpush1.msra.mxu0 %v1006
        %1399 = vmatprep.subr.mxu0 0.0
        %1400 = vmatpush1.msra.mxu0 %v1005
        %1401 = vmatprep.subr.mxu0 0.0
        %1402 = vmatpush1.msra.mxu0 %v1004
        %1403 = vmatprep.subr.mxu0 0.0
        %1404 = vmatpush1.msra.mxu0 %v1003
        %1405 = vmatprep.subr.mxu0 0.0
        %1406 = vmatpush2.msra.mxu0 0.0
        %1407 = vmatprep.subr.mxu0 0.0
        %1408 = vmatpush2.msra.mxu0 0.0
        %1409 = vmatprep.subr.mxu0 0.0
        %1410 = vmatpush2.msra.mxu0 0.0
        %1411 = vmatprep.subr.mxu0 0.0
        %1412 = vmatpush2.msra.mxu0 0.0
        %1413 = vmatprep.subr.mxu0 0.0
        %1414 = vmatpush2.msra.mxu0 0.0
        %1415 = vmatprep.subr.mxu0 0.0
        %1416 = vmatpush2.msra.mxu0 0.0
        %1417 = vmatprep.subr.mxu0 0.0
        %1418 = vmatpush2.msra.mxu0 0.0
        %1419 = vmatprep.subr.mxu0 0.0
        %1420 = vmatpush2.msra.mxu0 0.0
        %1421 = vmatprep.subr.mxu0 0.0
        %1422 = vmatpush2.msra.mxu0 0.0
        %1423 = vmatprep.subr.mxu0 0.0
        %1424 = vmatpush2.msra.mxu0 0.0
        %1425 = vmatprep.subr.mxu0 0.0
        %1426 = vmatpush2.msra.mxu0 0.0
        %1427 = vmatprep.subr.mxu0 0.0
        %1428 = vmatpush2.msra.mxu0 0.0
        %1429 = vmatprep.subr.mxu0 0.0
        %1430 = vmatpush2.msra.mxu0 0.0
        %1431 = vmatprep.subr.mxu0 0.0
        %1432 = vmatpush2.msra.mxu0 0.0
        %1433 = vmatprep.subr.mxu0 0.0
        %1434 = vmatpush2.msra.mxu0 0.0
        %1435 = vmatprep.subr.mxu0 0.0
        %1436 = vmatpush2.msra.mxu0 0.0
        %1437 = vmatprep.mubr.f32.mxu0 0.0
        %1438 = vmatmul.mubr.f32.gmra.mxu0 %v1310
        %v1439 = vpop.f32.mrf.mxu0
        %v1440 = vadd.f32 0.0, %v1439
        %v1441 = vpop.f32.mrf.mxu0
        %1442 = vmatprep.mubr.f32.mxu0 0.0
        %1443 = vmatmul.mubr.f32.gmra.mxu0 %v1312
        %v1444 = vpop.f32.mrf.mxu0
        %v1445 = vadd.f32 0.0, %v1444
        %v1446 = vpop.f32.mrf.mxu0
        %1447 = vmatprep.mubr.f32.mxu0 0.0
        %1448 = vmatmul.mubr.f32.gmra.mxu0 %v1314
        %v1449 = vpop.f32.mrf.mxu0
        %v1450 = vadd.f32 0.0, %v1449
        %v1451 = vpop.f32.mrf.mxu0
        %1452 = vmatprep.mubr.f32.mxu0 0.0
        %1453 = vmatmul.mubr.f32.gmra.mxu0 %v1316
        %v1454 = vpop.f32.mrf.mxu0
        %v1455 = vadd.f32 0.0, %v1454
        %v1456 = vpop.f32.mrf.mxu0
        %1457 = vmatprep.mubr.f32.mxu0 0.0
        %1458 = vmatmul.mubr.f32.gmra.mxu0 %v1318
        %v1459 = vpop.f32.mrf.mxu0
        %v1460 = vadd.f32 0.0, %v1459
        %v1461 = vpop.f32.mrf.mxu0
        %1462 = vmatprep.mubr.f32.mxu0 0.0
        %1463 = vmatmul.mubr.f32.gmra.mxu0 %v1320
        %v1464 = vpop.f32.mrf.mxu0
        %v1465 = vadd.f32 0.0, %v1464
        %v1466 = vpop.f32.mrf.mxu0
        %1467 = vmatprep.mubr.f32.mxu0 0.0
        %1468 = vmatmul.mubr.f32.gmra.mxu0 %v1322
        %v1469 = vpop.f32.mrf.mxu0
        %v1470 = vadd.f32 0.0, %v1469
        %v1471 = vpop.f32.mrf.mxu0
        %1472 = vmatprep.mubr.f32.mxu0 0.0
        %1473 = vmatmul.mubr.f32.gmra.mxu0 %v1324
        %v1474 = vpop.f32.mrf.mxu0
        %v1475 = vadd.f32 0.0, %v1474
        %v1476 = vpop.f32.mrf.mxu0
        %1477 = vmatprep.mubr.f32.mxu0 0.0
        %1478 = vmatmul.mubr.f32.gmra.mxu0 %v1326
        %v1479 = vpop.f32.mrf.mxu0
        %v1480 = vadd.f32 0.0, %v1479
        %v1481 = vpop.f32.mrf.mxu0
        %1482 = vmatprep.mubr.f32.mxu0 0.0
        %1483 = vmatmul.mubr.f32.gmra.mxu0 %v1328
        %v1484 = vpop.f32.mrf.mxu0
        %v1485 = vadd.f32 0.0, %v1484
        %v1486 = vpop.f32.mrf.mxu0
        %1487 = vmatprep.mubr.f32.mxu0 0.0
        %1488 = vmatmul.mubr.f32.gmra.mxu0 %v1330
        %v1489 = vpop.f32.mrf.mxu0
        %v1490 = vadd.f32 0.0, %v1489
        %v1491 = vpop.f32.mrf.mxu0
        %1492 = vmatprep.mubr.f32.mxu0 0.0
        %1493 = vmatmul.mubr.f32.gmra.mxu0 %v1332
        %v1494 = vpop.f32.mrf.mxu0
        %v1495 = vadd.f32 0.0, %v1494
        %v1496 = vpop.f32.mrf.mxu0
        %1497 = vmatprep.mubr.f32.mxu0 0.0
        %1498 = vmatmul.mubr.f32.gmra.mxu0 %v1334
        %v1499 = vpop.f32.mrf.mxu0
        %v1500 = vadd.f32 0.0, %v1499
        %v1501 = vpop.f32.mrf.mxu0
        %1502 = vmatprep.mubr.f32.mxu0 0.0
        %1503 = vmatmul.mubr.f32.gmra.mxu0 %v1336
        %v1504 = vpop.f32.mrf.mxu0
        %v1505 = vadd.f32 0.0, %v1504
        %v1506 = vpop.f32.mrf.mxu0
        %1507 = vmatprep.mubr.f32.mxu0 0.0
        %1508 = vmatmul.mubr.f32.gmra.mxu0 %v1338
        %v1509 = vpop.f32.mrf.mxu0
        %v1510 = vadd.f32 0.0, %v1509
        %v1511 = vpop.f32.mrf.mxu0
        %1512 = vmatprep.mubr.f32.mxu0 0.0
        %1513 = vmatmul.mubr.f32.gmra.mxu0 %v1340
        %v1514 = vpop.f32.mrf.mxu0
        %v1515 = vadd.f32 0.0, %v1514
        %v1516 = vpop.f32.mrf.mxu0
        %1517 = vdwg.mxu0
        %v1518 = vrcp.pop %v1342
        %v1519 = vrcp.pop %v1344
        %v1520 = vrcp.pop %v1346
        %v1521 = vrcp.pop %v1348
        %v1522 = vrcp.pop %v1350
        %v1523 = vrcp.pop %v1352
        %v1524 = vrcp.pop %v1354
        %v1525 = vrcp.pop %v1356
        %v1526 = vrcp.pop %v1358
        %v1527 = vrcp.pop %v1360
        %v1528 = vrcp.pop %v1362
        %v1529 = vrcp.pop %v1364
        %v1530 = vrcp.pop %v1366
        %v1531 = vrcp.pop %v1368
        %v1532 = vrcp.pop %v1370
        %v1533 = vrcp.pop %v1372
        %v1534 = vmul.f32 %v1440, %v1518
        %v1535 = vmul.f32 %v1445, %v1519
        %v1536 = vmul.f32 %v1450, %v1520
        %v1537 = vmul.f32 %v1455, %v1521
        %v1538 = vmul.f32 %v1460, %v1522
        %v1539 = vmul.f32 %v1465, %v1523
        %v1540 = vmul.f32 %v1470, %v1524
        %v1541 = vmul.f32 %v1475, %v1525
        %v1542 = vmul.f32 %v1480, %v1526
        %v1543 = vmul.f32 %v1485, %v1527
        %v1544 = vmul.f32 %v1490, %v1528
        %v1545 = vmul.f32 %v1495, %v1529
        %v1546 = vmul.f32 %v1500, %v1530
        %v1547 = vmul.f32 %v1505, %v1531
        %v1548 = vmul.f32 %v1510, %v1532
        %v1549 = vmul.f32 %v1515, %v1533
        %1550 = vst.msk [vmem:[#allocation4] sm:$0xff] %vm1019, %v1534
        %1551 = vst.msk [vmem:[#allocation4 + $0x8] sm:$0xff] %vm1019, %v1535
        %1552 = vst.msk [vmem:[#allocation4 + $0x10] sm:$0xff] %vm1019, %v1536
        %1553 = vst.msk [vmem:[#allocation4 + $0x18] sm:$0xff] %vm1019, %v1537
        %1554 = vst.msk [vmem:[#allocation4 + $0x20] sm:$0xff] %vm1019, %v1538
        %1555 = vst.msk [vmem:[#allocation4 + $0x28] sm:$0xff] %vm1019, %v1539
        %1556 = vst.msk [vmem:[#allocation4 + $0x30] sm:$0xff] %vm1019, %v1540
        %1557 = vst.msk [vmem:[#allocation4 + $0x38] sm:$0xff] %vm1019, %v1541
        %1558 = vst.msk [vmem:[#allocation4 + $0x40] sm:$0xff] %vm1019, %v1542
        %1559 = vst.msk [vmem:[#allocation4 + $0x48] sm:$0xff] %vm1019, %v1543
        %1560 = vst.msk [vmem:[#allocation4 + $0x50] sm:$0xff] %vm1019, %v1544
        %1561 = vst.msk [vmem:[#allocation4 + $0x58] sm:$0xff] %vm1019, %v1545
        %1562 = vst.msk [vmem:[#allocation4 + $0x60] sm:$0xff] %vm1019, %v1546
        %1563 = vst.msk [vmem:[#allocation4 + $0x68] sm:$0xff] %vm1019, %v1547
        %1564 = vst.msk [vmem:[#allocation4 + $0x70] sm:$0xff] %vm1019, %v1548
        %1565 = vst.msk [vmem:[#allocation4 + $0x78] sm:$0xff] %vm1019, %v1549
        %v1566 = vld [vmem:[#allocation2] sm:$0xff]
        %v1567 = vld [vmem:[#allocation2 + $0x8] sm:$0xff]
        %v1568 = vld [vmem:[#allocation2 + $0x10] sm:$0xff]
        %v1569 = vld [vmem:[#allocation2 + $0x18] sm:$0xff]
        %v1570 = vld [vmem:[#allocation2 + $0x20] sm:$0xff]
        %v1571 = vld [vmem:[#allocation2 + $0x28] sm:$0xff]
        %v1572 = vld [vmem:[#allocation2 + $0x30] sm:$0xff]
        %v1573 = vld [vmem:[#allocation2 + $0x38] sm:$0xff]
        %v1574 = vld [vmem:[#allocation2 + $0x40] sm:$0xff]
        %v1575 = vld [vmem:[#allocation2 + $0x48] sm:$0xff]
        %v1576 = vld [vmem:[#allocation2 + $0x50] sm:$0xff]
        %v1577 = vld [vmem:[#allocation2 + $0x58] sm:$0xff]
        %v1578 = vld [vmem:[#allocation2 + $0x60] sm:$0xff]
        %v1579 = vld [vmem:[#allocation2 + $0x68] sm:$0xff]
        %v1580 = vld [vmem:[#allocation2 + $0x70] sm:$0xff]
        %v1581 = vld [vmem:[#allocation2 + $0x78] sm:$0xff]
        %v1582 = vld [vmem:[#allocation3] sm:$0xff]
        %v1583 = vld [vmem:[#allocation3 + $0x8] sm:$0xff]
        %v1584 = vld [vmem:[#allocation3 + $0x10] sm:$0xff]
        %v1585 = vld [vmem:[#allocation3 + $0x18] sm:$0xff]
        %v1586 = vld [vmem:[#allocation3 + $0x20] sm:$0xff]
        %v1587 = vld [vmem:[#allocation3 + $0x28] sm:$0xff]
        %v1588 = vld [vmem:[#allocation3 + $0x30] sm:$0xff]
        %v1589 = vld [vmem:[#allocation3 + $0x38] sm:$0xff]
        %v1590 = vld [vmem:[#allocation3 + $0x40] sm:$0xff]
        %v1591 = vld [vmem:[#allocation3 + $0x48] sm:$0xff]
        %v1592 = vld [vmem:[#allocation3 + $0x50] sm:$0xff]
        %v1593 = vld [vmem:[#allocation3 + $0x58] sm:$0xff]
        %v1594 = vld [vmem:[#allocation3 + $0x60] sm:$0xff]
        %v1595 = vld [vmem:[#allocation3 + $0x68] sm:$0xff]
        %v1596 = vld [vmem:[#allocation3 + $0x70] sm:$0xff]
        %v1597 = vld [vmem:[#allocation3 + $0x78] sm:$0xff]
        %1598 = vrot.lane.b32.xlu0 %v971, 96
        %v1599 = vpop.permute.xlu0 %1598
        %1600 = vrot.lane.b32.xlu0 %v972, 96
        %v1601 = vpop.permute.xlu0 %1600
        %1602 = vrot.lane.b32.xlu0 %v973, 96
        %v1603 = vpop.permute.xlu0 %1602
        %1604 = vrot.lane.b32.xlu0 %v974, 96
        %v1605 = vpop.permute.xlu0 %1604
        %1606 = vrot.lane.b32.xlu0 %v975, 96
        %v1607 = vpop.permute.xlu0 %1606
        %1608 = vrot.lane.b32.xlu0 %v976, 96
        %v1609 = vpop.permute.xlu0 %1608
        %1610 = vrot.lane.b32.xlu0 %v977, 96
        %v1611 = vpop.permute.xlu0 %1610
        %1612 = vrot.lane.b32.xlu0 %v978, 96
        %v1613 = vpop.permute.xlu0 %1612
        %1614 = vrot.lane.b32.xlu0 %v979, 96
        %v1615 = vpop.permute.xlu0 %1614
        %1616 = vrot.lane.b32.xlu0 %v980, 96
        %v1617 = vpop.permute.xlu0 %1616
        %1618 = vrot.lane.b32.xlu0 %v981, 96
        %v1619 = vpop.permute.xlu0 %1618
        %1620 = vrot.lane.b32.xlu0 %v982, 96
        %v1621 = vpop.permute.xlu0 %1620
        %1622 = vrot.lane.b32.xlu0 %v983, 96
        %v1623 = vpop.permute.xlu0 %1622
        %1624 = vrot.lane.b32.xlu0 %v984, 96
        %v1625 = vpop.permute.xlu0 %1624
        %1626 = vrot.lane.b32.xlu0 %v985, 96
        %v1627 = vpop.permute.xlu0 %1626
        %1628 = vrot.lane.b32.xlu0 %v986, 96
        %v1629 = vpop.permute.xlu0 %1628
        %1646 = vrot.lane.b32.xlu0 %v1566, 96
        %v1647 = vpop.permute.xlu0 %1646
        %1648 = vrot.lane.b32.xlu0 %v1567, 96
        %v1649 = vpop.permute.xlu0 %1648
        %1650 = vrot.lane.b32.xlu0 %v1568, 96
        %v1651 = vpop.permute.xlu0 %1650
        %1652 = vrot.lane.b32.xlu0 %v1569, 96
        %v1653 = vpop.permute.xlu0 %1652
        %1654 = vrot.lane.b32.xlu0 %v1570, 96
        %v1655 = vpop.permute.xlu0 %1654
        %1656 = vrot.lane.b32.xlu0 %v1571, 96
        %v1657 = vpop.permute.xlu0 %1656
        %1658 = vrot.lane.b32.xlu0 %v1572, 96
        %v1659 = vpop.permute.xlu0 %1658
        %1660 = vrot.lane.b32.xlu0 %v1573, 96
        %v1661 = vpop.permute.xlu0 %1660
        %1662 = vrot.lane.b32.xlu0 %v1574, 96
        %v1663 = vpop.permute.xlu0 %1662
        %1664 = vrot.lane.b32.xlu0 %v1575, 96
        %v1665 = vpop.permute.xlu0 %1664
        %1666 = vrot.lane.b32.xlu0 %v1576, 96
        %v1667 = vpop.permute.xlu0 %1666
        %1668 = vrot.lane.b32.xlu0 %v1577, 96
        %v1669 = vpop.permute.xlu0 %1668
        %1670 = vrot.lane.b32.xlu0 %v1578, 96
        %v1671 = vpop.permute.xlu0 %1670
        %1672 = vrot.lane.b32.xlu0 %v1579, 96
        %v1673 = vpop.permute.xlu0 %1672
        %1674 = vrot.lane.b32.xlu0 %v1580, 96
        %v1675 = vpop.permute.xlu0 %1674
        %1676 = vrot.lane.b32.xlu0 %v1581, 96
        %v1677 = vpop.permute.xlu0 %1676
        %v1678 = vsel %vm1019, %v1599, 0
        %v1680 = vsel %vm1019, %v1601, 0
        %v1682 = vsel %vm1019, %v1603, 0
        %v1684 = vsel %vm1019, %v1605, 0
        %v1686 = vsel %vm1019, %v1607, 0
        %v1688 = vsel %vm1019, %v1609, 0
        %v1690 = vsel %vm1019, %v1611, 0
        %v1692 = vsel %vm1019, %v1613, 0
        %v1694 = vsel %vm1019, %v1615, 0
        %v1696 = vsel %vm1019, %v1617, 0
        %v1698 = vsel %vm1019, %v1619, 0
        %v1700 = vsel %vm1019, %v1621, 0
        %v1702 = vsel %vm1019, %v1623, 0
        %v1704 = vsel %vm1019, %v1625, 0
        %v1706 = vsel %vm1019, %v1627, 0
        %v1708 = vsel %vm1019, %v1629, 0
        %v1710 = vsel %vm1019, %v1647, 0
        %v1712 = vsel %vm1019, %v1649, 0
        %v1714 = vsel %vm1019, %v1651, 0
        %v1716 = vsel %vm1019, %v1653, 0
        %v1718 = vsel %vm1019, %v1655, 0
        %v1720 = vsel %vm1019, %v1657, 0
        %v1722 = vsel %vm1019, %v1659, 0
        %v1724 = vsel %vm1019, %v1661, 0
        %v1726 = vsel %vm1019, %v1663, 0
        %v1728 = vsel %vm1019, %v1665, 0
        %v1730 = vsel %vm1019, %v1667, 0
        %v1732 = vsel %vm1019, %v1669, 0
        %v1734 = vsel %vm1019, %v1671, 0
        %v1736 = vsel %vm1019, %v1673, 0
        %v1738 = vsel %vm1019, %v1675, 0
        %v1740 = vsel %vm1019, %v1677, 0
        %1742 = vmatprep.subr.mxu0 0.0
        %1743 = vmatpush1.xpose.msra.mxu0 %v1740
        %1744 = vmatprep.subr.mxu0 0.0
        %1745 = vmatpush1.xpose.msra.mxu0 %v1738
        %1746 = vmatprep.subr.mxu0 0.0
        %1747 = vmatpush1.xpose.msra.mxu0 %v1736
        %1748 = vmatprep.subr.mxu0 0.0
        %1749 = vmatpush1.xpose.msra.mxu0 %v1734
        %1750 = vmatprep.subr.mxu0 0.0
        %1751 = vmatpush1.xpose.msra.mxu0 %v1732
        %1752 = vmatprep.subr.mxu0 0.0
        %1753 = vmatpush1.xpose.msra.mxu0 %v1730
        %1754 = vmatprep.subr.mxu0 0.0
        %1755 = vmatpush1.xpose.msra.mxu0 %v1728
        %1756 = vmatprep.subr.mxu0 0.0
        %1757 = vmatpush1.xpose.msra.mxu0 %v1726
        %1758 = vmatprep.subr.mxu0 0.0
        %1759 = vmatpush1.xpose.msra.mxu0 %v1724
        %1760 = vmatprep.subr.mxu0 0.0
        %1761 = vmatpush1.xpose.msra.mxu0 %v1722
        %1762 = vmatprep.subr.mxu0 0.0
        %1763 = vmatpush1.xpose.msra.mxu0 %v1720
        %1764 = vmatprep.subr.mxu0 0.0
        %1765 = vmatpush1.xpose.msra.mxu0 %v1718
        %1766 = vmatprep.subr.mxu0 0.0
        %1767 = vmatpush1.xpose.msra.mxu0 %v1716
        %1768 = vmatprep.subr.mxu0 0.0
        %1769 = vmatpush1.xpose.msra.mxu0 %v1714
        %1770 = vmatprep.subr.mxu0 0.0
        %1771 = vmatpush1.xpose.msra.mxu0 %v1712
        %1772 = vmatprep.subr.mxu0 0.0
        %1773 = vmatpush1.xpose.msra.mxu0 %v1710
        %1774 = vmatprep.subr.mxu0 0.0
        %1775 = vmatpush2.xpose.msra.mxu0 0.0
        %1776 = vmatprep.subr.mxu0 0.0
        %1777 = vmatpush2.xpose.msra.mxu0 0.0
        %1778 = vmatprep.subr.mxu0 0.0
        %1779 = vmatpush2.xpose.msra.mxu0 0.0
        %1780 = vmatprep.subr.mxu0 0.0
        %1781 = vmatpush2.xpose.msra.mxu0 0.0
        %1782 = vmatprep.subr.mxu0 0.0
        %1783 = vmatpush2.xpose.msra.mxu0 0.0
        %1784 = vmatprep.subr.mxu0 0.0
        %1785 = vmatpush2.xpose.msra.mxu0 0.0
        %1786 = vmatprep.subr.mxu0 0.0
        %1787 = vmatpush2.xpose.msra.mxu0 0.0
        %1788 = vmatprep.subr.mxu0 0.0
        %1789 = vmatpush2.xpose.msra.mxu0 0.0
        %1790 = vmatprep.subr.mxu0 0.0
        %1791 = vmatpush2.xpose.msra.mxu0 0.0
        %1792 = vmatprep.subr.mxu0 0.0
        %1793 = vmatpush2.xpose.msra.mxu0 0.0
        %1794 = vmatprep.subr.mxu0 0.0
        %1795 = vmatpush2.xpose.msra.mxu0 0.0
        %1796 = vmatprep.subr.mxu0 0.0
        %1797 = vmatpush2.xpose.msra.mxu0 0.0
        %1798 = vmatprep.subr.mxu0 0.0
        %1799 = vmatpush2.xpose.msra.mxu0 0.0
        %1800 = vmatprep.subr.mxu0 0.0
        %1801 = vmatpush2.xpose.msra.mxu0 0.0
        %1802 = vmatprep.subr.mxu0 0.0
        %1803 = vmatpush2.xpose.msra.mxu0 0.0
        %1804 = vmatprep.subr.mxu0 0.0
        %1805 = vmatpush2.xpose.msra.mxu0 0.0
        %1806 = vmatprep.mubr.f32.mxu0 0.0
        %1807 = vmatmul.mubr.f32.gmra.mxu0 %v1678
        %v1808 = vpop.f32.mrf.mxu0
        %v1809 = vadd.f32 0.0, %v1808
        %v1810 = vpop.f32.mrf.mxu0
        %1811 = vmatprep.mubr.f32.mxu0 0.0
        %1812 = vmatmul.mubr.f32.gmra.mxu0 %v1680
        %v1813 = vpop.f32.mrf.mxu0
        %v1814 = vadd.f32 0.0, %v1813
        %v1815 = vpop.f32.mrf.mxu0
        %1816 = vmatprep.mubr.f32.mxu0 0.0
        %1817 = vmatmul.mubr.f32.gmra.mxu0 %v1682
        %v1818 = vpop.f32.mrf.mxu0
        %v1819 = vadd.f32 0.0, %v1818
        %v1820 = vpop.f32.mrf.mxu0
        %1821 = vmatprep.mubr.f32.mxu0 0.0
        %1822 = vmatmul.mubr.f32.gmra.mxu0 %v1684
        %v1823 = vpop.f32.mrf.mxu0
        %v1824 = vadd.f32 0.0, %v1823
        %v1825 = vpop.f32.mrf.mxu0
        %1826 = vmatprep.mubr.f32.mxu0 0.0
        %1827 = vmatmul.mubr.f32.gmra.mxu0 %v1686
        %v1828 = vpop.f32.mrf.mxu0
        %v1829 = vadd.f32 0.0, %v1828
        %v1830 = vpop.f32.mrf.mxu0
        %1831 = vmatprep.mubr.f32.mxu0 0.0
        %1832 = vmatmul.mubr.f32.gmra.mxu0 %v1688
        %v1833 = vpop.f32.mrf.mxu0
        %v1834 = vadd.f32 0.0, %v1833
        %v1835 = vpop.f32.mrf.mxu0
        %1836 = vmatprep.mubr.f32.mxu0 0.0
        %1837 = vmatmul.mubr.f32.gmra.mxu0 %v1690
        %v1838 = vpop.f32.mrf.mxu0
        %v1839 = vadd.f32 0.0, %v1838
        %v1840 = vpop.f32.mrf.mxu0
        %1841 = vmatprep.mubr.f32.mxu0 0.0
        %1842 = vmatmul.mubr.f32.gmra.mxu0 %v1692
        %v1843 = vpop.f32.mrf.mxu0
        %v1844 = vadd.f32 0.0, %v1843
        %v1845 = vpop.f32.mrf.mxu0
        %1846 = vmatprep.mubr.f32.mxu0 0.0
        %1847 = vmatmul.mubr.f32.gmra.mxu0 %v1694
        %v1848 = vpop.f32.mrf.mxu0
        %v1849 = vadd.f32 0.0, %v1848
        %v1850 = vpop.f32.mrf.mxu0
        %1851 = vmatprep.mubr.f32.mxu0 0.0
        %1852 = vmatmul.mubr.f32.gmra.mxu0 %v1696
        %v1853 = vpop.f32.mrf.mxu0
        %v1854 = vadd.f32 0.0, %v1853
        %v1855 = vpop.f32.mrf.mxu0
        %1856 = vmatprep.mubr.f32.mxu0 0.0
        %1857 = vmatmul.mubr.f32.gmra.mxu0 %v1698
        %v1858 = vpop.f32.mrf.mxu0
        %v1859 = vadd.f32 0.0, %v1858
        %v1860 = vpop.f32.mrf.mxu0
        %1861 = vmatprep.mubr.f32.mxu0 0.0
        %1862 = vmatmul.mubr.f32.gmra.mxu0 %v1700
        %v1863 = vpop.f32.mrf.mxu0
        %v1864 = vadd.f32 0.0, %v1863
        %v1865 = vpop.f32.mrf.mxu0
        %1866 = vmatprep.mubr.f32.mxu0 0.0
        %1867 = vmatmul.mubr.f32.gmra.mxu0 %v1702
        %v1868 = vpop.f32.mrf.mxu0
        %v1869 = vadd.f32 0.0, %v1868
        %v1870 = vpop.f32.mrf.mxu0
        %1871 = vmatprep.mubr.f32.mxu0 0.0
        %1872 = vmatmul.mubr.f32.gmra.mxu0 %v1704
        %v1873 = vpop.f32.mrf.mxu0
        %v1874 = vadd.f32 0.0, %v1873
        %v1875 = vpop.f32.mrf.mxu0
        %1876 = vmatprep.mubr.f32.mxu0 0.0
        %1877 = vmatmul.mubr.f32.gmra.mxu0 %v1706
        %v1878 = vpop.f32.mrf.mxu0
        %v1879 = vadd.f32 0.0, %v1878
        %v1880 = vpop.f32.mrf.mxu0
        %1881 = vmatprep.mubr.f32.mxu0 0.0
        %1882 = vmatmul.mubr.f32.gmra.mxu0 %v1708
        %v1883 = vpop.f32.mrf.mxu0
        %v1884 = vadd.f32 0.0, %v1883
        %v1885 = vpop.f32.mrf.mxu0
        %1886 = vdwg.mxu0
        %1887 = vmax.xlane.f32.xlu0 %v1809
        %v1888 = vpop.xlane.xlu0 %1887
        %1889 = vmax.xlane.f32.xlu0 %v1814
        %v1890 = vpop.xlane.xlu0 %1889
        %1891 = vmax.xlane.f32.xlu0 %v1819
        %v1892 = vpop.xlane.xlu0 %1891
        %1893 = vmax.xlane.f32.xlu0 %v1824
        %v1894 = vpop.xlane.xlu0 %1893
        %1895 = vmax.xlane.f32.xlu0 %v1829
        %v1896 = vpop.xlane.xlu0 %1895
        %1897 = vmax.xlane.f32.xlu0 %v1834
        %v1898 = vpop.xlane.xlu0 %1897
        %1899 = vmax.xlane.f32.xlu0 %v1839
        %v1900 = vpop.xlane.xlu0 %1899
        %1901 = vmax.xlane.f32.xlu0 %v1844
        %v1902 = vpop.xlane.xlu0 %1901
        %1903 = vmax.xlane.f32.xlu0 %v1849
        %v1904 = vpop.xlane.xlu0 %1903
        %1905 = vmax.xlane.f32.xlu0 %v1854
        %v1906 = vpop.xlane.xlu0 %1905
        %1907 = vmax.xlane.f32.xlu0 %v1859
        %v1908 = vpop.xlane.xlu0 %1907
        %1909 = vmax.xlane.f32.xlu0 %v1864
        %v1910 = vpop.xlane.xlu0 %1909
        %1911 = vmax.xlane.f32.xlu0 %v1869
        %v1912 = vpop.xlane.xlu0 %1911
        %1913 = vmax.xlane.f32.xlu0 %v1874
        %v1914 = vpop.xlane.xlu0 %1913
        %1915 = vmax.xlane.f32.xlu0 %v1879
        %v1916 = vpop.xlane.xlu0 %1915
        %1917 = vmax.xlane.f32.xlu0 %v1884
        %v1918 = vpop.xlane.xlu0 %1917
        %v1919 = vsub.f32 %v1809, %v1888
        %v1920 = vsub.f32 %v1814, %v1890
        %v1921 = vsub.f32 %v1819, %v1892
        %v1922 = vsub.f32 %v1824, %v1894
        %v1923 = vsub.f32 %v1829, %v1896
        %v1924 = vsub.f32 %v1834, %v1898
        %v1925 = vsub.f32 %v1839, %v1900
        %v1926 = vsub.f32 %v1844, %v1902
        %v1927 = vsub.f32 %v1849, %v1904
        %v1928 = vsub.f32 %v1854, %v1906
        %v1929 = vsub.f32 %v1859, %v1908
        %v1930 = vsub.f32 %v1864, %v1910
        %v1931 = vsub.f32 %v1869, %v1912
        %v1932 = vsub.f32 %v1874, %v1914
        %v1933 = vsub.f32 %v1879, %v1916
        %v1934 = vsub.f32 %v1884, %v1918
        %v1935 = vmul.f32 %v1919, 1.442695
        %v1936 = vpow.pop %v1935
        %v1937 = vmul.f32 %v1920, 1.442695
        %v1938 = vpow.pop %v1937
        %v1939 = vmul.f32 %v1921, 1.442695
        %v1940 = vpow.pop %v1939
        %v1941 = vmul.f32 %v1922, 1.442695
        %v1942 = vpow.pop %v1941
        %v1943 = vmul.f32 %v1923, 1.442695
        %v1944 = vpow.pop %v1943
        %v1945 = vmul.f32 %v1924, 1.442695
        %v1946 = vpow.pop %v1945
        %v1947 = vmul.f32 %v1925, 1.442695
        %v1948 = vpow.pop %v1947
        %v1949 = vmul.f32 %v1926, 1.442695
        %v1950 = vpow.pop %v1949
        %v1951 = vmul.f32 %v1927, 1.442695
        %v1952 = vpow.pop %v1951
        %v1953 = vmul.f32 %v1928, 1.442695
        %v1954 = vpow.pop %v1953
        %v1955 = vmul.f32 %v1929, 1.442695
        %v1956 = vpow.pop %v1955
        %v1957 = vmul.f32 %v1930, 1.442695
        %v1958 = vpow.pop %v1957
        %v1959 = vmul.f32 %v1931, 1.442695
        %v1960 = vpow.pop %v1959
        %v1961 = vmul.f32 %v1932, 1.442695
        %v1962 = vpow.pop %v1961
        %v1963 = vmul.f32 %v1933, 1.442695
        %v1964 = vpow.pop %v1963
        %v1965 = vmul.f32 %v1934, 1.442695
        %v1966 = vpow.pop %v1965
        %1967 = vadd.xlane.f32.xlu0 %v1936
        %v1968 = vpop.xlane.xlu0 %1967
        %1969 = vadd.xlane.f32.xlu0 %v1938
        %v1970 = vpop.xlane.xlu0 %1969
        %1971 = vadd.xlane.f32.xlu0 %v1940
        %v1972 = vpop.xlane.xlu0 %1971
        %1973 = vadd.xlane.f32.xlu0 %v1942
        %v1974 = vpop.xlane.xlu0 %1973
        %1975 = vadd.xlane.f32.xlu0 %v1944
        %v1976 = vpop.xlane.xlu0 %1975
        %1977 = vadd.xlane.f32.xlu0 %v1946
        %v1978 = vpop.xlane.xlu0 %1977
        %1979 = vadd.xlane.f32.xlu0 %v1948
        %v1980 = vpop.xlane.xlu0 %1979
        %1981 = vadd.xlane.f32.xlu0 %v1950
        %v1982 = vpop.xlane.xlu0 %1981
        %1983 = vadd.xlane.f32.xlu0 %v1952
        %v1984 = vpop.xlane.xlu0 %1983
        %1985 = vadd.xlane.f32.xlu0 %v1954
        %v1986 = vpop.xlane.xlu0 %1985
        %1987 = vadd.xlane.f32.xlu0 %v1956
        %v1988 = vpop.xlane.xlu0 %1987
        %1989 = vadd.xlane.f32.xlu0 %v1958
        %v1990 = vpop.xlane.xlu0 %1989
        %1991 = vadd.xlane.f32.xlu0 %v1960
        %v1992 = vpop.xlane.xlu0 %1991
        %1993 = vadd.xlane.f32.xlu0 %v1962
        %v1994 = vpop.xlane.xlu0 %1993
        %1995 = vadd.xlane.f32.xlu0 %v1964
        %v1996 = vpop.xlane.xlu0 %1995
        %1997 = vadd.xlane.f32.xlu0 %v1966
        %v1998 = vpop.xlane.xlu0 %1997
        %2015 = vrot.lane.b32.xlu0 %v1582, 96
        %v2016 = vpop.permute.xlu0 %2015
        %2017 = vrot.lane.b32.xlu0 %v1583, 96
        %v2018 = vpop.permute.xlu0 %2017
        %2019 = vrot.lane.b32.xlu0 %v1584, 96
        %v2020 = vpop.permute.xlu0 %2019
        %2021 = vrot.lane.b32.xlu0 %v1585, 96
        %v2022 = vpop.permute.xlu0 %2021
        %2023 = vrot.lane.b32.xlu0 %v1586, 96
        %v2024 = vpop.permute.xlu0 %2023
        %2025 = vrot.lane.b32.xlu0 %v1587, 96
        %v2026 = vpop.permute.xlu0 %2025
        %2027 = vrot.lane.b32.xlu0 %v1588, 96
        %v2028 = vpop.permute.xlu0 %2027
        %2029 = vrot.lane.b32.xlu0 %v1589, 96
        %v2030 = vpop.permute.xlu0 %2029
        %2031 = vrot.lane.b32.xlu0 %v1590, 96
        %v2032 = vpop.permute.xlu0 %2031
        %2033 = vrot.lane.b32.xlu0 %v1591, 96
        %v2034 = vpop.permute.xlu0 %2033
        %2035 = vrot.lane.b32.xlu0 %v1592, 96
        %v2036 = vpop.permute.xlu0 %2035
        %2037 = vrot.lane.b32.xlu0 %v1593, 96
        %v2038 = vpop.permute.xlu0 %2037
        %2039 = vrot.lane.b32.xlu0 %v1594, 96
        %v2040 = vpop.permute.xlu0 %2039
        %2041 = vrot.lane.b32.xlu0 %v1595, 96
        %v2042 = vpop.permute.xlu0 %2041
        %2043 = vrot.lane.b32.xlu0 %v1596, 96
        %v2044 = vpop.permute.xlu0 %2043
        %2045 = vrot.lane.b32.xlu0 %v1597, 96
        %v2046 = vpop.permute.xlu0 %2045
        %2063 = vmatprep.subr.mxu0 0.0
        %2064 = vmatpush1.msra.mxu0 %v2046
        %2065 = vmatprep.subr.mxu0 0.0
        %2066 = vmatpush1.msra.mxu0 %v2044
        %2067 = vmatprep.subr.mxu0 0.0
        %2068 = vmatpush1.msra.mxu0 %v2042
        %2069 = vmatprep.subr.mxu0 0.0
        %2070 = vmatpush1.msra.mxu0 %v2040
        %2071 = vmatprep.subr.mxu0 0.0
        %2072 = vmatpush1.msra.mxu0 %v2038
        %2073 = vmatprep.subr.mxu0 0.0
        %2074 = vmatpush1.msra.mxu0 %v2036
        %2075 = vmatprep.subr.mxu0 0.0
        %2076 = vmatpush1.msra.mxu0 %v2034
        %2077 = vmatprep.subr.mxu0 0.0
        %2078 = vmatpush1.msra.mxu0 %v2032
        %2079 = vmatprep.subr.mxu0 0.0
        %2080 = vmatpush1.msra.mxu0 %v2030
        %2081 = vmatprep.subr.mxu0 0.0
        %2082 = vmatpush1.msra.mxu0 %v2028
        %2083 = vmatprep.subr.mxu0 0.0
        %2084 = vmatpush1.msra.mxu0 %v2026
        %2085 = vmatprep.subr.mxu0 0.0
        %2086 = vmatpush1.msra.mxu0 %v2024
        %2087 = vmatprep.subr.mxu0 0.0
        %2088 = vmatpush1.msra.mxu0 %v2022
        %2089 = vmatprep.subr.mxu0 0.0
        %2090 = vmatpush1.msra.mxu0 %v2020
        %2091 = vmatprep.subr.mxu0 0.0
        %2092 = vmatpush1.msra.mxu0 %v2018
        %2093 = vmatprep.subr.mxu0 0.0
        %2094 = vmatpush1.msra.mxu0 %v2016
        %2095 = vmatprep.subr.mxu0 0.0
        %2096 = vmatpush2.msra.mxu0 0.0
        %2097 = vmatprep.subr.mxu0 0.0
        %2098 = vmatpush2.msra.mxu0 0.0
        %2099 = vmatprep.subr.mxu0 0.0
        %2100 = vmatpush2.msra.mxu0 0.0
        %2101 = vmatprep.subr.mxu0 0.0
        %2102 = vmatpush2.msra.mxu0 0.0
        %2103 = vmatprep.subr.mxu0 0.0
        %2104 = vmatpush2.msra.mxu0 0.0
        %2105 = vmatprep.subr.mxu0 0.0
        %2106 = vmatpush2.msra.mxu0 0.0
        %2107 = vmatprep.subr.mxu0 0.0
        %2108 = vmatpush2.msra.mxu0 0.0
        %2109 = vmatprep.subr.mxu0 0.0
        %2110 = vmatpush2.msra.mxu0 0.0
        %2111 = vmatprep.subr.mxu0 0.0
        %2112 = vmatpush2.msra.mxu0 0.0
        %2113 = vmatprep.subr.mxu0 0.0
        %2114 = vmatpush2.msra.mxu0 0.0
        %2115 = vmatprep.subr.mxu0 0.0
        %2116 = vmatpush2.msra.mxu0 0.0
        %2117 = vmatprep.subr.mxu0 0.0
        %2118 = vmatpush2.msra.mxu0 0.0
        %2119 = vmatprep.subr.mxu0 0.0
        %2120 = vmatpush2.msra.mxu0 0.0
        %2121 = vmatprep.subr.mxu0 0.0
        %2122 = vmatpush2.msra.mxu0 0.0
        %2123 = vmatprep.subr.mxu0 0.0
        %2124 = vmatpush2.msra.mxu0 0.0
        %2125 = vmatprep.subr.mxu0 0.0
        %2126 = vmatpush2.msra.mxu0 0.0
        %2127 = vmatprep.mubr.f32.mxu0 0.0
        %2128 = vmatmul.mubr.f32.gmra.mxu0 %v1936
        %v2129 = vpop.f32.mrf.mxu0
        %v2130 = vadd.f32 0.0, %v2129
        %v2131 = vpop.f32.mrf.mxu0
        %2132 = vmatprep.mubr.f32.mxu0 0.0
        %2133 = vmatmul.mubr.f32.gmra.mxu0 %v1938
        %v2134 = vpop.f32.mrf.mxu0
        %v2135 = vadd.f32 0.0, %v2134
        %v2136 = vpop.f32.mrf.mxu0
        %2137 = vmatprep.mubr.f32.mxu0 0.0
        %2138 = vmatmul.mubr.f32.gmra.mxu0 %v1940
        %v2139 = vpop.f32.mrf.mxu0
        %v2140 = vadd.f32 0.0, %v2139
        %v2141 = vpop.f32.mrf.mxu0
        %2142 = vmatprep.mubr.f32.mxu0 0.0
        %2143 = vmatmul.mubr.f32.gmra.mxu0 %v1942
        %v2144 = vpop.f32.mrf.mxu0
        %v2145 = vadd.f32 0.0, %v2144
        %v2146 = vpop.f32.mrf.mxu0
        %2147 = vmatprep.mubr.f32.mxu0 0.0
        %2148 = vmatmul.mubr.f32.gmra.mxu0 %v1944
        %v2149 = vpop.f32.mrf.mxu0
        %v2150 = vadd.f32 0.0, %v2149
        %v2151 = vpop.f32.mrf.mxu0
        %2152 = vmatprep.mubr.f32.mxu0 0.0
        %2153 = vmatmul.mubr.f32.gmra.mxu0 %v1946
        %v2154 = vpop.f32.mrf.mxu0
        %v2155 = vadd.f32 0.0, %v2154
        %v2156 = vpop.f32.mrf.mxu0
        %2157 = vmatprep.mubr.f32.mxu0 0.0
        %2158 = vmatmul.mubr.f32.gmra.mxu0 %v1948
        %v2159 = vpop.f32.mrf.mxu0
        %v2160 = vadd.f32 0.0, %v2159
        %v2161 = vpop.f32.mrf.mxu0
        %2162 = vmatprep.mubr.f32.mxu0 0.0
        %2163 = vmatmul.mubr.f32.gmra.mxu0 %v1950
        %v2164 = vpop.f32.mrf.mxu0
        %v2165 = vadd.f32 0.0, %v2164
        %v2166 = vpop.f32.mrf.mxu0
        %2167 = vmatprep.mubr.f32.mxu0 0.0
        %2168 = vmatmul.mubr.f32.gmra.mxu0 %v1952
        %v2169 = vpop.f32.mrf.mxu0
        %v2170 = vadd.f32 0.0, %v2169
        %v2171 = vpop.f32.mrf.mxu0
        %2172 = vmatprep.mubr.f32.mxu0 0.0
        %2173 = vmatmul.mubr.f32.gmra.mxu0 %v1954
        %v2174 = vpop.f32.mrf.mxu0
        %v2175 = vadd.f32 0.0, %v2174
        %v2176 = vpop.f32.mrf.mxu0
        %2177 = vmatprep.mubr.f32.mxu0 0.0
        %2178 = vmatmul.mubr.f32.gmra.mxu0 %v1956
        %v2179 = vpop.f32.mrf.mxu0
        %v2180 = vadd.f32 0.0, %v2179
        %v2181 = vpop.f32.mrf.mxu0
        %2182 = vmatprep.mubr.f32.mxu0 0.0
        %2183 = vmatmul.mubr.f32.gmra.mxu0 %v1958
        %v2184 = vpop.f32.mrf.mxu0
        %v2185 = vadd.f32 0.0, %v2184
        %v2186 = vpop.f32.mrf.mxu0
        %2187 = vmatprep.mubr.f32.mxu0 0.0
        %2188 = vmatmul.mubr.f32.gmra.mxu0 %v1960
        %v2189 = vpop.f32.mrf.mxu0
        %v2190 = vadd.f32 0.0, %v2189
        %v2191 = vpop.f32.mrf.mxu0
        %2192 = vmatprep.mubr.f32.mxu0 0.0
        %2193 = vmatmul.mubr.f32.gmra.mxu0 %v1962
        %v2194 = vpop.f32.mrf.mxu0
        %v2195 = vadd.f32 0.0, %v2194
        %v2196 = vpop.f32.mrf.mxu0
        %2197 = vmatprep.mubr.f32.mxu0 0.0
        %2198 = vmatmul.mubr.f32.gmra.mxu0 %v1964
        %v2199 = vpop.f32.mrf.mxu0
        %v2200 = vadd.f32 0.0, %v2199
        %v2201 = vpop.f32.mrf.mxu0
        %2202 = vmatprep.mubr.f32.mxu0 0.0
        %2203 = vmatmul.mubr.f32.gmra.mxu0 %v1966
        %v2204 = vpop.f32.mrf.mxu0
        %v2205 = vadd.f32 0.0, %v2204
        %v2206 = vpop.f32.mrf.mxu0
        %2207 = vdwg.mxu0
        %v2208 = vrcp.pop %v1968
        %v2209 = vrcp.pop %v1970
        %v2210 = vrcp.pop %v1972
        %v2211 = vrcp.pop %v1974
        %v2212 = vrcp.pop %v1976
        %v2213 = vrcp.pop %v1978
        %v2214 = vrcp.pop %v1980
        %v2215 = vrcp.pop %v1982
        %v2216 = vrcp.pop %v1984
        %v2217 = vrcp.pop %v1986
        %v2218 = vrcp.pop %v1988
        %v2219 = vrcp.pop %v1990
        %v2220 = vrcp.pop %v1992
        %v2221 = vrcp.pop %v1994
        %v2222 = vrcp.pop %v1996
        %v2223 = vrcp.pop %v1998
        %v2224 = vmul.f32 %v2130, %v2208
        %v2225 = vmul.f32 %v2135, %v2209
        %v2226 = vmul.f32 %v2140, %v2210
        %v2227 = vmul.f32 %v2145, %v2211
        %v2228 = vmul.f32 %v2150, %v2212
        %v2229 = vmul.f32 %v2155, %v2213
        %v2230 = vmul.f32 %v2160, %v2214
        %v2231 = vmul.f32 %v2165, %v2215
        %v2232 = vmul.f32 %v2170, %v2216
        %v2233 = vmul.f32 %v2175, %v2217
        %v2234 = vmul.f32 %v2180, %v2218
        %v2235 = vmul.f32 %v2185, %v2219
        %v2236 = vmul.f32 %v2190, %v2220
        %v2237 = vmul.f32 %v2195, %v2221
        %v2238 = vmul.f32 %v2200, %v2222
        %v2239 = vmul.f32 %v2205, %v2223
        %2256 = vrot.lane.b32.xlu0 %v2224, 32
        %v2257 = vpop.permute.xlu0 %2256
        %2258 = vrot.lane.b32.xlu0 %v2225, 32
        %v2259 = vpop.permute.xlu0 %2258
        %2260 = vrot.lane.b32.xlu0 %v2226, 32
        %v2261 = vpop.permute.xlu0 %2260
        %2262 = vrot.lane.b32.xlu0 %v2227, 32
        %v2263 = vpop.permute.xlu0 %2262
        %2264 = vrot.lane.b32.xlu0 %v2228, 32
        %v2265 = vpop.permute.xlu0 %2264
        %2266 = vrot.lane.b32.xlu0 %v2229, 32
        %v2267 = vpop.permute.xlu0 %2266
        %2268 = vrot.lane.b32.xlu0 %v2230, 32
        %v2269 = vpop.permute.xlu0 %2268
        %2270 = vrot.lane.b32.xlu0 %v2231, 32
        %v2271 = vpop.permute.xlu0 %2270
        %2272 = vrot.lane.b32.xlu0 %v2232, 32
        %v2273 = vpop.permute.xlu0 %2272
        %2274 = vrot.lane.b32.xlu0 %v2233, 32
        %v2275 = vpop.permute.xlu0 %2274
        %2276 = vrot.lane.b32.xlu0 %v2234, 32
        %v2277 = vpop.permute.xlu0 %2276
        %2278 = vrot.lane.b32.xlu0 %v2235, 32
        %v2279 = vpop.permute.xlu0 %2278
        %2280 = vrot.lane.b32.xlu0 %v2236, 32
        %v2281 = vpop.permute.xlu0 %2280
        %2282 = vrot.lane.b32.xlu0 %v2237, 32
        %v2283 = vpop.permute.xlu0 %2282
        %2284 = vrot.lane.b32.xlu0 %v2238, 32
        %v2285 = vpop.permute.xlu0 %2284
        %2286 = vrot.lane.b32.xlu0 %v2239, 32
        %v2287 = vpop.permute.xlu0 %2286
        %vm2304 = vcmask 523520
        %2305 = vst.msk [vmem:[#allocation4] sm:$0xff] %vm2304, %v2257
        %2306 = vst.msk [vmem:[#allocation4 + $0x8] sm:$0xff] %vm2304, %v2259
        %2307 = vst.msk [vmem:[#allocation4 + $0x10] sm:$0xff] %vm2304, %v2261
        %2308 = vst.msk [vmem:[#allocation4 + $0x18] sm:$0xff] %vm2304, %v2263
        %2309 = vst.msk [vmem:[#allocation4 + $0x20] sm:$0xff] %vm2304, %v2265
        %2310 = vst.msk [vmem:[#allocation4 + $0x28] sm:$0xff] %vm2304, %v2267
        %2311 = vst.msk [vmem:[#allocation4 + $0x30] sm:$0xff] %vm2304, %v2269
        %2312 = vst.msk [vmem:[#allocation4 + $0x38] sm:$0xff] %vm2304, %v2271
        %2313 = vst.msk [vmem:[#allocation4 + $0x40] sm:$0xff] %vm2304, %v2273
        %2314 = vst.msk [vmem:[#allocation4 + $0x48] sm:$0xff] %vm2304, %v2275
        %2315 = vst.msk [vmem:[#allocation4 + $0x50] sm:$0xff] %vm2304, %v2277
        %2316 = vst.msk [vmem:[#allocation4 + $0x58] sm:$0xff] %vm2304, %v2279
        %2317 = vst.msk [vmem:[#allocation4 + $0x60] sm:$0xff] %vm2304, %v2281
        %2318 = vst.msk [vmem:[#allocation4 + $0x68] sm:$0xff] %vm2304, %v2283
        %2319 = vst.msk [vmem:[#allocation4 + $0x70] sm:$0xff] %vm2304, %v2285
        %2320 = vst.msk [vmem:[#allocation4 + $0x78] sm:$0xff] %vm2304, %v2287
        %v2321 = vld [vmem:[#allocation2] sm:$0xff]
        %v2322 = vld [vmem:[#allocation2 + $0x8] sm:$0xff]
        %v2323 = vld [vmem:[#allocation2 + $0x10] sm:$0xff]
        %v2324 = vld [vmem:[#allocation2 + $0x18] sm:$0xff]
        %v2325 = vld [vmem:[#allocation2 + $0x20] sm:$0xff]
        %v2326 = vld [vmem:[#allocation2 + $0x28] sm:$0xff]
        %v2327 = vld [vmem:[#allocation2 + $0x30] sm:$0xff]
        %v2328 = vld [vmem:[#allocation2 + $0x38] sm:$0xff]
        %v2329 = vld [vmem:[#allocation2 + $0x40] sm:$0xff]
        %v2330 = vld [vmem:[#allocation2 + $0x48] sm:$0xff]
        %v2331 = vld [vmem:[#allocation2 + $0x50] sm:$0xff]
        %v2332 = vld [vmem:[#allocation2 + $0x58] sm:$0xff]
        %v2333 = vld [vmem:[#allocation2 + $0x60] sm:$0xff]
        %v2334 = vld [vmem:[#allocation2 + $0x68] sm:$0xff]
        %v2335 = vld [vmem:[#allocation2 + $0x70] sm:$0xff]
        %v2336 = vld [vmem:[#allocation2 + $0x78] sm:$0xff]
        %v2337 = vld [vmem:[#allocation3] sm:$0xff]
        %v2338 = vld [vmem:[#allocation3 + $0x8] sm:$0xff]
        %v2339 = vld [vmem:[#allocation3 + $0x10] sm:$0xff]
        %v2340 = vld [vmem:[#allocation3 + $0x18] sm:$0xff]
        %v2341 = vld [vmem:[#allocation3 + $0x20] sm:$0xff]
        %v2342 = vld [vmem:[#allocation3 + $0x28] sm:$0xff]
        %v2343 = vld [vmem:[#allocation3 + $0x30] sm:$0xff]
        %v2344 = vld [vmem:[#allocation3 + $0x38] sm:$0xff]
        %v2345 = vld [vmem:[#allocation3 + $0x40] sm:$0xff]
        %v2346 = vld [vmem:[#allocation3 + $0x48] sm:$0xff]
        %v2347 = vld [vmem:[#allocation3 + $0x50] sm:$0xff]
        %v2348 = vld [vmem:[#allocation3 + $0x58] sm:$0xff]
        %v2349 = vld [vmem:[#allocation3 + $0x60] sm:$0xff]
        %v2350 = vld [vmem:[#allocation3 + $0x68] sm:$0xff]
        %v2351 = vld [vmem:[#allocation3 + $0x70] sm:$0xff]
        %v2352 = vld [vmem:[#allocation3 + $0x78] sm:$0xff]
        %2353 = vrot.lane.b32.xlu0 %v971, 64
        %v2354 = vpop.permute.xlu0 %2353
        %2355 = vrot.lane.b32.xlu0 %v972, 64
        %v2356 = vpop.permute.xlu0 %2355
        %2357 = vrot.lane.b32.xlu0 %v973, 64
        %v2358 = vpop.permute.xlu0 %2357
        %2359 = vrot.lane.b32.xlu0 %v974, 64
        %v2360 = vpop.permute.xlu0 %2359
        %2361 = vrot.lane.b32.xlu0 %v975, 64
        %v2362 = vpop.permute.xlu0 %2361
        %2363 = vrot.lane.b32.xlu0 %v976, 64
        %v2364 = vpop.permute.xlu0 %2363
        %2365 = vrot.lane.b32.xlu0 %v977, 64
        %v2366 = vpop.permute.xlu0 %2365
        %2367 = vrot.lane.b32.xlu0 %v978, 64
        %v2368 = vpop.permute.xlu0 %2367
        %2369 = vrot.lane.b32.xlu0 %v979, 64
        %v2370 = vpop.permute.xlu0 %2369
        %2371 = vrot.lane.b32.xlu0 %v980, 64
        %v2372 = vpop.permute.xlu0 %2371
        %2373 = vrot.lane.b32.xlu0 %v981, 64
        %v2374 = vpop.permute.xlu0 %2373
        %2375 = vrot.lane.b32.xlu0 %v982, 64
        %v2376 = vpop.permute.xlu0 %2375
        %2377 = vrot.lane.b32.xlu0 %v983, 64
        %v2378 = vpop.permute.xlu0 %2377
        %2379 = vrot.lane.b32.xlu0 %v984, 64
        %v2380 = vpop.permute.xlu0 %2379
        %2381 = vrot.lane.b32.xlu0 %v985, 64
        %v2382 = vpop.permute.xlu0 %2381
        %2383 = vrot.lane.b32.xlu0 %v986, 64
        %v2384 = vpop.permute.xlu0 %2383
        %2401 = vrot.lane.b32.xlu0 %v2321, 64
        %v2402 = vpop.permute.xlu0 %2401
        %2403 = vrot.lane.b32.xlu0 %v2322, 64
        %v2404 = vpop.permute.xlu0 %2403
        %2405 = vrot.lane.b32.xlu0 %v2323, 64
        %v2406 = vpop.permute.xlu0 %2405
        %2407 = vrot.lane.b32.xlu0 %v2324, 64
        %v2408 = vpop.permute.xlu0 %2407
        %2409 = vrot.lane.b32.xlu0 %v2325, 64
        %v2410 = vpop.permute.xlu0 %2409
        %2411 = vrot.lane.b32.xlu0 %v2326, 64
        %v2412 = vpop.permute.xlu0 %2411
        %2413 = vrot.lane.b32.xlu0 %v2327, 64
        %v2414 = vpop.permute.xlu0 %2413
        %2415 = vrot.lane.b32.xlu0 %v2328, 64
        %v2416 = vpop.permute.xlu0 %2415
        %2417 = vrot.lane.b32.xlu0 %v2329, 64
        %v2418 = vpop.permute.xlu0 %2417
        %2419 = vrot.lane.b32.xlu0 %v2330, 64
        %v2420 = vpop.permute.xlu0 %2419
        %2421 = vrot.lane.b32.xlu0 %v2331, 64
        %v2422 = vpop.permute.xlu0 %2421
        %2423 = vrot.lane.b32.xlu0 %v2332, 64
        %v2424 = vpop.permute.xlu0 %2423
        %2425 = vrot.lane.b32.xlu0 %v2333, 64
        %v2426 = vpop.permute.xlu0 %2425
        %2427 = vrot.lane.b32.xlu0 %v2334, 64
        %v2428 = vpop.permute.xlu0 %2427
        %2429 = vrot.lane.b32.xlu0 %v2335, 64
        %v2430 = vpop.permute.xlu0 %2429
        %2431 = vrot.lane.b32.xlu0 %v2336, 64
        %v2432 = vpop.permute.xlu0 %2431
        %v2433 = vsel %vm1019, %v2354, 0
        %v2435 = vsel %vm1019, %v2356, 0
        %v2437 = vsel %vm1019, %v2358, 0
        %v2439 = vsel %vm1019, %v2360, 0
        %v2441 = vsel %vm1019, %v2362, 0
        %v2443 = vsel %vm1019, %v2364, 0
        %v2445 = vsel %vm1019, %v2366, 0
        %v2447 = vsel %vm1019, %v2368, 0
        %v2449 = vsel %vm1019, %v2370, 0
        %v2451 = vsel %vm1019, %v2372, 0
        %v2453 = vsel %vm1019, %v2374, 0
        %v2455 = vsel %vm1019, %v2376, 0
        %v2457 = vsel %vm1019, %v2378, 0
        %v2459 = vsel %vm1019, %v2380, 0
        %v2461 = vsel %vm1019, %v2382, 0
        %v2463 = vsel %vm1019, %v2384, 0
        %v2465 = vsel %vm1019, %v2402, 0
        %v2467 = vsel %vm1019, %v2404, 0
        %v2469 = vsel %vm1019, %v2406, 0
        %v2471 = vsel %vm1019, %v2408, 0
        %v2473 = vsel %vm1019, %v2410, 0
        %v2475 = vsel %vm1019, %v2412, 0
        %v2477 = vsel %vm1019, %v2414, 0
        %v2479 = vsel %vm1019, %v2416, 0
        %v2481 = vsel %vm1019, %v2418, 0
        %v2483 = vsel %vm1019, %v2420, 0
        %v2485 = vsel %vm1019, %v2422, 0
        %v2487 = vsel %vm1019, %v2424, 0
        %v2489 = vsel %vm1019, %v2426, 0
        %v2491 = vsel %vm1019, %v2428, 0
        %v2493 = vsel %vm1019, %v2430, 0
        %v2495 = vsel %vm1019, %v2432, 0
        %2497 = vmatprep.subr.mxu0 0.0
        %2498 = vmatpush1.xpose.msra.mxu0 %v2495
        %2499 = vmatprep.subr.mxu0 0.0
        %2500 = vmatpush1.xpose.msra.mxu0 %v2493
        %2501 = vmatprep.subr.mxu0 0.0
        %2502 = vmatpush1.xpose.msra.mxu0 %v2491
        %2503 = vmatprep.subr.mxu0 0.0
        %2504 = vmatpush1.xpose.msra.mxu0 %v2489
        %2505 = vmatprep.subr.mxu0 0.0
        %2506 = vmatpush1.xpose.msra.mxu0 %v2487
        %2507 = vmatprep.subr.mxu0 0.0
        %2508 = vmatpush1.xpose.msra.mxu0 %v2485
        %2509 = vmatprep.subr.mxu0 0.0
        %2510 = vmatpush1.xpose.msra.mxu0 %v2483
        %2511 = vmatprep.subr.mxu0 0.0
        %2512 = vmatpush1.xpose.msra.mxu0 %v2481
        %2513 = vmatprep.subr.mxu0 0.0
        %2514 = vmatpush1.xpose.msra.mxu0 %v2479
        %2515 = vmatprep.subr.mxu0 0.0
        %2516 = vmatpush1.xpose.msra.mxu0 %v2477
        %2517 = vmatprep.subr.mxu0 0.0
        %2518 = vmatpush1.xpose.msra.mxu0 %v2475
        %2519 = vmatprep.subr.mxu0 0.0
        %2520 = vmatpush1.xpose.msra.mxu0 %v2473
        %2521 = vmatprep.subr.mxu0 0.0
        %2522 = vmatpush1.xpose.msra.mxu0 %v2471
        %2523 = vmatprep.subr.mxu0 0.0
        %2524 = vmatpush1.xpose.msra.mxu0 %v2469
        %2525 = vmatprep.subr.mxu0 0.0
        %2526 = vmatpush1.xpose.msra.mxu0 %v2467
        %2527 = vmatprep.subr.mxu0 0.0
        %2528 = vmatpush1.xpose.msra.mxu0 %v2465
        %2529 = vmatprep.subr.mxu0 0.0
        %2530 = vmatpush2.xpose.msra.mxu0 0.0
        %2531 = vmatprep.subr.mxu0 0.0
        %2532 = vmatpush2.xpose.msra.mxu0 0.0
        %2533 = vmatprep.subr.mxu0 0.0
        %2534 = vmatpush2.xpose.msra.mxu0 0.0
        %2535 = vmatprep.subr.mxu0 0.0
        %2536 = vmatpush2.xpose.msra.mxu0 0.0
        %2537 = vmatprep.subr.mxu0 0.0
        %2538 = vmatpush2.xpose.msra.mxu0 0.0
        %2539 = vmatprep.subr.mxu0 0.0
        %2540 = vmatpush2.xpose.msra.mxu0 0.0
        %2541 = vmatprep.subr.mxu0 0.0
        %2542 = vmatpush2.xpose.msra.mxu0 0.0
        %2543 = vmatprep.subr.mxu0 0.0
        %2544 = vmatpush2.xpose.msra.mxu0 0.0
        %2545 = vmatprep.subr.mxu0 0.0
        %2546 = vmatpush2.xpose.msra.mxu0 0.0
        %2547 = vmatprep.subr.mxu0 0.0
        %2548 = vmatpush2.xpose.msra.mxu0 0.0
        %2549 = vmatprep.subr.mxu0 0.0
        %2550 = vmatpush2.xpose.msra.mxu0 0.0
        %2551 = vmatprep.subr.mxu0 0.0
        %2552 = vmatpush2.xpose.msra.mxu0 0.0
        %2553 = vmatprep.subr.mxu0 0.0
        %2554 = vmatpush2.xpose.msra.mxu0 0.0
        %2555 = vmatprep.subr.mxu0 0.0
        %2556 = vmatpush2.xpose.msra.mxu0 0.0
        %2557 = vmatprep.subr.mxu0 0.0
        %2558 = vmatpush2.xpose.msra.mxu0 0.0
        %2559 = vmatprep.subr.mxu0 0.0
        %2560 = vmatpush2.xpose.msra.mxu0 0.0
        %2561 = vmatprep.mubr.f32.mxu0 0.0
        %2562 = vmatmul.mubr.f32.gmra.mxu0 %v2433
        %v2563 = vpop.f32.mrf.mxu0
        %v2564 = vadd.f32 0.0, %v2563
        %v2565 = vpop.f32.mrf.mxu0
        %2566 = vmatprep.mubr.f32.mxu0 0.0
        %2567 = vmatmul.mubr.f32.gmra.mxu0 %v2435
        %v2568 = vpop.f32.mrf.mxu0
        %v2569 = vadd.f32 0.0, %v2568
        %v2570 = vpop.f32.mrf.mxu0
        %2571 = vmatprep.mubr.f32.mxu0 0.0
        %2572 = vmatmul.mubr.f32.gmra.mxu0 %v2437
        %v2573 = vpop.f32.mrf.mxu0
        %v2574 = vadd.f32 0.0, %v2573
        %v2575 = vpop.f32.mrf.mxu0
        %2576 = vmatprep.mubr.f32.mxu0 0.0
        %2577 = vmatmul.mubr.f32.gmra.mxu0 %v2439
        %v2578 = vpop.f32.mrf.mxu0
        %v2579 = vadd.f32 0.0, %v2578
        %v2580 = vpop.f32.mrf.mxu0
        %2581 = vmatprep.mubr.f32.mxu0 0.0
        %2582 = vmatmul.mubr.f32.gmra.mxu0 %v2441
        %v2583 = vpop.f32.mrf.mxu0
        %v2584 = vadd.f32 0.0, %v2583
        %v2585 = vpop.f32.mrf.mxu0
        %2586 = vmatprep.mubr.f32.mxu0 0.0
        %2587 = vmatmul.mubr.f32.gmra.mxu0 %v2443
        %v2588 = vpop.f32.mrf.mxu0
        %v2589 = vadd.f32 0.0, %v2588
        %v2590 = vpop.f32.mrf.mxu0
        %2591 = vmatprep.mubr.f32.mxu0 0.0
        %2592 = vmatmul.mubr.f32.gmra.mxu0 %v2445
        %v2593 = vpop.f32.mrf.mxu0
        %v2594 = vadd.f32 0.0, %v2593
        %v2595 = vpop.f32.mrf.mxu0
        %2596 = vmatprep.mubr.f32.mxu0 0.0
        %2597 = vmatmul.mubr.f32.gmra.mxu0 %v2447
        %v2598 = vpop.f32.mrf.mxu0
        %v2599 = vadd.f32 0.0, %v2598
        %v2600 = vpop.f32.mrf.mxu0
        %2601 = vmatprep.mubr.f32.mxu0 0.0
        %2602 = vmatmul.mubr.f32.gmra.mxu0 %v2449
        %v2603 = vpop.f32.mrf.mxu0
        %v2604 = vadd.f32 0.0, %v2603
        %v2605 = vpop.f32.mrf.mxu0
        %2606 = vmatprep.mubr.f32.mxu0 0.0
        %2607 = vmatmul.mubr.f32.gmra.mxu0 %v2451
        %v2608 = vpop.f32.mrf.mxu0
        %v2609 = vadd.f32 0.0, %v2608
        %v2610 = vpop.f32.mrf.mxu0
        %2611 = vmatprep.mubr.f32.mxu0 0.0
        %2612 = vmatmul.mubr.f32.gmra.mxu0 %v2453
        %v2613 = vpop.f32.mrf.mxu0
        %v2614 = vadd.f32 0.0, %v2613
        %v2615 = vpop.f32.mrf.mxu0
        %2616 = vmatprep.mubr.f32.mxu0 0.0
        %2617 = vmatmul.mubr.f32.gmra.mxu0 %v2455
        %v2618 = vpop.f32.mrf.mxu0
        %v2619 = vadd.f32 0.0, %v2618
        %v2620 = vpop.f32.mrf.mxu0
        %2621 = vmatprep.mubr.f32.mxu0 0.0
        %2622 = vmatmul.mubr.f32.gmra.mxu0 %v2457
        %v2623 = vpop.f32.mrf.mxu0
        %v2624 = vadd.f32 0.0, %v2623
        %v2625 = vpop.f32.mrf.mxu0
        %2626 = vmatprep.mubr.f32.mxu0 0.0
        %2627 = vmatmul.mubr.f32.gmra.mxu0 %v2459
        %v2628 = vpop.f32.mrf.mxu0
        %v2629 = vadd.f32 0.0, %v2628
        %v2630 = vpop.f32.mrf.mxu0
        %2631 = vmatprep.mubr.f32.mxu0 0.0
        %2632 = vmatmul.mubr.f32.gmra.mxu0 %v2461
        %v2633 = vpop.f32.mrf.mxu0
        %v2634 = vadd.f32 0.0, %v2633
        %v2635 = vpop.f32.mrf.mxu0
        %2636 = vmatprep.mubr.f32.mxu0 0.0
        %2637 = vmatmul.mubr.f32.gmra.mxu0 %v2463
        %v2638 = vpop.f32.mrf.mxu0
        %v2639 = vadd.f32 0.0, %v2638
        %v2640 = vpop.f32.mrf.mxu0
        %2641 = vdwg.mxu0
        %2642 = vmax.xlane.f32.xlu0 %v2564
        %v2643 = vpop.xlane.xlu0 %2642
        %2644 = vmax.xlane.f32.xlu0 %v2569
        %v2645 = vpop.xlane.xlu0 %2644
        %2646 = vmax.xlane.f32.xlu0 %v2574
        %v2647 = vpop.xlane.xlu0 %2646
        %2648 = vmax.xlane.f32.xlu0 %v2579
        %v2649 = vpop.xlane.xlu0 %2648
        %2650 = vmax.xlane.f32.xlu0 %v2584
        %v2651 = vpop.xlane.xlu0 %2650
        %2652 = vmax.xlane.f32.xlu0 %v2589
        %v2653 = vpop.xlane.xlu0 %2652
        %2654 = vmax.xlane.f32.xlu0 %v2594
        %v2655 = vpop.xlane.xlu0 %2654
        %2656 = vmax.xlane.f32.xlu0 %v2599
        %v2657 = vpop.xlane.xlu0 %2656
        %2658 = vmax.xlane.f32.xlu0 %v2604
        %v2659 = vpop.xlane.xlu0 %2658
        %2660 = vmax.xlane.f32.xlu0 %v2609
        %v2661 = vpop.xlane.xlu0 %2660
        %2662 = vmax.xlane.f32.xlu0 %v2614
        %v2663 = vpop.xlane.xlu0 %2662
        %2664 = vmax.xlane.f32.xlu0 %v2619
        %v2665 = vpop.xlane.xlu0 %2664
        %2666 = vmax.xlane.f32.xlu0 %v2624
        %v2667 = vpop.xlane.xlu0 %2666
        %2668 = vmax.xlane.f32.xlu0 %v2629
        %v2669 = vpop.xlane.xlu0 %2668
        %2670 = vmax.xlane.f32.xlu0 %v2634
        %v2671 = vpop.xlane.xlu0 %2670
        %2672 = vmax.xlane.f32.xlu0 %v2639
        %v2673 = vpop.xlane.xlu0 %2672
        %v2674 = vsub.f32 %v2564, %v2643
        %v2675 = vsub.f32 %v2569, %v2645
        %v2676 = vsub.f32 %v2574, %v2647
        %v2677 = vsub.f32 %v2579, %v2649
        %v2678 = vsub.f32 %v2584, %v2651
        %v2679 = vsub.f32 %v2589, %v2653
        %v2680 = vsub.f32 %v2594, %v2655
        %v2681 = vsub.f32 %v2599, %v2657
        %v2682 = vsub.f32 %v2604, %v2659
        %v2683 = vsub.f32 %v2609, %v2661
        %v2684 = vsub.f32 %v2614, %v2663
        %v2685 = vsub.f32 %v2619, %v2665
        %v2686 = vsub.f32 %v2624, %v2667
        %v2687 = vsub.f32 %v2629, %v2669
        %v2688 = vsub.f32 %v2634, %v2671
        %v2689 = vsub.f32 %v2639, %v2673
        %v2690 = vmul.f32 %v2674, 1.442695
        %v2691 = vpow.pop %v2690
        %v2692 = vmul.f32 %v2675, 1.442695
        %v2693 = vpow.pop %v2692
        %v2694 = vmul.f32 %v2676, 1.442695
        %v2695 = vpow.pop %v2694
        %v2696 = vmul.f32 %v2677, 1.442695
        %v2697 = vpow.pop %v2696
        %v2698 = vmul.f32 %v2678, 1.442695
        %v2699 = vpow.pop %v2698
        %v2700 = vmul.f32 %v2679, 1.442695
        %v2701 = vpow.pop %v2700
        %v2702 = vmul.f32 %v2680, 1.442695
        %v2703 = vpow.pop %v2702
        %v2704 = vmul.f32 %v2681, 1.442695
        %v2705 = vpow.pop %v2704
        %v2706 = vmul.f32 %v2682, 1.442695
        %v2707 = vpow.pop %v2706
        %v2708 = vmul.f32 %v2683, 1.442695
        %v2709 = vpow.pop %v2708
        %v2710 = vmul.f32 %v2684, 1.442695
        %v2711 = vpow.pop %v2710
        %v2712 = vmul.f32 %v2685, 1.442695
        %v2713 = vpow.pop %v2712
        %v2714 = vmul.f32 %v2686, 1.442695
        %v2715 = vpow.pop %v2714
        %v2716 = vmul.f32 %v2687, 1.442695
        %v2717 = vpow.pop %v2716
        %v2718 = vmul.f32 %v2688, 1.442695
        %v2719 = vpow.pop %v2718
        %v2720 = vmul.f32 %v2689, 1.442695
        %v2721 = vpow.pop %v2720
        %2722 = vadd.xlane.f32.xlu0 %v2691
        %v2723 = vpop.xlane.xlu0 %2722
        %2724 = vadd.xlane.f32.xlu0 %v2693
        %v2725 = vpop.xlane.xlu0 %2724
        %2726 = vadd.xlane.f32.xlu0 %v2695
        %v2727 = vpop.xlane.xlu0 %2726
        %2728 = vadd.xlane.f32.xlu0 %v2697
        %v2729 = vpop.xlane.xlu0 %2728
        %2730 = vadd.xlane.f32.xlu0 %v2699
        %v2731 = vpop.xlane.xlu0 %2730
        %2732 = vadd.xlane.f32.xlu0 %v2701
        %v2733 = vpop.xlane.xlu0 %2732
        %2734 = vadd.xlane.f32.xlu0 %v2703
        %v2735 = vpop.xlane.xlu0 %2734
        %2736 = vadd.xlane.f32.xlu0 %v2705
        %v2737 = vpop.xlane.xlu0 %2736
        %2738 = vadd.xlane.f32.xlu0 %v2707
        %v2739 = vpop.xlane.xlu0 %2738
        %2740 = vadd.xlane.f32.xlu0 %v2709
        %v2741 = vpop.xlane.xlu0 %2740
        %2742 = vadd.xlane.f32.xlu0 %v2711
        %v2743 = vpop.xlane.xlu0 %2742
        %2744 = vadd.xlane.f32.xlu0 %v2713
        %v2745 = vpop.xlane.xlu0 %2744
        %2746 = vadd.xlane.f32.xlu0 %v2715
        %v2747 = vpop.xlane.xlu0 %2746
        %2748 = vadd.xlane.f32.xlu0 %v2717
        %v2749 = vpop.xlane.xlu0 %2748
        %2750 = vadd.xlane.f32.xlu0 %v2719
        %v2751 = vpop.xlane.xlu0 %2750
        %2752 = vadd.xlane.f32.xlu0 %v2721
        %v2753 = vpop.xlane.xlu0 %2752
        %2770 = vrot.lane.b32.xlu0 %v2337, 64
        %v2771 = vpop.permute.xlu0 %2770
        %2772 = vrot.lane.b32.xlu0 %v2338, 64
        %v2773 = vpop.permute.xlu0 %2772
        %2774 = vrot.lane.b32.xlu0 %v2339, 64
        %v2775 = vpop.permute.xlu0 %2774
        %2776 = vrot.lane.b32.xlu0 %v2340, 64
        %v2777 = vpop.permute.xlu0 %2776
        %2778 = vrot.lane.b32.xlu0 %v2341, 64
        %v2779 = vpop.permute.xlu0 %2778
        %2780 = vrot.lane.b32.xlu0 %v2342, 64
        %v2781 = vpop.permute.xlu0 %2780
        %2782 = vrot.lane.b32.xlu0 %v2343, 64
        %v2783 = vpop.permute.xlu0 %2782
        %2784 = vrot.lane.b32.xlu0 %v2344, 64
        %v2785 = vpop.permute.xlu0 %2784
        %2786 = vrot.lane.b32.xlu0 %v2345, 64
        %v2787 = vpop.permute.xlu0 %2786
        %2788 = vrot.lane.b32.xlu0 %v2346, 64
        %v2789 = vpop.permute.xlu0 %2788
        %2790 = vrot.lane.b32.xlu0 %v2347, 64
        %v2791 = vpop.permute.xlu0 %2790
        %2792 = vrot.lane.b32.xlu0 %v2348, 64
        %v2793 = vpop.permute.xlu0 %2792
        %2794 = vrot.lane.b32.xlu0 %v2349, 64
        %v2795 = vpop.permute.xlu0 %2794
        %2796 = vrot.lane.b32.xlu0 %v2350, 64
        %v2797 = vpop.permute.xlu0 %2796
        %2798 = vrot.lane.b32.xlu0 %v2351, 64
        %v2799 = vpop.permute.xlu0 %2798
        %2800 = vrot.lane.b32.xlu0 %v2352, 64
        %v2801 = vpop.permute.xlu0 %2800
        %2818 = vmatprep.subr.mxu0 0.0
        %2819 = vmatpush1.msra.mxu0 %v2801
        %2820 = vmatprep.subr.mxu0 0.0
        %2821 = vmatpush1.msra.mxu0 %v2799
        %2822 = vmatprep.subr.mxu0 0.0
        %2823 = vmatpush1.msra.mxu0 %v2797
        %2824 = vmatprep.subr.mxu0 0.0
        %2825 = vmatpush1.msra.mxu0 %v2795
        %2826 = vmatprep.subr.mxu0 0.0
        %2827 = vmatpush1.msra.mxu0 %v2793
        %2828 = vmatprep.subr.mxu0 0.0
        %2829 = vmatpush1.msra.mxu0 %v2791
        %2830 = vmatprep.subr.mxu0 0.0
        %2831 = vmatpush1.msra.mxu0 %v2789
        %2832 = vmatprep.subr.mxu0 0.0
        %2833 = vmatpush1.msra.mxu0 %v2787
        %2834 = vmatprep.subr.mxu0 0.0
        %2835 = vmatpush1.msra.mxu0 %v2785
        %2836 = vmatprep.subr.mxu0 0.0
        %2837 = vmatpush1.msra.mxu0 %v2783
        %2838 = vmatprep.subr.mxu0 0.0
        %2839 = vmatpush1.msra.mxu0 %v2781
        %2840 = vmatprep.subr.mxu0 0.0
        %2841 = vmatpush1.msra.mxu0 %v2779
        %2842 = vmatprep.subr.mxu0 0.0
        %2843 = vmatpush1.msra.mxu0 %v2777
        %2844 = vmatprep.subr.mxu0 0.0
        %2845 = vmatpush1.msra.mxu0 %v2775
        %2846 = vmatprep.subr.mxu0 0.0
        %2847 = vmatpush1.msra.mxu0 %v2773
        %2848 = vmatprep.subr.mxu0 0.0
        %2849 = vmatpush1.msra.mxu0 %v2771
        %2850 = vmatprep.subr.mxu0 0.0
        %2851 = vmatpush2.msra.mxu0 0.0
        %2852 = vmatprep.subr.mxu0 0.0
        %2853 = vmatpush2.msra.mxu0 0.0
        %2854 = vmatprep.subr.mxu0 0.0
        %2855 = vmatpush2.msra.mxu0 0.0
        %2856 = vmatprep.subr.mxu0 0.0
        %2857 = vmatpush2.msra.mxu0 0.0
        %2858 = vmatprep.subr.mxu0 0.0
        %2859 = vmatpush2.msra.mxu0 0.0
        %2860 = vmatprep.subr.mxu0 0.0
        %2861 = vmatpush2.msra.mxu0 0.0
        %2862 = vmatprep.subr.mxu0 0.0
        %2863 = vmatpush2.msra.mxu0 0.0
        %2864 = vmatprep.subr.mxu0 0.0
        %2865 = vmatpush2.msra.mxu0 0.0
        %2866 = vmatprep.subr.mxu0 0.0
        %2867 = vmatpush2.msra.mxu0 0.0
        %2868 = vmatprep.subr.mxu0 0.0
        %2869 = vmatpush2.msra.mxu0 0.0
        %2870 = vmatprep.subr.mxu0 0.0
        %2871 = vmatpush2.msra.mxu0 0.0
        %2872 = vmatprep.subr.mxu0 0.0
        %2873 = vmatpush2.msra.mxu0 0.0
        %2874 = vmatprep.subr.mxu0 0.0
        %2875 = vmatpush2.msra.mxu0 0.0
        %2876 = vmatprep.subr.mxu0 0.0
        %2877 = vmatpush2.msra.mxu0 0.0
        %2878 = vmatprep.subr.mxu0 0.0
        %2879 = vmatpush2.msra.mxu0 0.0
        %2880 = vmatprep.subr.mxu0 0.0
        %2881 = vmatpush2.msra.mxu0 0.0
        %2882 = vmatprep.mubr.f32.mxu0 0.0
        %2883 = vmatmul.mubr.f32.gmra.mxu0 %v2691
        %v2884 = vpop.f32.mrf.mxu0
        %v2885 = vadd.f32 0.0, %v2884
        %v2886 = vpop.f32.mrf.mxu0
        %2887 = vmatprep.mubr.f32.mxu0 0.0
        %2888 = vmatmul.mubr.f32.gmra.mxu0 %v2693
        %v2889 = vpop.f32.mrf.mxu0
        %v2890 = vadd.f32 0.0, %v2889
        %v2891 = vpop.f32.mrf.mxu0
        %2892 = vmatprep.mubr.f32.mxu0 0.0
        %2893 = vmatmul.mubr.f32.gmra.mxu0 %v2695
        %v2894 = vpop.f32.mrf.mxu0
        %v2895 = vadd.f32 0.0, %v2894
        %v2896 = vpop.f32.mrf.mxu0
        %2897 = vmatprep.mubr.f32.mxu0 0.0
        %2898 = vmatmul.mubr.f32.gmra.mxu0 %v2697
        %v2899 = vpop.f32.mrf.mxu0
        %v2900 = vadd.f32 0.0, %v2899
        %v2901 = vpop.f32.mrf.mxu0
        %2902 = vmatprep.mubr.f32.mxu0 0.0
        %2903 = vmatmul.mubr.f32.gmra.mxu0 %v2699
        %v2904 = vpop.f32.mrf.mxu0
        %v2905 = vadd.f32 0.0, %v2904
        %v2906 = vpop.f32.mrf.mxu0
        %2907 = vmatprep.mubr.f32.mxu0 0.0
        %2908 = vmatmul.mubr.f32.gmra.mxu0 %v2701
        %v2909 = vpop.f32.mrf.mxu0
        %v2910 = vadd.f32 0.0, %v2909
        %v2911 = vpop.f32.mrf.mxu0
        %2912 = vmatprep.mubr.f32.mxu0 0.0
        %2913 = vmatmul.mubr.f32.gmra.mxu0 %v2703
        %v2914 = vpop.f32.mrf.mxu0
        %v2915 = vadd.f32 0.0, %v2914
        %v2916 = vpop.f32.mrf.mxu0
        %2917 = vmatprep.mubr.f32.mxu0 0.0
        %2918 = vmatmul.mubr.f32.gmra.mxu0 %v2705
        %v2919 = vpop.f32.mrf.mxu0
        %v2920 = vadd.f32 0.0, %v2919
        %v2921 = vpop.f32.mrf.mxu0
        %2922 = vmatprep.mubr.f32.mxu0 0.0
        %2923 = vmatmul.mubr.f32.gmra.mxu0 %v2707
        %v2924 = vpop.f32.mrf.mxu0
        %v2925 = vadd.f32 0.0, %v2924
        %v2926 = vpop.f32.mrf.mxu0
        %2927 = vmatprep.mubr.f32.mxu0 0.0
        %2928 = vmatmul.mubr.f32.gmra.mxu0 %v2709
        %v2929 = vpop.f32.mrf.mxu0
        %v2930 = vadd.f32 0.0, %v2929
        %v2931 = vpop.f32.mrf.mxu0
        %2932 = vmatprep.mubr.f32.mxu0 0.0
        %2933 = vmatmul.mubr.f32.gmra.mxu0 %v2711
        %v2934 = vpop.f32.mrf.mxu0
        %v2935 = vadd.f32 0.0, %v2934
        %v2936 = vpop.f32.mrf.mxu0
        %2937 = vmatprep.mubr.f32.mxu0 0.0
        %2938 = vmatmul.mubr.f32.gmra.mxu0 %v2713
        %v2939 = vpop.f32.mrf.mxu0
        %v2940 = vadd.f32 0.0, %v2939
        %v2941 = vpop.f32.mrf.mxu0
        %2942 = vmatprep.mubr.f32.mxu0 0.0
        %2943 = vmatmul.mubr.f32.gmra.mxu0 %v2715
        %v2944 = vpop.f32.mrf.mxu0
        %v2945 = vadd.f32 0.0, %v2944
        %v2946 = vpop.f32.mrf.mxu0
        %2947 = vmatprep.mubr.f32.mxu0 0.0
        %2948 = vmatmul.mubr.f32.gmra.mxu0 %v2717
        %v2949 = vpop.f32.mrf.mxu0
        %v2950 = vadd.f32 0.0, %v2949
        %v2951 = vpop.f32.mrf.mxu0
        %2952 = vmatprep.mubr.f32.mxu0 0.0
        %2953 = vmatmul.mubr.f32.gmra.mxu0 %v2719
        %v2954 = vpop.f32.mrf.mxu0
        %v2955 = vadd.f32 0.0, %v2954
        %v2956 = vpop.f32.mrf.mxu0
        %2957 = vmatprep.mubr.f32.mxu0 0.0
        %2958 = vmatmul.mubr.f32.gmra.mxu0 %v2721
        %v2959 = vpop.f32.mrf.mxu0
        %v2960 = vadd.f32 0.0, %v2959
        %v2961 = vpop.f32.mrf.mxu0
        %2962 = vdwg.mxu0
        %v2963 = vrcp.pop %v2723
        %v2964 = vrcp.pop %v2725
        %v2965 = vrcp.pop %v2727
        %v2966 = vrcp.pop %v2729
        %v2967 = vrcp.pop %v2731
        %v2968 = vrcp.pop %v2733
        %v2969 = vrcp.pop %v2735
        %v2970 = vrcp.pop %v2737
        %v2971 = vrcp.pop %v2739
        %v2972 = vrcp.pop %v2741
        %v2973 = vrcp.pop %v2743
        %v2974 = vrcp.pop %v2745
        %v2975 = vrcp.pop %v2747
        %v2976 = vrcp.pop %v2749
        %v2977 = vrcp.pop %v2751
        %v2978 = vrcp.pop %v2753
        %v2979 = vmul.f32 %v2885, %v2963
        %v2980 = vmul.f32 %v2890, %v2964
        %v2981 = vmul.f32 %v2895, %v2965
        %v2982 = vmul.f32 %v2900, %v2966
        %v2983 = vmul.f32 %v2905, %v2967
        %v2984 = vmul.f32 %v2910, %v2968
        %v2985 = vmul.f32 %v2915, %v2969
        %v2986 = vmul.f32 %v2920, %v2970
        %v2987 = vmul.f32 %v2925, %v2971
        %v2988 = vmul.f32 %v2930, %v2972
        %v2989 = vmul.f32 %v2935, %v2973
        %v2990 = vmul.f32 %v2940, %v2974
        %v2991 = vmul.f32 %v2945, %v2975
        %v2992 = vmul.f32 %v2950, %v2976
        %v2993 = vmul.f32 %v2955, %v2977
        %v2994 = vmul.f32 %v2960, %v2978
        %3011 = vrot.lane.b32.xlu0 %v2979, 64
        %v3012 = vpop.permute.xlu0 %3011
        %3013 = vrot.lane.b32.xlu0 %v2980, 64
        %v3014 = vpop.permute.xlu0 %3013
        %3015 = vrot.lane.b32.xlu0 %v2981, 64
        %v3016 = vpop.permute.xlu0 %3015
        %3017 = vrot.lane.b32.xlu0 %v2982, 64
        %v3018 = vpop.permute.xlu0 %3017
        %3019 = vrot.lane.b32.xlu0 %v2983, 64
        %v3020 = vpop.permute.xlu0 %3019
        %3021 = vrot.lane.b32.xlu0 %v2984, 64
        %v3022 = vpop.permute.xlu0 %3021
        %3023 = vrot.lane.b32.xlu0 %v2985, 64
        %v3024 = vpop.permute.xlu0 %3023
        %3025 = vrot.lane.b32.xlu0 %v2986, 64
        %v3026 = vpop.permute.xlu0 %3025
        %3027 = vrot.lane.b32.xlu0 %v2987, 64
        %v3028 = vpop.permute.xlu0 %3027
        %3029 = vrot.lane.b32.xlu0 %v2988, 64
        %v3030 = vpop.permute.xlu0 %3029
        %3031 = vrot.lane.b32.xlu0 %v2989, 64
        %v3032 = vpop.permute.xlu0 %3031
        %3033 = vrot.lane.b32.xlu0 %v2990, 64
        %v3034 = vpop.permute.xlu0 %3033
        %3035 = vrot.lane.b32.xlu0 %v2991, 64
        %v3036 = vpop.permute.xlu0 %3035
        %3037 = vrot.lane.b32.xlu0 %v2992, 64
        %v3038 = vpop.permute.xlu0 %3037
        %3039 = vrot.lane.b32.xlu0 %v2993, 64
        %v3040 = vpop.permute.xlu0 %3039
        %3041 = vrot.lane.b32.xlu0 %v2994, 64
        %v3042 = vpop.permute.xlu0 %3041
        %vm3059 = vcmask 785920
        %3060 = vst.msk [vmem:[#allocation4] sm:$0xff] %vm3059, %v3012
        %3061 = vst.msk [vmem:[#allocation4 + $0x8] sm:$0xff] %vm3059, %v3014
        %3062 = vst.msk [vmem:[#allocation4 + $0x10] sm:$0xff] %vm3059, %v3016
        %3063 = vst.msk [vmem:[#allocation4 + $0x18] sm:$0xff] %vm3059, %v3018
        %3064 = vst.msk [vmem:[#allocation4 + $0x20] sm:$0xff] %vm3059, %v3020
        %3065 = vst.msk [vmem:[#allocation4 + $0x28] sm:$0xff] %vm3059, %v3022
        %3066 = vst.msk [vmem:[#allocation4 + $0x30] sm:$0xff] %vm3059, %v3024
        %3067 = vst.msk [vmem:[#allocation4 + $0x38] sm:$0xff] %vm3059, %v3026
        %3068 = vst.msk [vmem:[#allocation4 + $0x40] sm:$0xff] %vm3059, %v3028
        %3069 = vst.msk [vmem:[#allocation4 + $0x48] sm:$0xff] %vm3059, %v3030
        %3070 = vst.msk [vmem:[#allocation4 + $0x50] sm:$0xff] %vm3059, %v3032
        %3071 = vst.msk [vmem:[#allocation4 + $0x58] sm:$0xff] %vm3059, %v3034
        %3072 = vst.msk [vmem:[#allocation4 + $0x60] sm:$0xff] %vm3059, %v3036
        %3073 = vst.msk [vmem:[#allocation4 + $0x68] sm:$0xff] %vm3059, %v3038
        %3074 = vst.msk [vmem:[#allocation4 + $0x70] sm:$0xff] %vm3059, %v3040
        %3075 = vst.msk [vmem:[#allocation4 + $0x78] sm:$0xff] %vm3059, %v3042
        %v3076 = vld [vmem:[#allocation2] sm:$0xff]
        %v3077 = vld [vmem:[#allocation2 + $0x8] sm:$0xff]
        %v3078 = vld [vmem:[#allocation2 + $0x10] sm:$0xff]
        %v3079 = vld [vmem:[#allocation2 + $0x18] sm:$0xff]
        %v3080 = vld [vmem:[#allocation2 + $0x20] sm:$0xff]
        %v3081 = vld [vmem:[#allocation2 + $0x28] sm:$0xff]
        %v3082 = vld [vmem:[#allocation2 + $0x30] sm:$0xff]
        %v3083 = vld [vmem:[#allocation2 + $0x38] sm:$0xff]
        %v3084 = vld [vmem:[#allocation2 + $0x40] sm:$0xff]
        %v3085 = vld [vmem:[#allocation2 + $0x48] sm:$0xff]
        %v3086 = vld [vmem:[#allocation2 + $0x50] sm:$0xff]
        %v3087 = vld [vmem:[#allocation2 + $0x58] sm:$0xff]
        %v3088 = vld [vmem:[#allocation2 + $0x60] sm:$0xff]
        %v3089 = vld [vmem:[#allocation2 + $0x68] sm:$0xff]
        %v3090 = vld [vmem:[#allocation2 + $0x70] sm:$0xff]
        %v3091 = vld [vmem:[#allocation2 + $0x78] sm:$0xff]
        %v3092 = vld [vmem:[#allocation3] sm:$0xff]
        %v3093 = vld [vmem:[#allocation3 + $0x8] sm:$0xff]
        %v3094 = vld [vmem:[#allocation3 + $0x10] sm:$0xff]
        %v3095 = vld [vmem:[#allocation3 + $0x18] sm:$0xff]
        %v3096 = vld [vmem:[#allocation3 + $0x20] sm:$0xff]
        %v3097 = vld [vmem:[#allocation3 + $0x28] sm:$0xff]
        %v3098 = vld [vmem:[#allocation3 + $0x30] sm:$0xff]
        %v3099 = vld [vmem:[#allocation3 + $0x38] sm:$0xff]
        %v3100 = vld [vmem:[#allocation3 + $0x40] sm:$0xff]
        %v3101 = vld [vmem:[#allocation3 + $0x48] sm:$0xff]
        %v3102 = vld [vmem:[#allocation3 + $0x50] sm:$0xff]
        %v3103 = vld [vmem:[#allocation3 + $0x58] sm:$0xff]
        %v3104 = vld [vmem:[#allocation3 + $0x60] sm:$0xff]
        %v3105 = vld [vmem:[#allocation3 + $0x68] sm:$0xff]
        %v3106 = vld [vmem:[#allocation3 + $0x70] sm:$0xff]
        %v3107 = vld [vmem:[#allocation3 + $0x78] sm:$0xff]
        %3108 = vrot.lane.b32.xlu0 %v971, 32
        %v3109 = vpop.permute.xlu0 %3108
        %3110 = vrot.lane.b32.xlu0 %v972, 32
        %v3111 = vpop.permute.xlu0 %3110
        %3112 = vrot.lane.b32.xlu0 %v973, 32
        %v3113 = vpop.permute.xlu0 %3112
        %3114 = vrot.lane.b32.xlu0 %v974, 32
        %v3115 = vpop.permute.xlu0 %3114
        %3116 = vrot.lane.b32.xlu0 %v975, 32
        %v3117 = vpop.permute.xlu0 %3116
        %3118 = vrot.lane.b32.xlu0 %v976, 32
        %v3119 = vpop.permute.xlu0 %3118
        %3120 = vrot.lane.b32.xlu0 %v977, 32
        %v3121 = vpop.permute.xlu0 %3120
        %3122 = vrot.lane.b32.xlu0 %v978, 32
        %v3123 = vpop.permute.xlu0 %3122
        %3124 = vrot.lane.b32.xlu0 %v979, 32
        %v3125 = vpop.permute.xlu0 %3124
        %3126 = vrot.lane.b32.xlu0 %v980, 32
        %v3127 = vpop.permute.xlu0 %3126
        %3128 = vrot.lane.b32.xlu0 %v981, 32
        %v3129 = vpop.permute.xlu0 %3128
        %3130 = vrot.lane.b32.xlu0 %v982, 32
        %v3131 = vpop.permute.xlu0 %3130
        %3132 = vrot.lane.b32.xlu0 %v983, 32
        %v3133 = vpop.permute.xlu0 %3132
        %3134 = vrot.lane.b32.xlu0 %v984, 32
        %v3135 = vpop.permute.xlu0 %3134
        %3136 = vrot.lane.b32.xlu0 %v985, 32
        %v3137 = vpop.permute.xlu0 %3136
        %3138 = vrot.lane.b32.xlu0 %v986, 32
        %v3139 = vpop.permute.xlu0 %3138
        %3156 = vrot.lane.b32.xlu0 %v3076, 32
        %v3157 = vpop.permute.xlu0 %3156
        %3158 = vrot.lane.b32.xlu0 %v3077, 32
        %v3159 = vpop.permute.xlu0 %3158
        %3160 = vrot.lane.b32.xlu0 %v3078, 32
        %v3161 = vpop.permute.xlu0 %3160
        %3162 = vrot.lane.b32.xlu0 %v3079, 32
        %v3163 = vpop.permute.xlu0 %3162
        %3164 = vrot.lane.b32.xlu0 %v3080, 32
        %v3165 = vpop.permute.xlu0 %3164
        %3166 = vrot.lane.b32.xlu0 %v3081, 32
        %v3167 = vpop.permute.xlu0 %3166
        %3168 = vrot.lane.b32.xlu0 %v3082, 32
        %v3169 = vpop.permute.xlu0 %3168
        %3170 = vrot.lane.b32.xlu0 %v3083, 32
        %v3171 = vpop.permute.xlu0 %3170
        %3172 = vrot.lane.b32.xlu0 %v3084, 32
        %v3173 = vpop.permute.xlu0 %3172
        %3174 = vrot.lane.b32.xlu0 %v3085, 32
        %v3175 = vpop.permute.xlu0 %3174
        %3176 = vrot.lane.b32.xlu0 %v3086, 32
        %v3177 = vpop.permute.xlu0 %3176
        %3178 = vrot.lane.b32.xlu0 %v3087, 32
        %v3179 = vpop.permute.xlu0 %3178
        %3180 = vrot.lane.b32.xlu0 %v3088, 32
        %v3181 = vpop.permute.xlu0 %3180
        %3182 = vrot.lane.b32.xlu0 %v3089, 32
        %v3183 = vpop.permute.xlu0 %3182
        %3184 = vrot.lane.b32.xlu0 %v3090, 32
        %v3185 = vpop.permute.xlu0 %3184
        %3186 = vrot.lane.b32.xlu0 %v3091, 32
        %v3187 = vpop.permute.xlu0 %3186
        %v3188 = vsel %vm1019, %v3109, 0
        %v3190 = vsel %vm1019, %v3111, 0
        %v3192 = vsel %vm1019, %v3113, 0
        %v3194 = vsel %vm1019, %v3115, 0
        %v3196 = vsel %vm1019, %v3117, 0
        %v3198 = vsel %vm1019, %v3119, 0
        %v3200 = vsel %vm1019, %v3121, 0
        %v3202 = vsel %vm1019, %v3123, 0
        %v3204 = vsel %vm1019, %v3125, 0
        %v3206 = vsel %vm1019, %v3127, 0
        %v3208 = vsel %vm1019, %v3129, 0
        %v3210 = vsel %vm1019, %v3131, 0
        %v3212 = vsel %vm1019, %v3133, 0
        %v3214 = vsel %vm1019, %v3135, 0
        %v3216 = vsel %vm1019, %v3137, 0
        %v3218 = vsel %vm1019, %v3139, 0
        %v3220 = vsel %vm1019, %v3157, 0
        %v3222 = vsel %vm1019, %v3159, 0
        %v3224 = vsel %vm1019, %v3161, 0
        %v3226 = vsel %vm1019, %v3163, 0
        %v3228 = vsel %vm1019, %v3165, 0
        %v3230 = vsel %vm1019, %v3167, 0
        %v3232 = vsel %vm1019, %v3169, 0
        %v3234 = vsel %vm1019, %v3171, 0
        %v3236 = vsel %vm1019, %v3173, 0
        %v3238 = vsel %vm1019, %v3175, 0
        %v3240 = vsel %vm1019, %v3177, 0
        %v3242 = vsel %vm1019, %v3179, 0
        %v3244 = vsel %vm1019, %v3181, 0
        %v3246 = vsel %vm1019, %v3183, 0
        %v3248 = vsel %vm1019, %v3185, 0
        %v3250 = vsel %vm1019, %v3187, 0
        %3252 = vmatprep.subr.mxu0 0.0
        %3253 = vmatpush1.xpose.msra.mxu0 %v3250
        %3254 = vmatprep.subr.mxu0 0.0
        %3255 = vmatpush1.xpose.msra.mxu0 %v3248
        %3256 = vmatprep.subr.mxu0 0.0
        %3257 = vmatpush1.xpose.msra.mxu0 %v3246
        %3258 = vmatprep.subr.mxu0 0.0
        %3259 = vmatpush1.xpose.msra.mxu0 %v3244
        %3260 = vmatprep.subr.mxu0 0.0
        %3261 = vmatpush1.xpose.msra.mxu0 %v3242
        %3262 = vmatprep.subr.mxu0 0.0
        %3263 = vmatpush1.xpose.msra.mxu0 %v3240
        %3264 = vmatprep.subr.mxu0 0.0
        %3265 = vmatpush1.xpose.msra.mxu0 %v3238
        %3266 = vmatprep.subr.mxu0 0.0
        %3267 = vmatpush1.xpose.msra.mxu0 %v3236
        %3268 = vmatprep.subr.mxu0 0.0
        %3269 = vmatpush1.xpose.msra.mxu0 %v3234
        %3270 = vmatprep.subr.mxu0 0.0
        %3271 = vmatpush1.xpose.msra.mxu0 %v3232
        %3272 = vmatprep.subr.mxu0 0.0
        %3273 = vmatpush1.xpose.msra.mxu0 %v3230
        %3274 = vmatprep.subr.mxu0 0.0
        %3275 = vmatpush1.xpose.msra.mxu0 %v3228
        %3276 = vmatprep.subr.mxu0 0.0
        %3277 = vmatpush1.xpose.msra.mxu0 %v3226
        %3278 = vmatprep.subr.mxu0 0.0
        %3279 = vmatpush1.xpose.msra.mxu0 %v3224
        %3280 = vmatprep.subr.mxu0 0.0
        %3281 = vmatpush1.xpose.msra.mxu0 %v3222
        %3282 = vmatprep.subr.mxu0 0.0
        %3283 = vmatpush1.xpose.msra.mxu0 %v3220
        %3284 = vmatprep.subr.mxu0 0.0
        %3285 = vmatpush2.xpose.msra.mxu0 0.0
        %3286 = vmatprep.subr.mxu0 0.0
        %3287 = vmatpush2.xpose.msra.mxu0 0.0
        %3288 = vmatprep.subr.mxu0 0.0
        %3289 = vmatpush2.xpose.msra.mxu0 0.0
        %3290 = vmatprep.subr.mxu0 0.0
        %3291 = vmatpush2.xpose.msra.mxu0 0.0
        %3292 = vmatprep.subr.mxu0 0.0
        %3293 = vmatpush2.xpose.msra.mxu0 0.0
        %3294 = vmatprep.subr.mxu0 0.0
        %3295 = vmatpush2.xpose.msra.mxu0 0.0
        %3296 = vmatprep.subr.mxu0 0.0
        %3297 = vmatpush2.xpose.msra.mxu0 0.0
        %3298 = vmatprep.subr.mxu0 0.0
        %3299 = vmatpush2.xpose.msra.mxu0 0.0
        %3300 = vmatprep.subr.mxu0 0.0
        %3301 = vmatpush2.xpose.msra.mxu0 0.0
        %3302 = vmatprep.subr.mxu0 0.0
        %3303 = vmatpush2.xpose.msra.mxu0 0.0
        %3304 = vmatprep.subr.mxu0 0.0
        %3305 = vmatpush2.xpose.msra.mxu0 0.0
        %3306 = vmatprep.subr.mxu0 0.0
        %3307 = vmatpush2.xpose.msra.mxu0 0.0
        %3308 = vmatprep.subr.mxu0 0.0
        %3309 = vmatpush2.xpose.msra.mxu0 0.0
        %3310 = vmatprep.subr.mxu0 0.0
        %3311 = vmatpush2.xpose.msra.mxu0 0.0
        %3312 = vmatprep.subr.mxu0 0.0
        %3313 = vmatpush2.xpose.msra.mxu0 0.0
        %3314 = vmatprep.subr.mxu0 0.0
        %3315 = vmatpush2.xpose.msra.mxu0 0.0
        %3316 = vmatprep.mubr.f32.mxu0 0.0
        %3317 = vmatmul.mubr.f32.gmra.mxu0 %v3188
        %v3318 = vpop.f32.mrf.mxu0
        %v3319 = vadd.f32 0.0, %v3318
        %v3320 = vpop.f32.mrf.mxu0
        %3321 = vmatprep.mubr.f32.mxu0 0.0
        %3322 = vmatmul.mubr.f32.gmra.mxu0 %v3190
        %v3323 = vpop.f32.mrf.mxu0
        %v3324 = vadd.f32 0.0, %v3323
        %v3325 = vpop.f32.mrf.mxu0
        %3326 = vmatprep.mubr.f32.mxu0 0.0
        %3327 = vmatmul.mubr.f32.gmra.mxu0 %v3192
        %v3328 = vpop.f32.mrf.mxu0
        %v3329 = vadd.f32 0.0, %v3328
        %v3330 = vpop.f32.mrf.mxu0
        %3331 = vmatprep.mubr.f32.mxu0 0.0
        %3332 = vmatmul.mubr.f32.gmra.mxu0 %v3194
        %v3333 = vpop.f32.mrf.mxu0
        %v3334 = vadd.f32 0.0, %v3333
        %v3335 = vpop.f32.mrf.mxu0
        %3336 = vmatprep.mubr.f32.mxu0 0.0
        %3337 = vmatmul.mubr.f32.gmra.mxu0 %v3196
        %v3338 = vpop.f32.mrf.mxu0
        %v3339 = vadd.f32 0.0, %v3338
        %v3340 = vpop.f32.mrf.mxu0
        %3341 = vmatprep.mubr.f32.mxu0 0.0
        %3342 = vmatmul.mubr.f32.gmra.mxu0 %v3198
        %v3343 = vpop.f32.mrf.mxu0
        %v3344 = vadd.f32 0.0, %v3343
        %v3345 = vpop.f32.mrf.mxu0
        %3346 = vmatprep.mubr.f32.mxu0 0.0
        %3347 = vmatmul.mubr.f32.gmra.mxu0 %v3200
        %v3348 = vpop.f32.mrf.mxu0
        %v3349 = vadd.f32 0.0, %v3348
        %v3350 = vpop.f32.mrf.mxu0
        %3351 = vmatprep.mubr.f32.mxu0 0.0
        %3352 = vmatmul.mubr.f32.gmra.mxu0 %v3202
        %v3353 = vpop.f32.mrf.mxu0
        %v3354 = vadd.f32 0.0, %v3353
        %v3355 = vpop.f32.mrf.mxu0
        %3356 = vmatprep.mubr.f32.mxu0 0.0
        %3357 = vmatmul.mubr.f32.gmra.mxu0 %v3204
        %v3358 = vpop.f32.mrf.mxu0
        %v3359 = vadd.f32 0.0, %v3358
        %v3360 = vpop.f32.mrf.mxu0
        %3361 = vmatprep.mubr.f32.mxu0 0.0
        %3362 = vmatmul.mubr.f32.gmra.mxu0 %v3206
        %v3363 = vpop.f32.mrf.mxu0
        %v3364 = vadd.f32 0.0, %v3363
        %v3365 = vpop.f32.mrf.mxu0
        %3366 = vmatprep.mubr.f32.mxu0 0.0
        %3367 = vmatmul.mubr.f32.gmra.mxu0 %v3208
        %v3368 = vpop.f32.mrf.mxu0
        %v3369 = vadd.f32 0.0, %v3368
        %v3370 = vpop.f32.mrf.mxu0
        %3371 = vmatprep.mubr.f32.mxu0 0.0
        %3372 = vmatmul.mubr.f32.gmra.mxu0 %v3210
        %v3373 = vpop.f32.mrf.mxu0
        %v3374 = vadd.f32 0.0, %v3373
        %v3375 = vpop.f32.mrf.mxu0
        %3376 = vmatprep.mubr.f32.mxu0 0.0
        %3377 = vmatmul.mubr.f32.gmra.mxu0 %v3212
        %v3378 = vpop.f32.mrf.mxu0
        %v3379 = vadd.f32 0.0, %v3378
        %v3380 = vpop.f32.mrf.mxu0
        %3381 = vmatprep.mubr.f32.mxu0 0.0
        %3382 = vmatmul.mubr.f32.gmra.mxu0 %v3214
        %v3383 = vpop.f32.mrf.mxu0
        %v3384 = vadd.f32 0.0, %v3383
        %v3385 = vpop.f32.mrf.mxu0
        %3386 = vmatprep.mubr.f32.mxu0 0.0
        %3387 = vmatmul.mubr.f32.gmra.mxu0 %v3216
        %v3388 = vpop.f32.mrf.mxu0
        %v3389 = vadd.f32 0.0, %v3388
        %v3390 = vpop.f32.mrf.mxu0
        %3391 = vmatprep.mubr.f32.mxu0 0.0
        %3392 = vmatmul.mubr.f32.gmra.mxu0 %v3218
        %v3393 = vpop.f32.mrf.mxu0
        %v3394 = vadd.f32 0.0, %v3393
        %v3395 = vpop.f32.mrf.mxu0
        %3396 = vdwg.mxu0
        %3397 = vmax.xlane.f32.xlu0 %v3319
        %v3398 = vpop.xlane.xlu0 %3397
        %3399 = vmax.xlane.f32.xlu0 %v3324
        %v3400 = vpop.xlane.xlu0 %3399
        %3401 = vmax.xlane.f32.xlu0 %v3329
        %v3402 = vpop.xlane.xlu0 %3401
        %3403 = vmax.xlane.f32.xlu0 %v3334
        %v3404 = vpop.xlane.xlu0 %3403
        %3405 = vmax.xlane.f32.xlu0 %v3339
        %v3406 = vpop.xlane.xlu0 %3405
        %3407 = vmax.xlane.f32.xlu0 %v3344
        %v3408 = vpop.xlane.xlu0 %3407
        %3409 = vmax.xlane.f32.xlu0 %v3349
        %v3410 = vpop.xlane.xlu0 %3409
        %3411 = vmax.xlane.f32.xlu0 %v3354
        %v3412 = vpop.xlane.xlu0 %3411
        %3413 = vmax.xlane.f32.xlu0 %v3359
        %v3414 = vpop.xlane.xlu0 %3413
        %3415 = vmax.xlane.f32.xlu0 %v3364
        %v3416 = vpop.xlane.xlu0 %3415
        %3417 = vmax.xlane.f32.xlu0 %v3369
        %v3418 = vpop.xlane.xlu0 %3417
        %3419 = vmax.xlane.f32.xlu0 %v3374
        %v3420 = vpop.xlane.xlu0 %3419
        %3421 = vmax.xlane.f32.xlu0 %v3379
        %v3422 = vpop.xlane.xlu0 %3421
        %3423 = vmax.xlane.f32.xlu0 %v3384
        %v3424 = vpop.xlane.xlu0 %3423
        %3425 = vmax.xlane.f32.xlu0 %v3389
        %v3426 = vpop.xlane.xlu0 %3425
        %3427 = vmax.xlane.f32.xlu0 %v3394
        %v3428 = vpop.xlane.xlu0 %3427
        %v3429 = vsub.f32 %v3319, %v3398
        %v3430 = vsub.f32 %v3324, %v3400
        %v3431 = vsub.f32 %v3329, %v3402
        %v3432 = vsub.f32 %v3334, %v3404
        %v3433 = vsub.f32 %v3339, %v3406
        %v3434 = vsub.f32 %v3344, %v3408
        %v3435 = vsub.f32 %v3349, %v3410
        %v3436 = vsub.f32 %v3354, %v3412
        %v3437 = vsub.f32 %v3359, %v3414
        %v3438 = vsub.f32 %v3364, %v3416
        %v3439 = vsub.f32 %v3369, %v3418
        %v3440 = vsub.f32 %v3374, %v3420
        %v3441 = vsub.f32 %v3379, %v3422
        %v3442 = vsub.f32 %v3384, %v3424
        %v3443 = vsub.f32 %v3389, %v3426
        %v3444 = vsub.f32 %v3394, %v3428
        %v3445 = vmul.f32 %v3429, 1.442695
        %v3446 = vpow.pop %v3445
        %v3447 = vmul.f32 %v3430, 1.442695
        %v3448 = vpow.pop %v3447
        %v3449 = vmul.f32 %v3431, 1.442695
        %v3450 = vpow.pop %v3449
        %v3451 = vmul.f32 %v3432, 1.442695
        %v3452 = vpow.pop %v3451
        %v3453 = vmul.f32 %v3433, 1.442695
        %v3454 = vpow.pop %v3453
        %v3455 = vmul.f32 %v3434, 1.442695
        %v3456 = vpow.pop %v3455
        %v3457 = vmul.f32 %v3435, 1.442695
        %v3458 = vpow.pop %v3457
        %v3459 = vmul.f32 %v3436, 1.442695
        %v3460 = vpow.pop %v3459
        %v3461 = vmul.f32 %v3437, 1.442695
        %v3462 = vpow.pop %v3461
        %v3463 = vmul.f32 %v3438, 1.442695
        %v3464 = vpow.pop %v3463
        %v3465 = vmul.f32 %v3439, 1.442695
        %v3466 = vpow.pop %v3465
        %v3467 = vmul.f32 %v3440, 1.442695
        %v3468 = vpow.pop %v3467
        %v3469 = vmul.f32 %v3441, 1.442695
        %v3470 = vpow.pop %v3469
        %v3471 = vmul.f32 %v3442, 1.442695
        %v3472 = vpow.pop %v3471
        %v3473 = vmul.f32 %v3443, 1.442695
        %v3474 = vpow.pop %v3473
        %v3475 = vmul.f32 %v3444, 1.442695
        %v3476 = vpow.pop %v3475
        %3477 = vadd.xlane.f32.xlu0 %v3446
        %v3478 = vpop.xlane.xlu0 %3477
        %3479 = vadd.xlane.f32.xlu0 %v3448
        %v3480 = vpop.xlane.xlu0 %3479
        %3481 = vadd.xlane.f32.xlu0 %v3450
        %v3482 = vpop.xlane.xlu0 %3481
        %3483 = vadd.xlane.f32.xlu0 %v3452
        %v3484 = vpop.xlane.xlu0 %3483
        %3485 = vadd.xlane.f32.xlu0 %v3454
        %v3486 = vpop.xlane.xlu0 %3485
        %3487 = vadd.xlane.f32.xlu0 %v3456
        %v3488 = vpop.xlane.xlu0 %3487
        %3489 = vadd.xlane.f32.xlu0 %v3458
        %v3490 = vpop.xlane.xlu0 %3489
        %3491 = vadd.xlane.f32.xlu0 %v3460
        %v3492 = vpop.xlane.xlu0 %3491
        %3493 = vadd.xlane.f32.xlu0 %v3462
        %v3494 = vpop.xlane.xlu0 %3493
        %3495 = vadd.xlane.f32.xlu0 %v3464
        %v3496 = vpop.xlane.xlu0 %3495
        %3497 = vadd.xlane.f32.xlu0 %v3466
        %v3498 = vpop.xlane.xlu0 %3497
        %3499 = vadd.xlane.f32.xlu0 %v3468
        %v3500 = vpop.xlane.xlu0 %3499
        %3501 = vadd.xlane.f32.xlu0 %v3470
        %v3502 = vpop.xlane.xlu0 %3501
        %3503 = vadd.xlane.f32.xlu0 %v3472
        %v3504 = vpop.xlane.xlu0 %3503
        %3505 = vadd.xlane.f32.xlu0 %v3474
        %v3506 = vpop.xlane.xlu0 %3505
        %3507 = vadd.xlane.f32.xlu0 %v3476
        %v3508 = vpop.xlane.xlu0 %3507
        %3525 = vrot.lane.b32.xlu0 %v3092, 32
        %v3526 = vpop.permute.xlu0 %3525
        %3527 = vrot.lane.b32.xlu0 %v3093, 32
        %v3528 = vpop.permute.xlu0 %3527
        %3529 = vrot.lane.b32.xlu0 %v3094, 32
        %v3530 = vpop.permute.xlu0 %3529
        %3531 = vrot.lane.b32.xlu0 %v3095, 32
        %v3532 = vpop.permute.xlu0 %3531
        %3533 = vrot.lane.b32.xlu0 %v3096, 32
        %v3534 = vpop.permute.xlu0 %3533
        %3535 = vrot.lane.b32.xlu0 %v3097, 32
        %v3536 = vpop.permute.xlu0 %3535
        %3537 = vrot.lane.b32.xlu0 %v3098, 32
        %v3538 = vpop.permute.xlu0 %3537
        %3539 = vrot.lane.b32.xlu0 %v3099, 32
        %v3540 = vpop.permute.xlu0 %3539
        %3541 = vrot.lane.b32.xlu0 %v3100, 32
        %v3542 = vpop.permute.xlu0 %3541
        %3543 = vrot.lane.b32.xlu0 %v3101, 32
        %v3544 = vpop.permute.xlu0 %3543
        %3545 = vrot.lane.b32.xlu0 %v3102, 32
        %v3546 = vpop.permute.xlu0 %3545
        %3547 = vrot.lane.b32.xlu0 %v3103, 32
        %v3548 = vpop.permute.xlu0 %3547
        %3549 = vrot.lane.b32.xlu0 %v3104, 32
        %v3550 = vpop.permute.xlu0 %3549
        %3551 = vrot.lane.b32.xlu0 %v3105, 32
        %v3552 = vpop.permute.xlu0 %3551
        %3553 = vrot.lane.b32.xlu0 %v3106, 32
        %v3554 = vpop.permute.xlu0 %3553
        %3555 = vrot.lane.b32.xlu0 %v3107, 32
        %v3556 = vpop.permute.xlu0 %3555
        %3573 = vmatprep.subr.mxu0 0.0
        %3574 = vmatpush1.msra.mxu0 %v3556
        %3575 = vmatprep.subr.mxu0 0.0
        %3576 = vmatpush1.msra.mxu0 %v3554
        %3577 = vmatprep.subr.mxu0 0.0
        %3578 = vmatpush1.msra.mxu0 %v3552
        %3579 = vmatprep.subr.mxu0 0.0
        %3580 = vmatpush1.msra.mxu0 %v3550
        %3581 = vmatprep.subr.mxu0 0.0
        %3582 = vmatpush1.msra.mxu0 %v3548
        %3583 = vmatprep.subr.mxu0 0.0
        %3584 = vmatpush1.msra.mxu0 %v3546
        %3585 = vmatprep.subr.mxu0 0.0
        %3586 = vmatpush1.msra.mxu0 %v3544
        %3587 = vmatprep.subr.mxu0 0.0
        %3588 = vmatpush1.msra.mxu0 %v3542
        %3589 = vmatprep.subr.mxu0 0.0
        %3590 = vmatpush1.msra.mxu0 %v3540
        %3591 = vmatprep.subr.mxu0 0.0
        %3592 = vmatpush1.msra.mxu0 %v3538
        %3593 = vmatprep.subr.mxu0 0.0
        %3594 = vmatpush1.msra.mxu0 %v3536
        %3595 = vmatprep.subr.mxu0 0.0
        %3596 = vmatpush1.msra.mxu0 %v3534
        %3597 = vmatprep.subr.mxu0 0.0
        %3598 = vmatpush1.msra.mxu0 %v3532
        %3599 = vmatprep.subr.mxu0 0.0
        %3600 = vmatpush1.msra.mxu0 %v3530
        %3601 = vmatprep.subr.mxu0 0.0
        %3602 = vmatpush1.msra.mxu0 %v3528
        %3603 = vmatprep.subr.mxu0 0.0
        %3604 = vmatpush1.msra.mxu0 %v3526
        %3605 = vmatprep.subr.mxu0 0.0
        %3606 = vmatpush2.msra.mxu0 0.0
        %3607 = vmatprep.subr.mxu0 0.0
        %3608 = vmatpush2.msra.mxu0 0.0
        %3609 = vmatprep.subr.mxu0 0.0
        %3610 = vmatpush2.msra.mxu0 0.0
        %3611 = vmatprep.subr.mxu0 0.0
        %3612 = vmatpush2.msra.mxu0 0.0
        %3613 = vmatprep.subr.mxu0 0.0
        %3614 = vmatpush2.msra.mxu0 0.0
        %3615 = vmatprep.subr.mxu0 0.0
        %3616 = vmatpush2.msra.mxu0 0.0
        %3617 = vmatprep.subr.mxu0 0.0
        %3618 = vmatpush2.msra.mxu0 0.0
        %3619 = vmatprep.subr.mxu0 0.0
        %3620 = vmatpush2.msra.mxu0 0.0
        %3621 = vmatprep.subr.mxu0 0.0
        %3622 = vmatpush2.msra.mxu0 0.0
        %3623 = vmatprep.subr.mxu0 0.0
        %3624 = vmatpush2.msra.mxu0 0.0
        %3625 = vmatprep.subr.mxu0 0.0
        %3626 = vmatpush2.msra.mxu0 0.0
        %3627 = vmatprep.subr.mxu0 0.0
        %3628 = vmatpush2.msra.mxu0 0.0
        %3629 = vmatprep.subr.mxu0 0.0
        %3630 = vmatpush2.msra.mxu0 0.0
        %3631 = vmatprep.subr.mxu0 0.0
        %3632 = vmatpush2.msra.mxu0 0.0
        %3633 = vmatprep.subr.mxu0 0.0
        %3634 = vmatpush2.msra.mxu0 0.0
        %3635 = vmatprep.subr.mxu0 0.0
        %3636 = vmatpush2.msra.mxu0 0.0
        %3637 = vmatprep.mubr.f32.mxu0 0.0
        %3638 = vmatmul.mubr.f32.gmra.mxu0 %v3446
        %v3639 = vpop.f32.mrf.mxu0
        %v3640 = vadd.f32 0.0, %v3639
        %v3641 = vpop.f32.mrf.mxu0
        %3642 = vmatprep.mubr.f32.mxu0 0.0
        %3643 = vmatmul.mubr.f32.gmra.mxu0 %v3448
        %v3644 = vpop.f32.mrf.mxu0
        %v3645 = vadd.f32 0.0, %v3644
        %v3646 = vpop.f32.mrf.mxu0
        %3647 = vmatprep.mubr.f32.mxu0 0.0
        %3648 = vmatmul.mubr.f32.gmra.mxu0 %v3450
        %v3649 = vpop.f32.mrf.mxu0
        %v3650 = vadd.f32 0.0, %v3649
        %v3651 = vpop.f32.mrf.mxu0
        %3652 = vmatprep.mubr.f32.mxu0 0.0
        %3653 = vmatmul.mubr.f32.gmra.mxu0 %v3452
        %v3654 = vpop.f32.mrf.mxu0
        %v3655 = vadd.f32 0.0, %v3654
        %v3656 = vpop.f32.mrf.mxu0
        %3657 = vmatprep.mubr.f32.mxu0 0.0
        %3658 = vmatmul.mubr.f32.gmra.mxu0 %v3454
        %v3659 = vpop.f32.mrf.mxu0
        %v3660 = vadd.f32 0.0, %v3659
        %v3661 = vpop.f32.mrf.mxu0
        %3662 = vmatprep.mubr.f32.mxu0 0.0
        %3663 = vmatmul.mubr.f32.gmra.mxu0 %v3456
        %v3664 = vpop.f32.mrf.mxu0
        %v3665 = vadd.f32 0.0, %v3664
        %v3666 = vpop.f32.mrf.mxu0
        %3667 = vmatprep.mubr.f32.mxu0 0.0
        %3668 = vmatmul.mubr.f32.gmra.mxu0 %v3458
        %v3669 = vpop.f32.mrf.mxu0
        %v3670 = vadd.f32 0.0, %v3669
        %v3671 = vpop.f32.mrf.mxu0
        %3672 = vmatprep.mubr.f32.mxu0 0.0
        %3673 = vmatmul.mubr.f32.gmra.mxu0 %v3460
        %v3674 = vpop.f32.mrf.mxu0
        %v3675 = vadd.f32 0.0, %v3674
        %v3676 = vpop.f32.mrf.mxu0
        %3677 = vmatprep.mubr.f32.mxu0 0.0
        %3678 = vmatmul.mubr.f32.gmra.mxu0 %v3462
        %v3679 = vpop.f32.mrf.mxu0
        %v3680 = vadd.f32 0.0, %v3679
        %v3681 = vpop.f32.mrf.mxu0
        %3682 = vmatprep.mubr.f32.mxu0 0.0
        %3683 = vmatmul.mubr.f32.gmra.mxu0 %v3464
        %v3684 = vpop.f32.mrf.mxu0
        %v3685 = vadd.f32 0.0, %v3684
        %v3686 = vpop.f32.mrf.mxu0
        %3687 = vmatprep.mubr.f32.mxu0 0.0
        %3688 = vmatmul.mubr.f32.gmra.mxu0 %v3466
        %v3689 = vpop.f32.mrf.mxu0
        %v3690 = vadd.f32 0.0, %v3689
        %v3691 = vpop.f32.mrf.mxu0
        %3692 = vmatprep.mubr.f32.mxu0 0.0
        %3693 = vmatmul.mubr.f32.gmra.mxu0 %v3468
        %v3694 = vpop.f32.mrf.mxu0
        %v3695 = vadd.f32 0.0, %v3694
        %v3696 = vpop.f32.mrf.mxu0
        %3697 = vmatprep.mubr.f32.mxu0 0.0
        %3698 = vmatmul.mubr.f32.gmra.mxu0 %v3470
        %v3699 = vpop.f32.mrf.mxu0
        %v3700 = vadd.f32 0.0, %v3699
        %v3701 = vpop.f32.mrf.mxu0
        %3702 = vmatprep.mubr.f32.mxu0 0.0
        %3703 = vmatmul.mubr.f32.gmra.mxu0 %v3472
        %v3704 = vpop.f32.mrf.mxu0
        %v3705 = vadd.f32 0.0, %v3704
        %v3706 = vpop.f32.mrf.mxu0
        %3707 = vmatprep.mubr.f32.mxu0 0.0
        %3708 = vmatmul.mubr.f32.gmra.mxu0 %v3474
        %v3709 = vpop.f32.mrf.mxu0
        %v3710 = vadd.f32 0.0, %v3709
        %v3711 = vpop.f32.mrf.mxu0
        %3712 = vmatprep.mubr.f32.mxu0 0.0
        %3713 = vmatmul.mubr.f32.gmra.mxu0 %v3476
        %v3714 = vpop.f32.mrf.mxu0
        %v3715 = vadd.f32 0.0, %v3714
        %v3716 = vpop.f32.mrf.mxu0
        %3717 = vdwg.mxu0
        %v3718 = vrcp.pop %v3478
        %v3719 = vrcp.pop %v3480
        %v3720 = vrcp.pop %v3482
        %v3721 = vrcp.pop %v3484
        %v3722 = vrcp.pop %v3486
        %v3723 = vrcp.pop %v3488
        %v3724 = vrcp.pop %v3490
        %v3725 = vrcp.pop %v3492
        %v3726 = vrcp.pop %v3494
        %v3727 = vrcp.pop %v3496
        %v3728 = vrcp.pop %v3498
        %v3729 = vrcp.pop %v3500
        %v3730 = vrcp.pop %v3502
        %v3731 = vrcp.pop %v3504
        %v3732 = vrcp.pop %v3506
        %v3733 = vrcp.pop %v3508
        %v3734 = vmul.f32 %v3640, %v3718
        %v3735 = vmul.f32 %v3645, %v3719
        %v3736 = vmul.f32 %v3650, %v3720
        %v3737 = vmul.f32 %v3655, %v3721
        %v3738 = vmul.f32 %v3660, %v3722
        %v3739 = vmul.f32 %v3665, %v3723
        %v3740 = vmul.f32 %v3670, %v3724
        %v3741 = vmul.f32 %v3675, %v3725
        %v3742 = vmul.f32 %v3680, %v3726
        %v3743 = vmul.f32 %v3685, %v3727
        %v3744 = vmul.f32 %v3690, %v3728
        %v3745 = vmul.f32 %v3695, %v3729
        %v3746 = vmul.f32 %v3700, %v3730
        %v3747 = vmul.f32 %v3705, %v3731
        %v3748 = vmul.f32 %v3710, %v3732
        %v3749 = vmul.f32 %v3715, %v3733
        %3766 = vrot.lane.b32.xlu0 %v3734, 96
        %v3767 = vpop.permute.xlu0 %3766
        %3768 = vrot.lane.b32.xlu0 %v3735, 96
        %v3769 = vpop.permute.xlu0 %3768
        %3770 = vrot.lane.b32.xlu0 %v3736, 96
        %v3771 = vpop.permute.xlu0 %3770
        %3772 = vrot.lane.b32.xlu0 %v3737, 96
        %v3773 = vpop.permute.xlu0 %3772
        %3774 = vrot.lane.b32.xlu0 %v3738, 96
        %v3775 = vpop.permute.xlu0 %3774
        %3776 = vrot.lane.b32.xlu0 %v3739, 96
        %v3777 = vpop.permute.xlu0 %3776
        %3778 = vrot.lane.b32.xlu0 %v3740, 96
        %v3779 = vpop.permute.xlu0 %3778
        %3780 = vrot.lane.b32.xlu0 %v3741, 96
        %v3781 = vpop.permute.xlu0 %3780
        %3782 = vrot.lane.b32.xlu0 %v3742, 96
        %v3783 = vpop.permute.xlu0 %3782
        %3784 = vrot.lane.b32.xlu0 %v3743, 96
        %v3785 = vpop.permute.xlu0 %3784
        %3786 = vrot.lane.b32.xlu0 %v3744, 96
        %v3787 = vpop.permute.xlu0 %3786
        %3788 = vrot.lane.b32.xlu0 %v3745, 96
        %v3789 = vpop.permute.xlu0 %3788
        %3790 = vrot.lane.b32.xlu0 %v3746, 96
        %v3791 = vpop.permute.xlu0 %3790
        %3792 = vrot.lane.b32.xlu0 %v3747, 96
        %v3793 = vpop.permute.xlu0 %3792
        %3794 = vrot.lane.b32.xlu0 %v3748, 96
        %v3795 = vpop.permute.xlu0 %3794
        %3796 = vrot.lane.b32.xlu0 %v3749, 96
        %v3797 = vpop.permute.xlu0 %3796
        %vm3814 = vcmask 1048320
        %3815 = vst.msk [vmem:[#allocation4] sm:$0xff] %vm3814, %v3767
        %3816 = vst.msk [vmem:[#allocation4 + $0x8] sm:$0xff] %vm3814, %v3769
        %3817 = vst.msk [vmem:[#allocation4 + $0x10] sm:$0xff] %vm3814, %v3771
        %3818 = vst.msk [vmem:[#allocation4 + $0x18] sm:$0xff] %vm3814, %v3773
        %3819 = vst.msk [vmem:[#allocation4 + $0x20] sm:$0xff] %vm3814, %v3775
        %3820 = vst.msk [vmem:[#allocation4 + $0x28] sm:$0xff] %vm3814, %v3777
        %3821 = vst.msk [vmem:[#allocation4 + $0x30] sm:$0xff] %vm3814, %v3779
        %3822 = vst.msk [vmem:[#allocation4 + $0x38] sm:$0xff] %vm3814, %v3781
        %3823 = vst.msk [vmem:[#allocation4 + $0x40] sm:$0xff] %vm3814, %v3783
        %3824 = vst.msk [vmem:[#allocation4 + $0x48] sm:$0xff] %vm3814, %v3785
        %3825 = vst.msk [vmem:[#allocation4 + $0x50] sm:$0xff] %vm3814, %v3787
        %3826 = vst.msk [vmem:[#allocation4 + $0x58] sm:$0xff] %vm3814, %v3789
        %3827 = vst.msk [vmem:[#allocation4 + $0x60] sm:$0xff] %vm3814, %v3791
        %3828 = vst.msk [vmem:[#allocation4 + $0x68] sm:$0xff] %vm3814, %v3793
        %3829 = vst.msk [vmem:[#allocation4 + $0x70] sm:$0xff] %vm3814, %v3795
        %3830 = vst.msk [vmem:[#allocation4 + $0x78] sm:$0xff] %vm3814, %v3797
        %v3831 = vld [vmem:[#allocation4] sm:$0xff]
        %v3832 = vld [vmem:[#allocation4 + $0x8] sm:$0xff]
        %v3833 = vld [vmem:[#allocation4 + $0x10] sm:$0xff]
        %v3834 = vld [vmem:[#allocation4 + $0x18] sm:$0xff]
        %v3835 = vld [vmem:[#allocation4 + $0x20] sm:$0xff]
        %v3836 = vld [vmem:[#allocation4 + $0x28] sm:$0xff]
        %v3837 = vld [vmem:[#allocation4 + $0x30] sm:$0xff]
        %v3838 = vld [vmem:[#allocation4 + $0x38] sm:$0xff]
        %v3839 = vld [vmem:[#allocation4 + $0x40] sm:$0xff]
        %v3840 = vld [vmem:[#allocation4 + $0x48] sm:$0xff]
        %v3841 = vld [vmem:[#allocation4 + $0x50] sm:$0xff]
        %v3842 = vld [vmem:[#allocation4 + $0x58] sm:$0xff]
        %v3843 = vld [vmem:[#allocation4 + $0x60] sm:$0xff]
        %v3844 = vld [vmem:[#allocation4 + $0x68] sm:$0xff]
        %v3845 = vld [vmem:[#allocation4 + $0x70] sm:$0xff]
        %v3846 = vld [vmem:[#allocation4 + $0x78] sm:$0xff]
        %v3847 = vld [vmem:[#allocation13] sm:$0xff]
        %v3848 = vld [vmem:[#allocation13 + $0x8] sm:$0xff]
        %v3849 = vld [vmem:[#allocation13 + $0x10] sm:$0xff]
        %v3850 = vld [vmem:[#allocation13 + $0x18] sm:$0xff]
        %v3851 = vld [vmem:[#allocation13 + $0x20] sm:$0xff]
        %v3852 = vld [vmem:[#allocation13 + $0x28] sm:$0xff]
        %v3853 = vld [vmem:[#allocation13 + $0x30] sm:$0xff]
        %v3854 = vld [vmem:[#allocation13 + $0x38] sm:$0xff]
        %v3855 = vld [vmem:[#allocation13 + $0x40] sm:$0xff]
        %v3856 = vld [vmem:[#allocation13 + $0x48] sm:$0xff]
        %v3857 = vld [vmem:[#allocation13 + $0x50] sm:$0xff]
        %v3858 = vld [vmem:[#allocation13 + $0x58] sm:$0xff]
        %v3859 = vld [vmem:[#allocation13 + $0x60] sm:$0xff]
        %v3860 = vld [vmem:[#allocation13 + $0x68] sm:$0xff]
        %v3861 = vld [vmem:[#allocation13 + $0x70] sm:$0xff]
        %v3862 = vld [vmem:[#allocation13 + $0x78] sm:$0xff]
        %v3863 = vld [vmem:[%s6] sm:$0x1]
        %v3865 = vlaneseq
        %v3866 = vshrl.u32 %v3865, 7
        %v3867 = vsub.s32 0, %v3866
        %v3868 = vrot.slane %v3863, %v3867
        %3870 = vmatprep.subr.mxu0 0.0
        %3871 = vmatpush1.msra.mxu0 %v3862
        %3872 = vmatprep.subr.mxu0 0.0
        %3873 = vmatpush1.msra.mxu0 %v3861
        %3874 = vmatprep.subr.mxu0 0.0
        %3875 = vmatpush1.msra.mxu0 %v3860
        %3876 = vmatprep.subr.mxu0 0.0
        %3877 = vmatpush1.msra.mxu0 %v3859
        %3878 = vmatprep.subr.mxu0 0.0
        %3879 = vmatpush1.msra.mxu0 %v3858
        %3880 = vmatprep.subr.mxu0 0.0
        %3881 = vmatpush1.msra.mxu0 %v3857
        %3882 = vmatprep.subr.mxu0 0.0
        %3883 = vmatpush1.msra.mxu0 %v3856
        %3884 = vmatprep.subr.mxu0 0.0
        %3885 = vmatpush1.msra.mxu0 %v3855
        %3886 = vmatprep.subr.mxu0 0.0
        %3887 = vmatpush1.msra.mxu0 %v3854
        %3888 = vmatprep.subr.mxu0 0.0
        %3889 = vmatpush1.msra.mxu0 %v3853
        %3890 = vmatprep.subr.mxu0 0.0
        %3891 = vmatpush1.msra.mxu0 %v3852
        %3892 = vmatprep.subr.mxu0 0.0
        %3893 = vmatpush1.msra.mxu0 %v3851
        %3894 = vmatprep.subr.mxu0 0.0
        %3895 = vmatpush1.msra.mxu0 %v3850
        %3896 = vmatprep.subr.mxu0 0.0
        %3897 = vmatpush1.msra.mxu0 %v3849
        %3898 = vmatprep.subr.mxu0 0.0
        %3899 = vmatpush1.msra.mxu0 %v3848
        %3900 = vmatprep.subr.mxu0 0.0
        %3901 = vmatpush1.msra.mxu0 %v3847
        %3902 = vmatprep.subr.mxu0 0.0
        %3903 = vmatpush2.msra.mxu0 0.0
        %3904 = vmatprep.subr.mxu0 0.0
        %3905 = vmatpush2.msra.mxu0 0.0
        %3906 = vmatprep.subr.mxu0 0.0
        %3907 = vmatpush2.msra.mxu0 0.0
        %3908 = vmatprep.subr.mxu0 0.0
        %3909 = vmatpush2.msra.mxu0 0.0
        %3910 = vmatprep.subr.mxu0 0.0
        %3911 = vmatpush2.msra.mxu0 0.0
        %3912 = vmatprep.subr.mxu0 0.0
        %3913 = vmatpush2.msra.mxu0 0.0
        %3914 = vmatprep.subr.mxu0 0.0
        %3915 = vmatpush2.msra.mxu0 0.0
        %3916 = vmatprep.subr.mxu0 0.0
        %3917 = vmatpush2.msra.mxu0 0.0
        %3918 = vmatprep.subr.mxu0 0.0
        %3919 = vmatpush2.msra.mxu0 0.0
        %3920 = vmatprep.subr.mxu0 0.0
        %3921 = vmatpush2.msra.mxu0 0.0
        %3922 = vmatprep.subr.mxu0 0.0
        %3923 = vmatpush2.msra.mxu0 0.0
        %3924 = vmatprep.subr.mxu0 0.0
        %3925 = vmatpush2.msra.mxu0 0.0
        %3926 = vmatprep.subr.mxu0 0.0
        %3927 = vmatpush2.msra.mxu0 0.0
        %3928 = vmatprep.subr.mxu0 0.0
        %3929 = vmatpush2.msra.mxu0 0.0
        %3930 = vmatprep.subr.mxu0 0.0
        %3931 = vmatpush2.msra.mxu0 0.0
        %3932 = vmatprep.subr.mxu0 0.0
        %3933 = vmatpush2.msra.mxu0 0.0
        %3934 = vmatprep.mubr.f32.mxu0 0.0
        %3935 = vmatmul.mubr.f32.gmra.mxu0 %v3831
        %v3936 = vpop.f32.mrf.mxu0
        %v3937 = vadd.f32 %v3868, %v3936
        %v3938 = vpop.f32.mrf.mxu0
        %3939 = vmatprep.mubr.f32.mxu0 0.0
        %3940 = vmatmul.mubr.f32.gmra.mxu0 %v3832
        %v3941 = vpop.f32.mrf.mxu0
        %v3942 = vadd.f32 %v3868, %v3941
        %v3943 = vpop.f32.mrf.mxu0
        %3944 = vmatprep.mubr.f32.mxu0 0.0
        %3945 = vmatmul.mubr.f32.gmra.mxu0 %v3833
        %v3946 = vpop.f32.mrf.mxu0
        %v3947 = vadd.f32 %v3868, %v3946
        %v3948 = vpop.f32.mrf.mxu0
        %3949 = vmatprep.mubr.f32.mxu0 0.0
        %3950 = vmatmul.mubr.f32.gmra.mxu0 %v3834
        %v3951 = vpop.f32.mrf.mxu0
        %v3952 = vadd.f32 %v3868, %v3951
        %v3953 = vpop.f32.mrf.mxu0
        %3954 = vmatprep.mubr.f32.mxu0 0.0
        %3955 = vmatmul.mubr.f32.gmra.mxu0 %v3835
        %v3956 = vpop.f32.mrf.mxu0
        %v3957 = vadd.f32 %v3868, %v3956
        %v3958 = vpop.f32.mrf.mxu0
        %3959 = vmatprep.mubr.f32.mxu0 0.0
        %3960 = vmatmul.mubr.f32.gmra.mxu0 %v3836
        %v3961 = vpop.f32.mrf.mxu0
        %v3962 = vadd.f32 %v3868, %v3961
        %v3963 = vpop.f32.mrf.mxu0
        %3964 = vmatprep.mubr.f32.mxu0 0.0
        %3965 = vmatmul.mubr.f32.gmra.mxu0 %v3837
        %v3966 = vpop.f32.mrf.mxu0
        %v3967 = vadd.f32 %v3868, %v3966
        %v3968 = vpop.f32.mrf.mxu0
        %3969 = vmatprep.mubr.f32.mxu0 0.0
        %3970 = vmatmul.mubr.f32.gmra.mxu0 %v3838
        %v3971 = vpop.f32.mrf.mxu0
        %v3972 = vadd.f32 %v3868, %v3971
        %v3973 = vpop.f32.mrf.mxu0
        %3974 = vmatprep.mubr.f32.mxu0 0.0
        %3975 = vmatmul.mubr.f32.gmra.mxu0 %v3839
        %v3976 = vpop.f32.mrf.mxu0
        %v3977 = vadd.f32 %v3868, %v3976
        %v3978 = vpop.f32.mrf.mxu0
        %3979 = vmatprep.mubr.f32.mxu0 0.0
        %3980 = vmatmul.mubr.f32.gmra.mxu0 %v3840
        %v3981 = vpop.f32.mrf.mxu0
        %v3982 = vadd.f32 %v3868, %v3981
        %v3983 = vpop.f32.mrf.mxu0
        %3984 = vmatprep.mubr.f32.mxu0 0.0
        %3985 = vmatmul.mubr.f32.gmra.mxu0 %v3841
        %v3986 = vpop.f32.mrf.mxu0
        %v3987 = vadd.f32 %v3868, %v3986
        %v3988 = vpop.f32.mrf.mxu0
        %3989 = vmatprep.mubr.f32.mxu0 0.0
        %3990 = vmatmul.mubr.f32.gmra.mxu0 %v3842
        %v3991 = vpop.f32.mrf.mxu0
        %v3992 = vadd.f32 %v3868, %v3991
        %v3993 = vpop.f32.mrf.mxu0
        %3994 = vmatprep.mubr.f32.mxu0 0.0
        %3995 = vmatmul.mubr.f32.gmra.mxu0 %v3843
        %v3996 = vpop.f32.mrf.mxu0
        %v3997 = vadd.f32 %v3868, %v3996
        %v3998 = vpop.f32.mrf.mxu0
        %3999 = vmatprep.mubr.f32.mxu0 0.0
        %4000 = vmatmul.mubr.f32.gmra.mxu0 %v3844
        %v4001 = vpop.f32.mrf.mxu0
        %v4002 = vadd.f32 %v3868, %v4001
        %v4003 = vpop.f32.mrf.mxu0
        %4004 = vmatprep.mubr.f32.mxu0 0.0
        %4005 = vmatmul.mubr.f32.gmra.mxu0 %v3845
        %v4006 = vpop.f32.mrf.mxu0
        %v4007 = vadd.f32 %v3868, %v4006
        %v4008 = vpop.f32.mrf.mxu0
        %4009 = vmatprep.mubr.f32.mxu0 0.0
        %4010 = vmatmul.mubr.f32.gmra.mxu0 %v3846
        %v4011 = vpop.f32.mrf.mxu0
        %v4012 = vadd.f32 %v3868, %v4011
        %v4013 = vpop.f32.mrf.mxu0
        %4014 = vdwg.mxu0
        %4015 = vst [vmem:[%s420] sm:$0xff] %v3937
        %4016 = vst [vmem:[%s420 + $0x8] sm:$0xff] %v3942
        %4017 = vst [vmem:[%s420 + $0x10] sm:$0xff] %v3947
        %4018 = vst [vmem:[%s420 + $0x18] sm:$0xff] %v3952
        %4019 = vst [vmem:[%s420 + $0x20] sm:$0xff] %v3957
        %4020 = vst [vmem:[%s420 + $0x28] sm:$0xff] %v3962
        %4021 = vst [vmem:[%s420 + $0x30] sm:$0xff] %v3967
        %4022 = vst [vmem:[%s420 + $0x38] sm:$0xff] %v3972
        %4023 = vst [vmem:[%s420 + $0x40] sm:$0xff] %v3977
        %4024 = vst [vmem:[%s420 + $0x48] sm:$0xff] %v3982
        %4025 = vst [vmem:[%s420 + $0x50] sm:$0xff] %v3987
        %4026 = vst [vmem:[%s420 + $0x58] sm:$0xff] %v3992
        %4027 = vst [vmem:[%s420 + $0x60] sm:$0xff] %v3997
        %4028 = vst [vmem:[%s420 + $0x68] sm:$0xff] %v4002
        %4029 = vst [vmem:[%s420 + $0x70] sm:$0xff] %v4007
        %4030 = vst [vmem:[%s420 + $0x78] sm:$0xff] %v4012
        %s4031 = sand.u32 %s214, 1
        %s4032 = scalar_lea.sflag [#allocation7], %s4031
        %s4033 = sand.u32 %s214, 1
        %s4034 = smul.addr %s4033, 128
        %s4035 = scalar_lea.vmem [#allocation14], %s4034
        // Predicated region
        $region73: #{tpu_custom_call.1} parent=47 // pred_check
          %p4036 = pneg %p224
        $region74: #{tpu_custom_call.1} parent=47 // pred_check_branch
          %4038 = sbr.rel (%p4036) target = $region76
        $region75: #{tpu_custom_call.1} parent=47 // pred_region
          %s4039 = smul.u32 16, %s33
          %s4041 = ssub.s32 2048, 2048
          %4042 = vsyncadd %s4032, %s4041
          %s4043 = smul.addr %s32, 16
          %s4044 = sadd.s32 %s4039, %s4043
          %s4045 = smul.addr %s4044, 128
          %s4046 = scalar_lea.hbm %s7, %s4045
          %s4047 = sshll.u32 %s4035, 4
          %s4048 = int_to_ptr.vmem [resolvable:$true] %s4047
          %4053 = dma.vmem_to_hbm [thread:$0]  %s4048, 2048, %s4046, %s4032, 128, 128, 8
        $region76: #{tpu_custom_call.1} parent=47 // pred_fallthru
          _
      $region48: #{tpu_custom_call.1} parent=5 // pred_fallthru
        _
      %p4054 = scmp.le.s32.totalorder 2, %s23
      // Predicated region
      $region77: #{tpu_custom_call.1} parent=5 // pred_check
        %p4055 = pneg %p4054
      $region78: #{tpu_custom_call.1} parent=5 // pred_check_branch
        %4057 = sbr.rel (%p4055) target = $region80
      $region79: #{tpu_custom_call.1} parent=5 // pred_region
        %s4058 = ssub.s32 %s23, 2
        // Predicated region
        $region81: #{tpu_custom_call.1} parent=79 // pred_check
          %p4059 = pneg %p230
        $region82: #{tpu_custom_call.1} parent=79 // pred_check_branch
          %4061 = sbr.rel (%p4059) target = $region84
        $region83: #{tpu_custom_call.1} parent=79 // pred_region
          %s4062 = sand.u32 %s215, 1
          %s4063 = scalar_lea.sflag [#allocation7], %s4062
          %s4064 = sand.u32 %s215, 1
          %s4065 = smul.addr %s4064, 128
          %s4066 = scalar_lea.vmem [#allocation14], %s4065
          %4067 = dma.done %s4063, 2048
        $region84: #{tpu_custom_call.1} parent=79 // pred_fallthru
          _
      $region80: #{tpu_custom_call.1} parent=5 // pred_fallthru
        _
    $region6: #{tpu_custom_call.1} parent=1 // loop_footer
      %s27 = sadd.s32 1, %s23
    $region7: #{tpu_custom_call.1} parent=1 // loop_footer_branch
      %22 = sbr.rel target = $region3
    $region8: #{tpu_custom_call.1} parent=1 // loop_exit
      _
    %4068 = vsyncpa [#allocation6], 1
    %s4069 = scalar_lea.sflag [#allocation6], 1
    %4070 = vsyncpa %s4069, 1
    %4071 = vsyncpa [#allocation9], 1
    %s4072 = scalar_lea.sflag [#allocation9], 1
    %4073 = vsyncpa %s4072, 1
    %4074 = vsyncpa [#allocation12], 1
    %4075 = vsyncpa [#allocation7], 1
    %s4076 = scalar_lea.sflag [#allocation7], 1
    %4077 = vsyncpa %s4076, 1

</llo_original>
